<compile_context>
chip_gen: v6e
topology: v6e:2x2x1
jax: 0.10.0
libtpu: 0.0.40
codegen_flags: <defaults>
</compile_context>

<pallas_src>
import math
from functools import partial

import jax
import jax.numpy as jnp
from jax.experimental import pallas as pl
from jax.experimental.pallas import tpu as pltpu


def mhsa_kernel(x_ref, wqkv_ref, bqkv_ref, wo_ref, o_ref, xcat_ref, ocat_ref, *,
                num_heads, key_dim, value_dim, compute_dtype, exact_softmax):
    """Processes a (bb, C, N) block, channels-first (native NCHW).

    x_ref     : (bb, C, N)      raw input tokens (also the residual shortcut)
    wqkv_ref  : (2HK+HV, C)     BN-folded fused [Wq/sqrt(K) ; Wk ; Wv]
    bqkv_ref  : (2HK+HV, 1)     BN-folded projection bias (f32)
    wo_ref    : (C, HV)         gamma-folded fused output projection
    o_ref     : (bb, C, N)      output tokens
    xcat_ref  : (C, bb*N)       scratch: batch block packed along lanes
    ocat_ref  : (HV, bb*N)      scratch: head outputs packed along lanes
    """
    bb, _, N = x_ref.shape
    hk = num_heads * key_dim

    # ---- Pack the batch block along lanes so the two big matmuls are
    # ---- lane-dense even when N < 128 (bb*N >= 128 by default).
    for b in range(bb):
        xcat_ref[:, pl.ds(b * N, N)] = x_ref[b].astype(compute_dtype)

    # ---- Fused Q/K/V projection (BatchNorm folded into weights + bias).
    qkv = (jnp.dot(wqkv_ref[...], xcat_ref[...],
                   preferred_element_type=jnp.float32)
           + bqkv_ref[...])                                   # (2HK+HV, bb*N) f32

    # ---- Per-(batch, head) attention core.  bb is capped small in the wrapper
    # ---- so this static unroll stays bounded (review: avoid huge unrolls).
    for b in range(bb):
        base = b * N
        for h in range(num_heads):
            # Sublane slices of qkv are free (multiples of 8); the lane slice
            # per batch element is at most half-masked.
            q_h = qkv[h * key_dim:(h + 1) * key_dim,
                      base:base + N].astype(compute_dtype)             # (K, N)
            k_t = jnp.transpose(
                qkv[hk + h * key_dim: hk + (h + 1) * key_dim,
                    base:base + N]).astype(compute_dtype)              # (N, K)
            v_h = qkv[2 * hk + h * value_dim: 2 * hk + (h + 1) * value_dim,
                      base:base + N].astype(compute_dtype)             # (V, N)

            # Scores with keys on sublanes / queries on lanes: softmax stats
            # come out in lane-major (1, N) layout, so the normalization can
            # be deferred to the (V, N) head output (no (N,N) VALU scaling).
            s_t = jnp.dot(k_t, q_h,
                          preferred_element_type=jnp.float32)          # (Nk, Nq)
            m = jnp.max(s_t, axis=0, keepdims=True)                    # (1, Nq)
            p = jnp.exp(s_t - m)                                       # f32
            l = jnp.sum(p, axis=0, keepdims=True)                      # (1, Nq)

            # Unnormalized PV matmul (standard MXU matmul, f32 accumulation).
            o_h = jnp.dot(v_h, p.astype(compute_dtype),
                          preferred_element_type=jnp.float32)          # (V, Nq)
            if exact_softmax:
                o_h = o_h / l                           # exact validation path
            else:
                o_h = o_h * pl.reciprocal(l, approx=True)       # EUP reciprocal
            ocat_ref[pl.ds(h * value_dim, value_dim),
                     pl.ds(base, N)] = o_h.astype(compute_dtype)

    # ---- Fused output projection (LayerScale gamma folded into Wo).
    out = jnp.dot(wo_ref[...], ocat_ref[...],
                  preferred_element_type=jnp.float32)                  # (C, bb*N)

    # ---- Residual with the raw (pre-norm) input, per batch element.
    for b in range(bb):
        o_ref[b] = (out[:, b * N:(b + 1) * N] + x_ref[b]).astype(o_ref.dtype)


def _pick_batch_block(B, N):
    """Enough batch elements to make the matmul lane dim >= 128, capped so the
    static in-kernel unroll stays small."""
    target = min(B, 8, max(1, (128 + N - 1) // N))
    for cand in range(target, 0, -1):
        if B % cand == 0:
            return cand
    return 1


def mhsa_pallas(x_nchw, bn_scale, bn_shift, wq, wk, wv, wo, gamma, *,
                key_dim, batch_block=None, compute_dtype=jnp.bfloat16,
                exact_softmax=False):
    """x_nchw: (B, C, H, W) float32.  Parameters follow the PyTorch shapes:
       wq/wk: (num_heads, key_dim, C), wv: (num_heads, value_dim, C),
       wo: (C, num_heads, value_dim), bn_*/gamma: (C,).

       batch_block=None picks a small block such that block*N >= 128 lanes
       (lane-dense matmuls) on single-TC v5e/v6e; on v7x pass batch_block=B//2
       so the parallel batch grid axis has exactly one step per TensorCore."""
    B, C, H, W = x_nchw.shape
    N = H * W
    num_heads = wq.shape[0]
    value_dim = wv.shape[1]
    hk, hv = num_heads * key_dim, num_heads * value_dim
    total = 2 * hk + hv

    if batch_block is None:
        batch_block = _pick_batch_block(B, N)
    assert B % batch_block == 0
    bb = batch_block

    # Free reshape: (B, C, N) is exactly the NCHW memory layout.
    x3 = x_nchw.reshape(B, C, N)

    inv_sqrt_k = 1.0 / math.sqrt(key_dim)
    wqkv_f32 = jnp.concatenate(
        [wq.reshape(hk, C).astype(jnp.float32) * inv_sqrt_k,   # fold 1/sqrt(K)
         wk.reshape(hk, C).astype(jnp.float32),
         wv.reshape(hv, C).astype(jnp.float32)], axis=0)               # (T, C)
    # Fold BatchNorm (inference) into the projection:
    #   Wqkv @ (scale*x + shift) = (Wqkv*scale) @ x + (Wqkv @ shift)
    bqkv = (wqkv_f32 @ bn_shift.reshape(C, 1).astype(jnp.float32))     # (T, 1)
    wqkv_folded = (wqkv_f32 * bn_scale[None, :]).astype(compute_dtype)  # (T, C)
    # Fold MNV4LayerScale gamma into the output projection.
    wo_g = (gamma[:, None] * wo.reshape(C, hv).astype(jnp.float32)
            ).astype(compute_dtype)                                     # (C, HV)

    kernel = partial(mhsa_kernel, num_heads=num_heads, key_dim=key_dim,
                     value_dim=value_dim, compute_dtype=compute_dtype,
                     exact_softmax=exact_softmax)

    out = pl.pallas_call(
        kernel,
        out_shape=jax.ShapeDtypeStruct((B, C, N), jnp.float32),
        grid=(B // bb,),
        in_specs=[
            pl.BlockSpec((bb, C, N), lambda b: (b, 0, 0)),   # x (and residual)
            pl.BlockSpec((total, C), lambda b: (0, 0)),      # BN-folded Wqkv
            pl.BlockSpec((total, 1), lambda b: (0, 0)),      # BN-folded bias
            pl.BlockSpec((C, hv), lambda b: (0, 0)),         # gamma-folded Wo
        ],
        out_specs=pl.BlockSpec((bb, C, N), lambda b: (b, 0, 0)),
        scratch_shapes=[
            pltpu.VMEM((C, bb * N), compute_dtype),          # lane-packed x
            pltpu.VMEM((hv, bb * N), compute_dtype),         # lane-packed heads
        ],
        compiler_params=pltpu.CompilerParams(
            dimension_semantics=("parallel",),
            vmem_limit_bytes=32 * 1024 * 1024),
    )(x3, wqkv_folded, bqkv.astype(jnp.float32), wo_g)

    return out.reshape(B, C, H, W)          # free reshape back to NCHW


def mhsa_reference(x_nchw, bn_scale, bn_shift, wq, wk, wv, wo, gamma, *, key_dim):
    """Pure-JAX f32 reference mirroring the (intended) PyTorch forward."""
    B, C, H, W = x_nchw.shape
    rx = jnp.transpose(x_nchw, (0, 2, 3, 1)).reshape(B, H * W, C)
    xn = rx * bn_scale + bn_shift
    hi = jax.lax.Precision.HIGHEST
    q = jnp.einsum("bnd,hkd->bnhk", xn, wq, precision=hi)
    k = jnp.einsum("bnd,hkd->bnhk", xn, wk, precision=hi)
    v = jnp.einsum("bnd,hvd->bnhv", xn, wv, precision=hi)
    sim = jnp.einsum("bnhk,bmhk->bnhm", q, k, precision=hi) / math.sqrt(key_dim)
    attn = jax.nn.softmax(sim, axis=-1)
    o = jnp.einsum("bnhm,bmhv->bnhv", attn, v, precision=hi)
    out = jnp.einsum("bnhv,dhv->bnd", o, wo, precision=hi)
    out = out * gamma + rx
    return jnp.transpose(out.reshape(B, H, W, C), (0, 3, 1, 2))


if __name__ == "__main__":
    B, C, H, W = 2, 32, 8, 8          # input_dim = 32, N = 64 tokens
    num_heads, key_dim, value_dim = 4, 8, 8
    norm_epsilon = 1e-3

    key = jax.random.PRNGKey(0)
    kx, kq, kk, kv, ko, kb1, kb2, kb3, kb4 = jax.random.split(key, 9)

    x = jax.random.normal(kx, (B, C, H, W), jnp.float32)

    # Deterministic synthetic parameters (PyTorch inits projections to zeros,
    # which would make the forward trivially x; we use small random values).
    wq = 0.1 * jax.random.normal(kq, (num_heads, key_dim, C), jnp.float32)
    wk = 0.1 * jax.random.normal(kk, (num_heads, key_dim, C), jnp.float32)
    wv = 0.1 * jax.random.normal(kv, (num_heads, value_dim, C), jnp.float32)
    wo = 0.1 * jax.random.normal(ko, (C, num_heads, value_dim), jnp.float32)

    # BatchNorm2d (inference mode) parameters / running stats, folded.
    bn_weight = 1.0 + 0.1 * jax.random.normal(kb1, (C,), jnp.float32)
    bn_bias = 0.1 * jax.random.normal(kb2, (C,), jnp.float32)
    run_mean = 0.1 * jax.random.normal(kb3, (C,), jnp.float32)
    run_var = jnp.abs(1.0 + 0.1 * jax.random.normal(kb4, (C,), jnp.float32))
    bn_scale = bn_weight / jnp.sqrt(run_var + norm_epsilon)
    bn_shift = bn_bias - run_mean * bn_scale

    # MNV4LayerScale gamma (PyTorch init value is 1e-5; we use 1.0 so the
    # attention path contributes meaningfully to the synthetic check).
    gamma = jnp.full((C,), 1.0, jnp.float32)

    ref = jax.block_until_ready(
        mhsa_reference(x, bn_scale, bn_shift, wq, wk, wv, wo, gamma,
                       key_dim=key_dim))

    # Structural check: f32 compute path with exact softmax division.
    out_f32 = jax.block_until_ready(
        mhsa_pallas(x, bn_scale, bn_shift, wq, wk, wv, wo, gamma,
                    key_dim=key_dim, compute_dtype=jnp.float32,
                    exact_softmax=True))
    assert out_f32.shape == (B, C, H, W)
    if not bool(jnp.allclose(out_f32, ref, rtol=2e-3, atol=2e-3)):
        raise AssertionError("Pallas MHSA kernel (f32 path) does not match reference")

    # Performance path: bf16 MXU operands, f32 accumulation, EUP reciprocal.
    out_bf16 = jax.block_until_ready(
        mhsa_pallas(x, bn_scale, bn_shift, wq, wk, wv, wo, gamma,
                    key_dim=key_dim, compute_dtype=jnp.bfloat16))
    assert out_bf16.shape == (B, C, H, W)
    if not bool(jnp.allclose(out_bf16, ref, rtol=3e-2, atol=3e-2)):
        raise AssertionError("Pallas MHSA kernel (bf16 path) does not match reference")

    print("KERNEL_OK")
</pallas_src>

<mosaic_0001>
module attributes {stable_mosaic.version = 11 : i64} {
  func.func @mhsa_kernel(%arg0: i32, %arg1: memref<2x32x64xf32, #tpu.memory_space<vmem>>, %arg2: memref<96x32xf32, #tpu.memory_space<vmem>>, %arg3: memref<96x1xf32, #tpu.memory_space<vmem>>, %arg4: memref<32x32xf32, #tpu.memory_space<vmem>>, %arg5: memref<2x32x64xf32, #tpu.memory_space<vmem>>, %arg6: memref<32x128xf32, #tpu.memory_space<vmem>>, %arg7: memref<32x128xf32, #tpu.memory_space<vmem>>) attributes {dimension_semantics = [#tpu.dimension_semantics<parallel>], iteration_bounds = array<i64: 1>, scalar_prefetch = 0 : i64, scratch_operands = 2 : i64, tpu.core_type = #tpu.core_type<tc>, window_params = [{transform_indices = @transform_0, window_bounds = array<i64: 2, 32, 64>}, {pipeline_mode = #tpu.pipeline_mode<synchronous>, transform_indices = @transform_1, window_bounds = array<i64: 96, 32>}, {pipeline_mode = #tpu.pipeline_mode<synchronous>, transform_indices = @transform_2, window_bounds = array<i64: 96, 1>}, {pipeline_mode = #tpu.pipeline_mode<synchronous>, transform_indices = @transform_3, window_bounds = array<i64: 32, 32>}, {transform_indices = @transform_4, window_bounds = array<i64: 2, 32, 64>}]} {
    %c0 = arith.constant 0 : index
    %c0_0 = arith.constant 0 : index
    %c0_1 = arith.constant 0 : index
    %0 = vector.load %arg1[%c0, %c0_0, %c0_1] : memref<2x32x64xf32, #tpu.memory_space<vmem>>, vector<1x32x64xf32>
    %1 = vector.shape_cast %0 : vector<1x32x64xf32> to vector<32x64xf32>
    %c0_2 = arith.constant 0 : index
    %c0_3 = arith.constant 0 : index
    %2 = vector.load %arg6[%c0_2, %c0_3] : memref<32x128xf32, #tpu.memory_space<vmem>>, vector<32x64xf32>
    tpu.vector_store %arg6[%c0_2, %c0_3], %1 {strides = array<i32>} : memref<32x128xf32, #tpu.memory_space<vmem>>, vector<32x64xf32>,
    %c1 = arith.constant 1 : index
    %c0_4 = arith.constant 0 : index
    %c0_5 = arith.constant 0 : index
    %3 = vector.load %arg1[%c1, %c0_4, %c0_5] : memref<2x32x64xf32, #tpu.memory_space<vmem>>, vector<1x32x64xf32>
    %4 = vector.shape_cast %3 : vector<1x32x64xf32> to vector<32x64xf32>
    %c0_6 = arith.constant 0 : index
    %c64 = arith.constant 64 : index
    %5 = vector.load %arg6[%c0_6, %c64] : memref<32x128xf32, #tpu.memory_space<vmem>>, vector<32x64xf32>
    tpu.vector_store %arg6[%c0_6, %c64], %4 {strides = array<i32>} : memref<32x128xf32, #tpu.memory_space<vmem>>, vector<32x64xf32>,
    %c0_7 = arith.constant 0 : index
    %c0_8 = arith.constant 0 : index
    %6 = vector.load %arg2[%c0_7, %c0_8] : memref<96x32xf32, #tpu.memory_space<vmem>>, vector<96x32xf32>
    %c0_9 = arith.constant 0 : index
    %c0_10 = arith.constant 0 : index
    %7 = vector.load %arg6[%c0_9, %c0_10] : memref<32x128xf32, #tpu.memory_space<vmem>>, vector<32x128xf32>
    %cst = arith.constant dense<0.000000e+00> : vector<96x128xf32>
    %8 = tpu.matmul %6, %7, %cst {dimension_numbers = #tpu.dot_dimension_numbers<[1], [0], [0], [1], [0, 0, 1, 1], [], []>} : vector<96x32xf32>, vector<32x128xf32>, vector<96x128xf32> -> vector<96x128xf32>
    %c0_11 = arith.constant 0 : index
    %c0_12 = arith.constant 0 : index
    %9 = vector.load %arg3[%c0_11, %c0_12] : memref<96x1xf32, #tpu.memory_space<vmem>>, vector<96x1xf32>
    %10 = vector.broadcast %9 : vector<96x1xf32> to vector<96x128xf32>
    %11 = arith.addf %8, %10 : vector<96x128xf32>
    %12 = vector.extract_strided_slice %11 {offsets = [0, 0], sizes = [8, 64], strides = [1, 1]} : vector<96x128xf32> to vector<8x64xf32>
    %13 = vector.extract_strided_slice %11 {offsets = [32, 0], sizes = [8, 64], strides = [1, 1]} : vector<96x128xf32> to vector<8x64xf32>
    %14 = tpu.transpose %13, [1, 0] : vector<8x64xf32> -> vector<64x8xf32>
    %15 = vector.extract_strided_slice %11 {offsets = [64, 0], sizes = [8, 64], strides = [1, 1]} : vector<96x128xf32> to vector<8x64xf32>
    %cst_13 = arith.constant dense<0.000000e+00> : vector<64x64xf32>
    %16 = tpu.matmul %14, %12, %cst_13 {dimension_numbers = #tpu.dot_dimension_numbers<[1], [0], [0], [1], [0, 0, 1, 1], [], []>} : vector<64x8xf32>, vector<8x64xf32>, vector<64x64xf32> -> vector<64x64xf32>
    %cst_14 = arith.constant dense<0xFF800000> : vector<64xf32>
    %17 = vector.multi_reduction <maximumf>, %16, %cst_14 [0] : vector<64x64xf32> to vector<64xf32>
    %18 = vector.shape_cast %17 : vector<64xf32> to vector<1x64xf32>
    %19 = vector.broadcast %18 : vector<1x64xf32> to vector<64x64xf32>
    %20 = arith.subf %16, %19 : vector<64x64xf32>
    %21 = math.exp %20 : vector<64x64xf32>
    %cst_15 = arith.constant dense<0.000000e+00> : vector<64xf32>
    %22 = vector.multi_reduction <add>, %21, %cst_15 [0] : vector<64x64xf32> to vector<64xf32>
    %23 = vector.shape_cast %22 : vector<64xf32> to vector<1x64xf32>
    %cst_16 = arith.constant dense<0.000000e+00> : vector<8x64xf32>
    %24 = tpu.matmul %15, %21, %cst_16 {dimension_numbers = #tpu.dot_dimension_numbers<[1], [0], [0], [1], [0, 0, 1, 1], [], []>} : vector<8x64xf32>, vector<64x64xf32>, vector<8x64xf32> -> vector<8x64xf32>
    %25 = vector.broadcast %23 : vector<1x64xf32> to vector<8x64xf32>
    %26 = arith.divf %24, %25 : vector<8x64xf32>
    %c0_17 = arith.constant 0 : index
    %c0_18 = arith.constant 0 : index
    %27 = vector.load %arg7[%c0_17, %c0_18] : memref<32x128xf32, #tpu.memory_space<vmem>>, vector<8x64xf32>
    tpu.vector_store %arg7[%c0_17, %c0_18], %26 {strides = array<i32>} : memref<32x128xf32, #tpu.memory_space<vmem>>, vector<8x64xf32>,
    %28 = vector.extract_strided_slice %11 {offsets = [8, 0], sizes = [8, 64], strides = [1, 1]} : vector<96x128xf32> to vector<8x64xf32>
    %29 = vector.extract_strided_slice %11 {offsets = [40, 0], sizes = [8, 64], strides = [1, 1]} : vector<96x128xf32> to vector<8x64xf32>
    %30 = tpu.transpose %29, [1, 0] : vector<8x64xf32> -> vector<64x8xf32>
    %31 = vector.extract_strided_slice %11 {offsets = [72, 0], sizes = [8, 64], strides = [1, 1]} : vector<96x128xf32> to vector<8x64xf32>
    %cst_19 = arith.constant dense<0.000000e+00> : vector<64x64xf32>
    %32 = tpu.matmul %30, %28, %cst_19 {dimension_numbers = #tpu.dot_dimension_numbers<[1], [0], [0], [1], [0, 0, 1, 1], [], []>} : vector<64x8xf32>, vector<8x64xf32>, vector<64x64xf32> -> vector<64x64xf32>
    %cst_20 = arith.constant dense<0xFF800000> : vector<64xf32>
    %33 = vector.multi_reduction <maximumf>, %32, %cst_20 [0] : vector<64x64xf32> to vector<64xf32>
    %34 = vector.shape_cast %33 : vector<64xf32> to vector<1x64xf32>
    %35 = vector.broadcast %34 : vector<1x64xf32> to vector<64x64xf32>
    %36 = arith.subf %32, %35 : vector<64x64xf32>
    %37 = math.exp %36 : vector<64x64xf32>
    %cst_21 = arith.constant dense<0.000000e+00> : vector<64xf32>
    %38 = vector.multi_reduction <add>, %37, %cst_21 [0] : vector<64x64xf32> to vector<64xf32>
    %39 = vector.shape_cast %38 : vector<64xf32> to vector<1x64xf32>
    %cst_22 = arith.constant dense<0.000000e+00> : vector<8x64xf32>
    %40 = tpu.matmul %31, %37, %cst_22 {dimension_numbers = #tpu.dot_dimension_numbers<[1], [0], [0], [1], [0, 0, 1, 1], [], []>} : vector<8x64xf32>, vector<64x64xf32>, vector<8x64xf32> -> vector<8x64xf32>
    %41 = vector.broadcast %39 : vector<1x64xf32> to vector<8x64xf32>
    %42 = arith.divf %40, %41 : vector<8x64xf32>
    %c8 = arith.constant 8 : index
    %c0_23 = arith.constant 0 : index
    %43 = vector.load %arg7[%c8, %c0_23] : memref<32x128xf32, #tpu.memory_space<vmem>>, vector<8x64xf32>
    tpu.vector_store %arg7[%c8, %c0_23], %42 {strides = array<i32>} : memref<32x128xf32, #tpu.memory_space<vmem>>, vector<8x64xf32>,
    %44 = vector.extract_strided_slice %11 {offsets = [16, 0], sizes = [8, 64], strides = [1, 1]} : vector<96x128xf32> to vector<8x64xf32>
    %45 = vector.extract_strided_slice %11 {offsets = [48, 0], sizes = [8, 64], strides = [1, 1]} : vector<96x128xf32> to vector<8x64xf32>
    %46 = tpu.transpose %45, [1, 0] : vector<8x64xf32> -> vector<64x8xf32>
    %47 = vector.extract_strided_slice %11 {offsets = [80, 0], sizes = [8, 64], strides = [1, 1]} : vector<96x128xf32> to vector<8x64xf32>
    %cst_24 = arith.constant dense<0.000000e+00> : vector<64x64xf32>
    %48 = tpu.matmul %46, %44, %cst_24 {dimension_numbers = #tpu.dot_dimension_numbers<[1], [0], [0], [1], [0, 0, 1, 1], [], []>} : vector<64x8xf32>, vector<8x64xf32>, vector<64x64xf32> -> vector<64x64xf32>
    %cst_25 = arith.constant dense<0xFF800000> : vector<64xf32>
    %49 = vector.multi_reduction <maximumf>, %48, %cst_25 [0] : vector<64x64xf32> to vector<64xf32>
    %50 = vector.shape_cast %49 : vector<64xf32> to vector<1x64xf32>
    %51 = vector.broadcast %50 : vector<1x64xf32> to vector<64x64xf32>
    %52 = arith.subf %48, %51 : vector<64x64xf32>
    %53 = math.exp %52 : vector<64x64xf32>
    %cst_26 = arith.constant dense<0.000000e+00> : vector<64xf32>
    %54 = vector.multi_reduction <add>, %53, %cst_26 [0] : vector<64x64xf32> to vector<64xf32>
    %55 = vector.shape_cast %54 : vector<64xf32> to vector<1x64xf32>
    %cst_27 = arith.constant dense<0.000000e+00> : vector<8x64xf32>
    %56 = tpu.matmul %47, %53, %cst_27 {dimension_numbers = #tpu.dot_dimension_numbers<[1], [0], [0], [1], [0, 0, 1, 1], [], []>} : vector<8x64xf32>, vector<64x64xf32>, vector<8x64xf32> -> vector<8x64xf32>
    %57 = vector.broadcast %55 : vector<1x64xf32> to vector<8x64xf32>
    %58 = arith.divf %56, %57 : vector<8x64xf32>
    %c16 = arith.constant 16 : index
    %c0_28 = arith.constant 0 : index
    %59 = vector.load %arg7[%c16, %c0_28] : memref<32x128xf32, #tpu.memory_space<vmem>>, vector<8x64xf32>
    tpu.vector_store %arg7[%c16, %c0_28], %58 {strides = array<i32>} : memref<32x128xf32, #tpu.memory_space<vmem>>, vector<8x64xf32>,
    %60 = vector.extract_strided_slice %11 {offsets = [24, 0], sizes = [8, 64], strides = [1, 1]} : vector<96x128xf32> to vector<8x64xf32>
    %61 = vector.extract_strided_slice %11 {offsets = [56, 0], sizes = [8, 64], strides = [1, 1]} : vector<96x128xf32> to vector<8x64xf32>
    %62 = tpu.transpose %61, [1, 0] : vector<8x64xf32> -> vector<64x8xf32>
    %63 = vector.extract_strided_slice %11 {offsets = [88, 0], sizes = [8, 64], strides = [1, 1]} : vector<96x128xf32> to vector<8x64xf32>
    %cst_29 = arith.constant dense<0.000000e+00> : vector<64x64xf32>
    %64 = tpu.matmul %62, %60, %cst_29 {dimension_numbers = #tpu.dot_dimension_numbers<[1], [0], [0], [1], [0, 0, 1, 1], [], []>} : vector<64x8xf32>, vector<8x64xf32>, vector<64x64xf32> -> vector<64x64xf32>
    %cst_30 = arith.constant dense<0xFF800000> : vector<64xf32>
    %65 = vector.multi_reduction <maximumf>, %64, %cst_30 [0] : vector<64x64xf32> to vector<64xf32>
    %66 = vector.shape_cast %65 : vector<64xf32> to vector<1x64xf32>
    %67 = vector.broadcast %66 : vector<1x64xf32> to vector<64x64xf32>
    %68 = arith.subf %64, %67 : vector<64x64xf32>
    %69 = math.exp %68 : vector<64x64xf32>
    %cst_31 = arith.constant dense<0.000000e+00> : vector<64xf32>
    %70 = vector.multi_reduction <add>, %69, %cst_31 [0] : vector<64x64xf32> to vector<64xf32>
    %71 = vector.shape_cast %70 : vector<64xf32> to vector<1x64xf32>
    %cst_32 = arith.constant dense<0.000000e+00> : vector<8x64xf32>
    %72 = tpu.matmul %63, %69, %cst_32 {dimension_numbers = #tpu.dot_dimension_numbers<[1], [0], [0], [1], [0, 0, 1, 1], [], []>} : vector<8x64xf32>, vector<64x64xf32>, vector<8x64xf32> -> vector<8x64xf32>
    %73 = vector.broadcast %71 : vector<1x64xf32> to vector<8x64xf32>
    %74 = arith.divf %72, %73 : vector<8x64xf32>
    %c24 = arith.constant 24 : index
    %c0_33 = arith.constant 0 : index
    %75 = vector.load %arg7[%c24, %c0_33] : memref<32x128xf32, #tpu.memory_space<vmem>>, vector<8x64xf32>
    tpu.vector_store %arg7[%c24, %c0_33], %74 {strides = array<i32>} : memref<32x128xf32, #tpu.memory_space<vmem>>, vector<8x64xf32>,
    %76 = vector.extract_strided_slice %11 {offsets = [0, 64], sizes = [8, 64], strides = [1, 1]} : vector<96x128xf32> to vector<8x64xf32>
    %77 = vector.extract_strided_slice %11 {offsets = [32, 64], sizes = [8, 64], strides = [1, 1]} : vector<96x128xf32> to vector<8x64xf32>
    %78 = tpu.transpose %77, [1, 0] : vector<8x64xf32> -> vector<64x8xf32>
    %79 = vector.extract_strided_slice %11 {offsets = [64, 64], sizes = [8, 64], strides = [1, 1]} : vector<96x128xf32> to vector<8x64xf32>
    %cst_34 = arith.constant dense<0.000000e+00> : vector<64x64xf32>
    %80 = tpu.matmul %78, %76, %cst_34 {dimension_numbers = #tpu.dot_dimension_numbers<[1], [0], [0], [1], [0, 0, 1, 1], [], []>} : vector<64x8xf32>, vector<8x64xf32>, vector<64x64xf32> -> vector<64x64xf32>
    %cst_35 = arith.constant dense<0xFF800000> : vector<64xf32>
    %81 = vector.multi_reduction <maximumf>, %80, %cst_35 [0] : vector<64x64xf32> to vector<64xf32>
    %82 = vector.shape_cast %81 : vector<64xf32> to vector<1x64xf32>
    %83 = vector.broadcast %82 : vector<1x64xf32> to vector<64x64xf32>
    %84 = arith.subf %80, %83 : vector<64x64xf32>
    %85 = math.exp %84 : vector<64x64xf32>
    %cst_36 = arith.constant dense<0.000000e+00> : vector<64xf32>
    %86 = vector.multi_reduction <add>, %85, %cst_36 [0] : vector<64x64xf32> to vector<64xf32>
    %87 = vector.shape_cast %86 : vector<64xf32> to vector<1x64xf32>
    %cst_37 = arith.constant dense<0.000000e+00> : vector<8x64xf32>
    %88 = tpu.matmul %79, %85, %cst_37 {dimension_numbers = #tpu.dot_dimension_numbers<[1], [0], [0], [1], [0, 0, 1, 1], [], []>} : vector<8x64xf32>, vector<64x64xf32>, vector<8x64xf32> -> vector<8x64xf32>
    %89 = vector.broadcast %87 : vector<1x64xf32> to vector<8x64xf32>
    %90 = arith.divf %88, %89 : vector<8x64xf32>
    %c0_38 = arith.constant 0 : index
    %c64_39 = arith.constant 64 : index
    %91 = vector.load %arg7[%c0_38, %c64_39] : memref<32x128xf32, #tpu.memory_space<vmem>>, vector<8x64xf32>
    tpu.vector_store %arg7[%c0_38, %c64_39], %90 {strides = array<i32>} : memref<32x128xf32, #tpu.memory_space<vmem>>, vector<8x64xf32>,
    %92 = vector.extract_strided_slice %11 {offsets = [8, 64], sizes = [8, 64], strides = [1, 1]} : vector<96x128xf32> to vector<8x64xf32>
    %93 = vector.extract_strided_slice %11 {offsets = [40, 64], sizes = [8, 64], strides = [1, 1]} : vector<96x128xf32> to vector<8x64xf32>
    %94 = tpu.transpose %93, [1, 0] : vector<8x64xf32> -> vector<64x8xf32>
    %95 = vector.extract_strided_slice %11 {offsets = [72, 64], sizes = [8, 64], strides = [1, 1]} : vector<96x128xf32> to vector<8x64xf32>
    %cst_40 = arith.constant dense<0.000000e+00> : vector<64x64xf32>
    %96 = tpu.matmul %94, %92, %cst_40 {dimension_numbers = #tpu.dot_dimension_numbers<[1], [0], [0], [1], [0, 0, 1, 1], [], []>} : vector<64x8xf32>, vector<8x64xf32>, vector<64x64xf32> -> vector<64x64xf32>
    %cst_41 = arith.constant dense<0xFF800000> : vector<64xf32>
    %97 = vector.multi_reduction <maximumf>, %96, %cst_41 [0] : vector<64x64xf32> to vector<64xf32>
    %98 = vector.shape_cast %97 : vector<64xf32> to vector<1x64xf32>
    %99 = vector.broadcast %98 : vector<1x64xf32> to vector<64x64xf32>
    %100 = arith.subf %96, %99 : vector<64x64xf32>
    %101 = math.exp %100 : vector<64x64xf32>
    %cst_42 = arith.constant dense<0.000000e+00> : vector<64xf32>
    %102 = vector.multi_reduction <add>, %101, %cst_42 [0] : vector<64x64xf32> to vector<64xf32>
    %103 = vector.shape_cast %102 : vector<64xf32> to vector<1x64xf32>
    %cst_43 = arith.constant dense<0.000000e+00> : vector<8x64xf32>
    %104 = tpu.matmul %95, %101, %cst_43 {dimension_numbers = #tpu.dot_dimension_numbers<[1], [0], [0], [1], [0, 0, 1, 1], [], []>} : vector<8x64xf32>, vector<64x64xf32>, vector<8x64xf32> -> vector<8x64xf32>
    %105 = vector.broadcast %103 : vector<1x64xf32> to vector<8x64xf32>
    %106 = arith.divf %104, %105 : vector<8x64xf32>
    %c8_44 = arith.constant 8 : index
    %c64_45 = arith.constant 64 : index
    %107 = vector.load %arg7[%c8_44, %c64_45] : memref<32x128xf32, #tpu.memory_space<vmem>>, vector<8x64xf32>
    tpu.vector_store %arg7[%c8_44, %c64_45], %106 {strides = array<i32>} : memref<32x128xf32, #tpu.memory_space<vmem>>, vector<8x64xf32>,
    %108 = vector.extract_strided_slice %11 {offsets = [16, 64], sizes = [8, 64], strides = [1, 1]} : vector<96x128xf32> to vector<8x64xf32>
    %109 = vector.extract_strided_slice %11 {offsets = [48, 64], sizes = [8, 64], strides = [1, 1]} : vector<96x128xf32> to vector<8x64xf32>
    %110 = tpu.transpose %109, [1, 0] : vector<8x64xf32> -> vector<64x8xf32>
    %111 = vector.extract_strided_slice %11 {offsets = [80, 64], sizes = [8, 64], strides = [1, 1]} : vector<96x128xf32> to vector<8x64xf32>
    %cst_46 = arith.constant dense<0.000000e+00> : vector<64x64xf32>
    %112 = tpu.matmul %110, %108, %cst_46 {dimension_numbers = #tpu.dot_dimension_numbers<[1], [0], [0], [1], [0, 0, 1, 1], [], []>} : vector<64x8xf32>, vector<8x64xf32>, vector<64x64xf32> -> vector<64x64xf32>
    %cst_47 = arith.constant dense<0xFF800000> : vector<64xf32>
    %113 = vector.multi_reduction <maximumf>, %112, %cst_47 [0] : vector<64x64xf32> to vector<64xf32>
    %114 = vector.shape_cast %113 : vector<64xf32> to vector<1x64xf32>
    %115 = vector.broadcast %114 : vector<1x64xf32> to vector<64x64xf32>
    %116 = arith.subf %112, %115 : vector<64x64xf32>
    %117 = math.exp %116 : vector<64x64xf32>
    %cst_48 = arith.constant dense<0.000000e+00> : vector<64xf32>
    %118 = vector.multi_reduction <add>, %117, %cst_48 [0] : vector<64x64xf32> to vector<64xf32>
    %119 = vector.shape_cast %118 : vector<64xf32> to vector<1x64xf32>
    %cst_49 = arith.constant dense<0.000000e+00> : vector<8x64xf32>
    %120 = tpu.matmul %111, %117, %cst_49 {dimension_numbers = #tpu.dot_dimension_numbers<[1], [0], [0], [1], [0, 0, 1, 1], [], []>} : vector<8x64xf32>, vector<64x64xf32>, vector<8x64xf32> -> vector<8x64xf32>
    %121 = vector.broadcast %119 : vector<1x64xf32> to vector<8x64xf32>
    %122 = arith.divf %120, %121 : vector<8x64xf32>
    %c16_50 = arith.constant 16 : index
    %c64_51 = arith.constant 64 : index
    %123 = vector.load %arg7[%c16_50, %c64_51] : memref<32x128xf32, #tpu.memory_space<vmem>>, vector<8x64xf32>
    tpu.vector_store %arg7[%c16_50, %c64_51], %122 {strides = array<i32>} : memref<32x128xf32, #tpu.memory_space<vmem>>, vector<8x64xf32>,
    %124 = vector.extract_strided_slice %11 {offsets = [24, 64], sizes = [8, 64], strides = [1, 1]} : vector<96x128xf32> to vector<8x64xf32>
    %125 = vector.extract_strided_slice %11 {offsets = [56, 64], sizes = [8, 64], strides = [1, 1]} : vector<96x128xf32> to vector<8x64xf32>
    %126 = tpu.transpose %125, [1, 0] : vector<8x64xf32> -> vector<64x8xf32>
    %127 = vector.extract_strided_slice %11 {offsets = [88, 64], sizes = [8, 64], strides = [1, 1]} : vector<96x128xf32> to vector<8x64xf32>
    %cst_52 = arith.constant dense<0.000000e+00> : vector<64x64xf32>
    %128 = tpu.matmul %126, %124, %cst_52 {dimension_numbers = #tpu.dot_dimension_numbers<[1], [0], [0], [1], [0, 0, 1, 1], [], []>} : vector<64x8xf32>, vector<8x64xf32>, vector<64x64xf32> -> vector<64x64xf32>
    %cst_53 = arith.constant dense<0xFF800000> : vector<64xf32>
    %129 = vector.multi_reduction <maximumf>, %128, %cst_53 [0] : vector<64x64xf32> to vector<64xf32>
    %130 = vector.shape_cast %129 : vector<64xf32> to vector<1x64xf32>
    %131 = vector.broadcast %130 : vector<1x64xf32> to vector<64x64xf32>
    %132 = arith.subf %128, %131 : vector<64x64xf32>
    %133 = math.exp %132 : vector<64x64xf32>
    %cst_54 = arith.constant dense<0.000000e+00> : vector<64xf32>
    %134 = vector.multi_reduction <add>, %133, %cst_54 [0] : vector<64x64xf32> to vector<64xf32>
    %135 = vector.shape_cast %134 : vector<64xf32> to vector<1x64xf32>
    %cst_55 = arith.constant dense<0.000000e+00> : vector<8x64xf32>
    %136 = tpu.matmul %127, %133, %cst_55 {dimension_numbers = #tpu.dot_dimension_numbers<[1], [0], [0], [1], [0, 0, 1, 1], [], []>} : vector<8x64xf32>, vector<64x64xf32>, vector<8x64xf32> -> vector<8x64xf32>
    %137 = vector.broadcast %135 : vector<1x64xf32> to vector<8x64xf32>
    %138 = arith.divf %136, %137 : vector<8x64xf32>
    %c24_56 = arith.constant 24 : index
    %c64_57 = arith.constant 64 : index
    %139 = vector.load %arg7[%c24_56, %c64_57] : memref<32x128xf32, #tpu.memory_space<vmem>>, vector<8x64xf32>
    tpu.vector_store %arg7[%c24_56, %c64_57], %138 {strides = array<i32>} : memref<32x128xf32, #tpu.memory_space<vmem>>, vector<8x64xf32>,
    %c0_58 = arith.constant 0 : index
    %c0_59 = arith.constant 0 : index
    %140 = vector.load %arg4[%c0_58, %c0_59] : memref<32x32xf32, #tpu.memory_space<vmem>>, vector<32x32xf32>
    %c0_60 = arith.constant 0 : index
    %c0_61 = arith.constant 0 : index
    %141 = vector.load %arg7[%c0_60, %c0_61] : memref<32x128xf32, #tpu.memory_space<vmem>>, vector<32x128xf32>
    %cst_62 = arith.constant dense<0.000000e+00> : vector<32x128xf32>
    %142 = tpu.matmul %140, %141, %cst_62 {dimension_numbers = #tpu.dot_dimension_numbers<[1], [0], [0], [1], [0, 0, 1, 1], [], []>} : vector<32x32xf32>, vector<32x128xf32>, vector<32x128xf32> -> vector<32x128xf32>
    %143 = vector.extract_strided_slice %142 {offsets = [0, 0], sizes = [32, 64], strides = [1, 1]} : vector<32x128xf32> to vector<32x64xf32>
    %c0_63 = arith.constant 0 : index
    %c0_64 = arith.constant 0 : index
    %c0_65 = arith.constant 0 : index
    %144 = vector.load %arg1[%c0_63, %c0_64, %c0_65] : memref<2x32x64xf32, #tpu.memory_space<vmem>>, vector<1x32x64xf32>
    %145 = vector.shape_cast %144 : vector<1x32x64xf32> to vector<32x64xf32>
    %146 = arith.addf %143, %145 : vector<32x64xf32>
    %c0_66 = arith.constant 0 : index
    %c0_67 = arith.constant 0 : index
    %c0_68 = arith.constant 0 : index
    %147 = vector.load %arg5[%c0_66, %c0_67, %c0_68] : memref<2x32x64xf32, #tpu.memory_space<vmem>>, vector<1x32x64xf32>
    %148 = vector.shape_cast %147 : vector<1x32x64xf32> to vector<32x64xf32>
    %149 = vector.shape_cast %146 : vector<32x64xf32> to vector<1x32x64xf32>
    tpu.vector_store %arg5[%c0_66, %c0_67, %c0_68], %149 {strides = array<i32>} : memref<2x32x64xf32, #tpu.memory_space<vmem>>, vector<1x32x64xf32>,
    %150 = vector.extract_strided_slice %142 {offsets = [0, 64], sizes = [32, 64], strides = [1, 1]} : vector<32x128xf32> to vector<32x64xf32>
    %c1_69 = arith.constant 1 : index
    %c0_70 = arith.constant 0 : index
    %c0_71 = arith.constant 0 : index
    %151 = vector.load %arg1[%c1_69, %c0_70, %c0_71] : memref<2x32x64xf32, #tpu.memory_space<vmem>>, vector<1x32x64xf32>
    %152 = vector.shape_cast %151 : vector<1x32x64xf32> to vector<32x64xf32>
    %153 = arith.addf %150, %152 : vector<32x64xf32>
    %c1_72 = arith.constant 1 : index
    %c0_73 = arith.constant 0 : index
    %c0_74 = arith.constant 0 : index
    %154 = vector.load %arg5[%c1_72, %c0_73, %c0_74] : memref<2x32x64xf32, #tpu.memory_space<vmem>>, vector<1x32x64xf32>
    %155 = vector.shape_cast %154 : vector<1x32x64xf32> to vector<32x64xf32>
    %156 = vector.shape_cast %153 : vector<32x64xf32> to vector<1x32x64xf32>
    tpu.vector_store %arg5[%c1_72, %c0_73, %c0_74], %156 {strides = array<i32>} : memref<2x32x64xf32, #tpu.memory_space<vmem>>, vector<1x32x64xf32>,
    return
  }
  func.func @transform_0(%arg0: i32) -> (i32, i32, i32) {
    %c0_i32 = arith.constant 0 : i32
    %c0_i32_0 = arith.constant 0 : i32
    %c0_i32_1 = arith.constant 0 : i32
    return %arg0, %c0_i32, %c0_i32_0 : i32, i32, i32
  }
  func.func @transform_1(%arg0: i32) -> (i32, i32) {
    %c0_i32 = arith.constant 0 : i32
    %c0_i32_0 = arith.constant 0 : i32
    %c0_i32_1 = arith.constant 0 : i32
    return %c0_i32, %c0_i32_0 : i32, i32
  }
  func.func @transform_2(%arg0: i32) -> (i32, i32) {
    %c0_i32 = arith.constant 0 : i32
    %c0_i32_0 = arith.constant 0 : i32
    %c0_i32_1 = arith.constant 0 : i32
    return %c0_i32, %c0_i32_0 : i32, i32
  }
  func.func @transform_3(%arg0: i32) -> (i32, i32) {
    %c0_i32 = arith.constant 0 : i32
    %c0_i32_0 = arith.constant 0 : i32
    %c0_i32_1 = arith.constant 0 : i32
    return %c0_i32, %c0_i32_0 : i32, i32
  }
  func.func @transform_4(%arg0: i32) -> (i32, i32, i32) {
    %c0_i32 = arith.constant 0 : i32
    %c0_i32_0 = arith.constant 0 : i32
    %c0_i32_1 = arith.constant 0 : i32
    return %arg0, %c0_i32, %c0_i32_0 : i32, i32, i32
  }
}

</mosaic_0001>

<llo_original>
// kernel: tpu_custom_call.1
$region0: #{tpu_custom_call.1}
  #allocation0 [shape = 'u32[]', space=smem, size = 0x4, offset = 0x4, fixed_abs, tag = 'smem constant byte address 0x4 - core index']
  #allocation1 [shape = 'u32[144,128]{1,0:T(1,128)}', space=vmem, size = 0x12000, scoped, tag = 'internal scratch']
  #allocation2 [shape = 'f32[32,128]{1,0:T(8,128)}', space=vmem, size = 0x4000, scoped, tag = 'scratch operand']
  #allocation3 [shape = 'f32[32,128]{1,0:T(8,128)}', space=vmem, size = 0x4000, scoped, tag = 'scratch operand']
  %s0 = inlined_call_operand.vmem [shape: f32[2,32,64], index: 0, kind: input, shape index: {}]
  %s1 = inlined_call_operand.vmem [shape: f32[96,32], index: 1, kind: input, shape index: {}]
  %s2 = inlined_call_operand.vmem [shape: f32[96,1], index: 2, kind: input, shape index: {}]
  %s3 = inlined_call_operand.vmem [shape: f32[32,32], index: 3, kind: input, shape index: {}]
  %s4 = inlined_call_operand.hbm [shape: f32[2,32,64], index: 4, kind: output, shape index: {}]
  %s5 = sld [smem:[#allocation0]]
  $region26: #{tpu_custom_call.1} parent=0
    _
  %s7 = ssub.s32 1, %s5
  %s8 = scalar_select 0, %s7, %s5
  $region1: #{tpu_custom_call.1} parent=0
    #allocation4 [shape = 'u8[32768]{0}', space=vmem, size = 0x8000, scoped, tag = 'output window, operand 0, single buffered']
    #allocation5 [shape = 's32[1]{0}', space=sflag, size = 0x4, scoped, tag = 'scoped memory for tpu_custom_call.1']
    %9 = vsyncpa [#allocation5], 0
    // Predicated region
    $region2: #{tpu_custom_call.1} parent=1 // pred_check
      _
    $region3: #{tpu_custom_call.1} parent=1 // pred_check_branch
      %11 = sbr.rel (0) target = $region5
    $region4: #{tpu_custom_call.1} parent=1 // pred_region
      _
    $region5: #{tpu_custom_call.1} parent=1 // pred_fallthru
      _
    // Predicated region
    $region6: #{tpu_custom_call.1} parent=1 // pred_check
      _
    $region7: #{tpu_custom_call.1} parent=1 // pred_check_branch
      %13 = sbr.rel (0) target = $region9
    $region8: #{tpu_custom_call.1} parent=1 // pred_region
      _
    $region9: #{tpu_custom_call.1} parent=1 // pred_fallthru
      _
    // Predicated region
    $region10: #{tpu_custom_call.1} parent=1 // pred_check
      _
    $region11: #{tpu_custom_call.1} parent=1 // pred_check_branch
      %15 = sbr.rel (0) target = $region13
    $region12: #{tpu_custom_call.1} parent=1 // pred_region
      _
    $region13: #{tpu_custom_call.1} parent=1 // pred_fallthru
      _
    // Predicated region
    $region14: #{tpu_custom_call.1} parent=1 // pred_check
      _
    $region15: #{tpu_custom_call.1} parent=1 // pred_check_branch
      %17 = sbr.rel (0) target = $region17
    $region16: #{tpu_custom_call.1} parent=1 // pred_region
      _
    $region17: #{tpu_custom_call.1} parent=1 // pred_fallthru
      _
    %v18 = vld [vmem:[%s0] sm:$0xff]
    %v19 = vld [vmem:[%s0 + $0x8] sm:$0xff]
    %v20 = vld [vmem:[%s0 + $0x10] sm:$0xff]
    %v21 = vld [vmem:[%s0 + $0x18] sm:$0xff]
    %vm22 = vcmask 523264
    %23 = vst.msk [vmem:[#allocation2] sm:$0xff] %vm22, %v18
    %24 = vst.msk [vmem:[#allocation2 + $0x8] sm:$0xff] %vm22, %v19
    %25 = vst.msk [vmem:[#allocation2 + $0x10] sm:$0xff] %vm22, %v20
    %26 = vst.msk [vmem:[#allocation2 + $0x18] sm:$0xff] %vm22, %v21
    %s27 = scalar_lea.vmem %s0, 32
    %v28 = vld [vmem:[%s27] sm:$0xff]
    %v29 = vld [vmem:[%s27 + $0x8] sm:$0xff]
    %v30 = vld [vmem:[%s27 + $0x10] sm:$0xff]
    %v31 = vld [vmem:[%s27 + $0x18] sm:$0xff]
    %36 = vrot.lane.b32.xlu0 %v28, 64
    %v37 = vpop.permute.xlu0 %36
    %38 = vrot.lane.b32.xlu0 %v29, 64
    %v39 = vpop.permute.xlu0 %38
    %40 = vrot.lane.b32.xlu0 %v30, 64
    %v41 = vpop.permute.xlu0 %40
    %42 = vrot.lane.b32.xlu0 %v31, 64
    %v43 = vpop.permute.xlu0 %42
    %vm48 = vcmask 1048064
    %49 = vst.msk [vmem:[#allocation2] sm:$0xff] %vm48, %v37
    %50 = vst.msk [vmem:[#allocation2 + $0x8] sm:$0xff] %vm48, %v39
    %51 = vst.msk [vmem:[#allocation2 + $0x10] sm:$0xff] %vm48, %v41
    %52 = vst.msk [vmem:[#allocation2 + $0x18] sm:$0xff] %vm48, %v43
    %v53 = vld [vmem:[%s1] sm:$0xff]
    %v54 = vld [vmem:[%s1 + $0x8] sm:$0xff]
    %v55 = vld [vmem:[%s1 + $0x10] sm:$0xff]
    %v56 = vld [vmem:[%s1 + $0x18] sm:$0xff]
    %v57 = vld [vmem:[%s1 + $0x20] sm:$0xff]
    %v58 = vld [vmem:[%s1 + $0x28] sm:$0xff]
    %v59 = vld [vmem:[%s1 + $0x30] sm:$0xff]
    %v60 = vld [vmem:[%s1 + $0x38] sm:$0xff]
    %v61 = vld [vmem:[%s1 + $0x40] sm:$0xff]
    %v62 = vld [vmem:[%s1 + $0x48] sm:$0xff]
    %v63 = vld [vmem:[%s1 + $0x50] sm:$0xff]
    %v64 = vld [vmem:[%s1 + $0x58] sm:$0xff]
    %v65 = vld [vmem:[#allocation2] sm:$0xff]
    %v66 = vld [vmem:[#allocation2 + $0x8] sm:$0xff]
    %v67 = vld [vmem:[#allocation2 + $0x10] sm:$0xff]
    %v68 = vld [vmem:[#allocation2 + $0x18] sm:$0xff]
    %v69 = vld [vmem:[%s2] sm:$0xff]
    %v70 = vld [vmem:[%s2 + $0x8] sm:$0xff]
    %v71 = vld [vmem:[%s2 + $0x10] sm:$0xff]
    %v72 = vld [vmem:[%s2 + $0x18] sm:$0xff]
    %v73 = vld [vmem:[%s2 + $0x20] sm:$0xff]
    %v74 = vld [vmem:[%s2 + $0x28] sm:$0xff]
    %v75 = vld [vmem:[%s2 + $0x30] sm:$0xff]
    %v76 = vld [vmem:[%s2 + $0x38] sm:$0xff]
    %v77 = vld [vmem:[%s2 + $0x40] sm:$0xff]
    %v78 = vld [vmem:[%s2 + $0x48] sm:$0xff]
    %v79 = vld [vmem:[%s2 + $0x50] sm:$0xff]
    %v80 = vld [vmem:[%s2 + $0x58] sm:$0xff]
    %82 = vset.pattern.permute.xlu0 0
    %83 = vperm.xlu0 %82, %v69
    %v84 = vpop.permute.xlu0 %83
    %87 = vset.pattern.permute.xlu0 0
    %88 = vperm.xlu0 %87, %v70
    %v89 = vpop.permute.xlu0 %88
    %92 = vset.pattern.permute.xlu0 0
    %93 = vperm.xlu0 %92, %v71
    %v94 = vpop.permute.xlu0 %93
    %97 = vset.pattern.permute.xlu0 0
    %98 = vperm.xlu0 %97, %v72
    %v99 = vpop.permute.xlu0 %98
    %102 = vset.pattern.permute.xlu0 0
    %103 = vperm.xlu0 %102, %v73
    %v104 = vpop.permute.xlu0 %103
    %107 = vset.pattern.permute.xlu0 0
    %108 = vperm.xlu0 %107, %v74
    %v109 = vpop.permute.xlu0 %108
    %112 = vset.pattern.permute.xlu0 0
    %113 = vperm.xlu0 %112, %v75
    %v114 = vpop.permute.xlu0 %113
    %117 = vset.pattern.permute.xlu0 0
    %118 = vperm.xlu0 %117, %v76
    %v119 = vpop.permute.xlu0 %118
    %122 = vset.pattern.permute.xlu0 0
    %123 = vperm.xlu0 %122, %v77
    %v124 = vpop.permute.xlu0 %123
    %127 = vset.pattern.permute.xlu0 0
    %128 = vperm.xlu0 %127, %v78
    %v129 = vpop.permute.xlu0 %128
    %132 = vset.pattern.permute.xlu0 0
    %133 = vperm.xlu0 %132, %v79
    %v134 = vpop.permute.xlu0 %133
    %137 = vset.pattern.permute.xlu0 0
    %138 = vperm.xlu0 %137, %v80
    %v139 = vpop.permute.xlu0 %138
    %vm141 = vcmask 261120
    %v143 = vsel %vm141, %v53, 0
    %v146 = vsel %vm141, %v54, 0
    %v149 = vsel %vm141, %v55, 0
    %v152 = vsel %vm141, %v56, 0
    %v155 = vsel %vm141, %v57, 0
    %v158 = vsel %vm141, %v58, 0
    %v161 = vsel %vm141, %v59, 0
    %v164 = vsel %vm141, %v60, 0
    %v167 = vsel %vm141, %v61, 0
    %v170 = vsel %vm141, %v62, 0
    %v173 = vsel %vm141, %v63, 0
    %v176 = vsel %vm141, %v64, 0
    %178 = vmatprep.subr.mxu0 0.0
    %179 = vmatpush1.msra.mxu0 0.0
    %180 = vmatprep.subr.mxu0 0.0
    %181 = vmatpush1.msra.mxu0 0.0
    %182 = vmatprep.subr.mxu0 0.0
    %183 = vmatpush1.msra.mxu0 0.0
    %184 = vmatprep.subr.mxu0 0.0
    %185 = vmatpush1.msra.mxu0 0.0
    %186 = vmatprep.subr.mxu0 0.0
    %187 = vmatpush1.msra.mxu0 0.0
    %188 = vmatprep.subr.mxu0 0.0
    %189 = vmatpush1.msra.mxu0 0.0
    %190 = vmatprep.subr.mxu0 0.0
    %191 = vmatpush1.msra.mxu0 0.0
    %192 = vmatprep.subr.mxu0 0.0
    %193 = vmatpush1.msra.mxu0 0.0
    %194 = vmatprep.subr.mxu0 0.0
    %195 = vmatpush1.msra.mxu0 0.0
    %196 = vmatprep.subr.mxu0 0.0
    %197 = vmatpush1.msra.mxu0 0.0
    %198 = vmatprep.subr.mxu0 0.0
    %199 = vmatpush1.msra.mxu0 0.0
    %200 = vmatprep.subr.mxu0 0.0
    %201 = vmatpush1.msra.mxu0 0.0
    %202 = vmatprep.subr.mxu0 0.0
    %203 = vmatpush1.msra.mxu0 %v68
    %204 = vmatprep.subr.mxu0 0.0
    %205 = vmatpush1.msra.mxu0 %v67
    %206 = vmatprep.subr.mxu0 0.0
    %207 = vmatpush1.msra.mxu0 %v66
    %208 = vmatprep.subr.mxu0 0.0
    %209 = vmatpush1.msra.mxu0 %v65
    %210 = vmatprep.subr.mxu0 0.0
    %211 = vmatpush2.msra.mxu0 0.0
    %212 = vmatprep.subr.mxu0 0.0
    %213 = vmatpush2.msra.mxu0 0.0
    %214 = vmatprep.subr.mxu0 0.0
    %215 = vmatpush2.msra.mxu0 0.0
    %216 = vmatprep.subr.mxu0 0.0
    %217 = vmatpush2.msra.mxu0 0.0
    %218 = vmatprep.subr.mxu0 0.0
    %219 = vmatpush2.msra.mxu0 0.0
    %220 = vmatprep.subr.mxu0 0.0
    %221 = vmatpush2.msra.mxu0 0.0
    %222 = vmatprep.subr.mxu0 0.0
    %223 = vmatpush2.msra.mxu0 0.0
    %224 = vmatprep.subr.mxu0 0.0
    %225 = vmatpush2.msra.mxu0 0.0
    %226 = vmatprep.subr.mxu0 0.0
    %227 = vmatpush2.msra.mxu0 0.0
    %228 = vmatprep.subr.mxu0 0.0
    %229 = vmatpush2.msra.mxu0 0.0
    %230 = vmatprep.subr.mxu0 0.0
    %231 = vmatpush2.msra.mxu0 0.0
    %232 = vmatprep.subr.mxu0 0.0
    %233 = vmatpush2.msra.mxu0 0.0
    %234 = vmatprep.subr.mxu0 0.0
    %235 = vmatpush2.msra.mxu0 0.0
    %236 = vmatprep.subr.mxu0 0.0
    %237 = vmatpush2.msra.mxu0 0.0
    %238 = vmatprep.subr.mxu0 0.0
    %239 = vmatpush2.msra.mxu0 0.0
    %240 = vmatprep.subr.mxu0 0.0
    %241 = vmatpush2.msra.mxu0 0.0
    %242 = vmatprep.mubr.f32.mxu0 0.0
    %243 = vmatmul.mubr.f32.gmra.mxu0 %v143
    %v244 = vpop.f32.mrf.mxu0
    %v245 = vadd.f32 %v84, %v244
    %v246 = vpop.f32.mrf.mxu0
    %247 = vmatprep.mubr.f32.mxu0 0.0
    %248 = vmatmul.mubr.f32.gmra.mxu0 %v146
    %v249 = vpop.f32.mrf.mxu0
    %v250 = vadd.f32 %v89, %v249
    %v251 = vpop.f32.mrf.mxu0
    %252 = vmatprep.mubr.f32.mxu0 0.0
    %253 = vmatmul.mubr.f32.gmra.mxu0 %v149
    %v254 = vpop.f32.mrf.mxu0
    %v255 = vadd.f32 %v94, %v254
    %v256 = vpop.f32.mrf.mxu0
    %257 = vmatprep.mubr.f32.mxu0 0.0
    %258 = vmatmul.mubr.f32.gmra.mxu0 %v152
    %v259 = vpop.f32.mrf.mxu0
    %v260 = vadd.f32 %v99, %v259
    %v261 = vpop.f32.mrf.mxu0
    %262 = vmatprep.mubr.f32.mxu0 0.0
    %263 = vmatmul.mubr.f32.gmra.mxu0 %v155
    %v264 = vpop.f32.mrf.mxu0
    %v265 = vadd.f32 %v104, %v264
    %v266 = vpop.f32.mrf.mxu0
    %267 = vmatprep.mubr.f32.mxu0 0.0
    %268 = vmatmul.mubr.f32.gmra.mxu0 %v158
    %v269 = vpop.f32.mrf.mxu0
    %v270 = vadd.f32 %v109, %v269
    %v271 = vpop.f32.mrf.mxu0
    %272 = vmatprep.mubr.f32.mxu0 0.0
    %273 = vmatmul.mubr.f32.gmra.mxu0 %v161
    %v274 = vpop.f32.mrf.mxu0
    %v275 = vadd.f32 %v114, %v274
    %v276 = vpop.f32.mrf.mxu0
    %277 = vmatprep.mubr.f32.mxu0 0.0
    %278 = vmatmul.mubr.f32.gmra.mxu0 %v164
    %v279 = vpop.f32.mrf.mxu0
    %v280 = vadd.f32 %v119, %v279
    %v281 = vpop.f32.mrf.mxu0
    %282 = vmatprep.mubr.f32.mxu0 0.0
    %283 = vmatmul.mubr.f32.gmra.mxu0 %v167
    %v284 = vpop.f32.mrf.mxu0
    %v285 = vadd.f32 %v124, %v284
    %v286 = vpop.f32.mrf.mxu0
    %287 = vmatprep.mubr.f32.mxu0 0.0
    %288 = vmatmul.mubr.f32.gmra.mxu0 %v170
    %v289 = vpop.f32.mrf.mxu0
    %v290 = vadd.f32 %v129, %v289
    %v291 = vpop.f32.mrf.mxu0
    %292 = vmatprep.mubr.f32.mxu0 0.0
    %293 = vmatmul.mubr.f32.gmra.mxu0 %v173
    %v294 = vpop.f32.mrf.mxu0
    %v295 = vadd.f32 %v134, %v294
    %v296 = vpop.f32.mrf.mxu0
    %297 = vmatprep.mubr.f32.mxu0 0.0
    %298 = vmatmul.mubr.f32.gmra.mxu0 %v176
    %v299 = vpop.f32.mrf.mxu0
    %v300 = vadd.f32 %v139, %v299
    %v301 = vpop.f32.mrf.mxu0
    %302 = vdwg.mxu0
    %303 = vxpose.xlu0.b32.start [1/16] %v265, 128
    %304 = vxpose.xlu0.b32.cont [2/16] 0.0, 128
    %305 = vxpose.xlu0.b32.cont [3/16] 0.0, 128
    %306 = vxpose.xlu0.b32.cont [4/16] 0.0, 128
    %307 = vxpose.xlu0.b32.cont [5/16] 0.0, 128
    %308 = vxpose.xlu0.b32.cont [6/16] 0.0, 128
    %309 = vxpose.xlu0.b32.cont [7/16] 0.0, 128
    %310 = vxpose.xlu0.b32.cont [8/16] 0.0, 128
    %311 = vxpose.xlu0.b32.cont [9/16] 0.0, 128
    %312 = vxpose.xlu0.b32.cont [10/16] 0.0, 128
    %313 = vxpose.xlu0.b32.cont [11/16] 0.0, 128
    %314 = vxpose.xlu0.b32.cont [12/16] 0.0, 128
    %315 = vxpose.xlu0.b32.cont [13/16] 0.0, 128
    %316 = vxpose.xlu0.b32.cont [14/16] 0.0, 128
    %317 = vxpose.xlu0.b32.cont [15/16] 0.0, 128
    %318 = vxpose.xlu0.b32.end [16/16] 0.0, 128
    %v319 = vpop.trf.xlu0
    %v320 = vpop.trf.xlu0
    %v321 = vpop.trf.xlu0
    %v322 = vpop.trf.xlu0
    %v323 = vpop.trf.xlu0
    %v324 = vpop.trf.xlu0
    %v325 = vpop.trf.xlu0
    %v326 = vpop.trf.xlu0
    %v327 = vpop.trf.xlu0
    %v328 = vpop.trf.xlu0
    %v329 = vpop.trf.xlu0
    %v330 = vpop.trf.xlu0
    %v331 = vpop.trf.xlu0
    %v332 = vpop.trf.xlu0
    %v333 = vpop.trf.xlu0
    %v334 = vpop.trf.xlu0
    %vm335 = vcmask 64512
    %v337 = vsel %vm335, %v319, 0
    %v340 = vsel %vm335, %v320, 0
    %v343 = vsel %vm335, %v321, 0
    %v346 = vsel %vm335, %v322, 0
    %v349 = vsel %vm335, %v323, 0
    %v352 = vsel %vm335, %v324, 0
    %v355 = vsel %vm335, %v325, 0
    %v358 = vsel %vm335, %v326, 0
    %360 = vmatprep.subr.mxu0 0.0
    %361 = vmatpush1.msra.mxu0 0.0
    %362 = vmatprep.subr.mxu0 0.0
    %363 = vmatpush1.msra.mxu0 0.0
    %364 = vmatprep.subr.mxu0 0.0
    %365 = vmatpush1.msra.mxu0 0.0
    %366 = vmatprep.subr.mxu0 0.0
    %367 = vmatpush1.msra.mxu0 0.0
    %368 = vmatprep.subr.mxu0 0.0
    %369 = vmatpush1.msra.mxu0 0.0
    %370 = vmatprep.subr.mxu0 0.0
    %371 = vmatpush1.msra.mxu0 0.0
    %372 = vmatprep.subr.mxu0 0.0
    %373 = vmatpush1.msra.mxu0 0.0
    %374 = vmatprep.subr.mxu0 0.0
    %375 = vmatpush1.msra.mxu0 0.0
    %376 = vmatprep.subr.mxu0 0.0
    %377 = vmatpush1.msra.mxu0 0.0
    %378 = vmatprep.subr.mxu0 0.0
    %379 = vmatpush1.msra.mxu0 0.0
    %380 = vmatprep.subr.mxu0 0.0
    %381 = vmatpush1.msra.mxu0 0.0
    %382 = vmatprep.subr.mxu0 0.0
    %383 = vmatpush1.msra.mxu0 0.0
    %384 = vmatprep.subr.mxu0 0.0
    %385 = vmatpush1.msra.mxu0 0.0
    %386 = vmatprep.subr.mxu0 0.0
    %387 = vmatpush1.msra.mxu0 0.0
    %388 = vmatprep.subr.mxu0 0.0
    %389 = vmatpush1.msra.mxu0 0.0
    %390 = vmatprep.subr.mxu0 0.0
    %391 = vmatpush1.msra.mxu0 %v245
    %392 = vmatprep.subr.mxu0 0.0
    %393 = vmatpush2.msra.mxu0 0.0
    %394 = vmatprep.subr.mxu0 0.0
    %395 = vmatpush2.msra.mxu0 0.0
    %396 = vmatprep.subr.mxu0 0.0
    %397 = vmatpush2.msra.mxu0 0.0
    %398 = vmatprep.subr.mxu0 0.0
    %399 = vmatpush2.msra.mxu0 0.0
    %400 = vmatprep.subr.mxu0 0.0
    %401 = vmatpush2.msra.mxu0 0.0
    %402 = vmatprep.subr.mxu0 0.0
    %403 = vmatpush2.msra.mxu0 0.0
    %404 = vmatprep.subr.mxu0 0.0
    %405 = vmatpush2.msra.mxu0 0.0
    %406 = vmatprep.subr.mxu0 0.0
    %407 = vmatpush2.msra.mxu0 0.0
    %408 = vmatprep.subr.mxu0 0.0
    %409 = vmatpush2.msra.mxu0 0.0
    %410 = vmatprep.subr.mxu0 0.0
    %411 = vmatpush2.msra.mxu0 0.0
    %412 = vmatprep.subr.mxu0 0.0
    %413 = vmatpush2.msra.mxu0 0.0
    %414 = vmatprep.subr.mxu0 0.0
    %415 = vmatpush2.msra.mxu0 0.0
    %416 = vmatprep.subr.mxu0 0.0
    %417 = vmatpush2.msra.mxu0 0.0
    %418 = vmatprep.subr.mxu0 0.0
    %419 = vmatpush2.msra.mxu0 0.0
    %420 = vmatprep.subr.mxu0 0.0
    %421 = vmatpush2.msra.mxu0 0.0
    %422 = vmatprep.subr.mxu0 0.0
    %423 = vmatpush2.msra.mxu0 0.0
    %424 = vmatprep.mubr.f32.mxu0 0.0
    %425 = vmatmul.mubr.f32.gmra.mxu0 %v337
    %v426 = vpop.f32.mrf.mxu0
    %v427 = vadd.f32 0.0, %v426
    %v428 = vpop.f32.mrf.mxu0
    %429 = vmatprep.mubr.f32.mxu0 0.0
    %430 = vmatmul.mubr.f32.gmra.mxu0 %v340
    %v431 = vpop.f32.mrf.mxu0
    %v432 = vadd.f32 0.0, %v431
    %v433 = vpop.f32.mrf.mxu0
    %434 = vmatprep.mubr.f32.mxu0 0.0
    %435 = vmatmul.mubr.f32.gmra.mxu0 %v343
    %v436 = vpop.f32.mrf.mxu0
    %v437 = vadd.f32 0.0, %v436
    %v438 = vpop.f32.mrf.mxu0
    %439 = vmatprep.mubr.f32.mxu0 0.0
    %440 = vmatmul.mubr.f32.gmra.mxu0 %v346
    %v441 = vpop.f32.mrf.mxu0
    %v442 = vadd.f32 0.0, %v441
    %v443 = vpop.f32.mrf.mxu0
    %444 = vmatprep.mubr.f32.mxu0 0.0
    %445 = vmatmul.mubr.f32.gmra.mxu0 %v349
    %v446 = vpop.f32.mrf.mxu0
    %v447 = vadd.f32 0.0, %v446
    %v448 = vpop.f32.mrf.mxu0
    %449 = vmatprep.mubr.f32.mxu0 0.0
    %450 = vmatmul.mubr.f32.gmra.mxu0 %v352
    %v451 = vpop.f32.mrf.mxu0
    %v452 = vadd.f32 0.0, %v451
    %v453 = vpop.f32.mrf.mxu0
    %454 = vmatprep.mubr.f32.mxu0 0.0
    %455 = vmatmul.mubr.f32.gmra.mxu0 %v355
    %v456 = vpop.f32.mrf.mxu0
    %v457 = vadd.f32 0.0, %v456
    %v458 = vpop.f32.mrf.mxu0
    %459 = vmatprep.mubr.f32.mxu0 0.0
    %460 = vmatmul.mubr.f32.gmra.mxu0 %v358
    %v461 = vpop.f32.mrf.mxu0
    %v462 = vadd.f32 0.0, %v461
    %v463 = vpop.f32.mrf.mxu0
    %464 = vdwg.mxu0
    %v465 = vsel %vm22, %v427, -inf
    %v466 = vsel %vm22, %v432, -inf
    %v467 = vsel %vm22, %v437, -inf
    %v468 = vsel %vm22, %v442, -inf
    %v469 = vsel %vm22, %v447, -inf
    %v470 = vmax.f32 %v465, %v469
    %v471 = vsel %vm22, %v452, -inf
    %v472 = vmax.f32 %v466, %v471
    %v473 = vsel %vm22, %v457, -inf
    %v474 = vmax.f32 %v467, %v473
    %v475 = vsel %vm22, %v462, -inf
    %v476 = vmax.f32 %v468, %v475
    %v477 = vmax.f32 %v470, %v472
    %v478 = vmax.f32 %v474, %v476
    %v479 = vmax.f32 %v477, %v478
    %v480 = vrot.slane %v479, 4
    %v481 = vmax.f32 %v479, %v480
    %v482 = vrot.slane %v481, 2
    %v483 = vmax.f32 %v481, %v482
    %v484 = vrot.slane %v483, 1
    %v485 = vmax.f32 %v483, %v484
    %v486 = vsub.f32 %v427, %v485
    %v487 = vsub.f32 %v432, %v485
    %v488 = vsub.f32 %v437, %v485
    %v489 = vsub.f32 %v442, %v485
    %v490 = vsub.f32 %v447, %v485
    %v491 = vsub.f32 %v452, %v485
    %v492 = vsub.f32 %v457, %v485
    %v493 = vsub.f32 %v462, %v485
    %v494 = vmul.f32 %v486, 1.442695
    %v495 = vpow.pop %v494
    %v496 = vmul.f32 %v487, 1.442695
    %v497 = vpow.pop %v496
    %v498 = vmul.f32 %v488, 1.442695
    %v499 = vpow.pop %v498
    %v500 = vmul.f32 %v489, 1.442695
    %v501 = vpow.pop %v500
    %v502 = vmul.f32 %v490, 1.442695
    %v503 = vpow.pop %v502
    %v504 = vmul.f32 %v491, 1.442695
    %v505 = vpow.pop %v504
    %v506 = vmul.f32 %v492, 1.442695
    %v507 = vpow.pop %v506
    %v508 = vmul.f32 %v493, 1.442695
    %v509 = vpow.pop %v508
    %v510 = vsel %vm22, %v495, 0.0
    %v511 = vsel %vm22, %v497, 0.0
    %v512 = vadd.f32 %v510, %v511
    %v513 = vsel %vm22, %v499, 0.0
    %v514 = vadd.f32 %v512, %v513
    %v515 = vsel %vm22, %v501, 0.0
    %v516 = vadd.f32 %v514, %v515
    %v517 = vsel %vm22, %v503, 0.0
    %v518 = vadd.f32 %v516, %v517
    %v519 = vsel %vm22, %v505, 0.0
    %v520 = vadd.f32 %v518, %v519
    %v521 = vsel %vm22, %v507, 0.0
    %v522 = vadd.f32 %v520, %v521
    %v523 = vsel %vm22, %v509, 0.0
    %v524 = vadd.f32 %v522, %v523
    %v525 = vrot.slane %v524, 4
    %v526 = vadd.f32 %v524, %v525
    %v527 = vrot.slane %v526, 2
    %v528 = vadd.f32 %v526, %v527
    %v529 = vrot.slane %v528, 1
    %v530 = vadd.f32 %v528, %v529
    %v532 = vsel %vm22, %v285, 0
    %534 = vmatprep.subr.mxu0 0.0
    %535 = vmatpush1.msra.mxu0 0.0
    %536 = vmatprep.subr.mxu0 0.0
    %537 = vmatpush1.msra.mxu0 0.0
    %538 = vmatprep.subr.mxu0 0.0
    %539 = vmatpush1.msra.mxu0 0.0
    %540 = vmatprep.subr.mxu0 0.0
    %541 = vmatpush1.msra.mxu0 0.0
    %542 = vmatprep.subr.mxu0 0.0
    %543 = vmatpush1.msra.mxu0 0.0
    %544 = vmatprep.subr.mxu0 0.0
    %545 = vmatpush1.msra.mxu0 0.0
    %546 = vmatprep.subr.mxu0 0.0
    %547 = vmatpush1.msra.mxu0 0.0
    %548 = vmatprep.subr.mxu0 0.0
    %549 = vmatpush1.msra.mxu0 0.0
    %550 = vmatprep.subr.mxu0 0.0
    %551 = vmatpush1.msra.mxu0 %v509
    %552 = vmatprep.subr.mxu0 0.0
    %553 = vmatpush1.msra.mxu0 %v507
    %554 = vmatprep.subr.mxu0 0.0
    %555 = vmatpush1.msra.mxu0 %v505
    %556 = vmatprep.subr.mxu0 0.0
    %557 = vmatpush1.msra.mxu0 %v503
    %558 = vmatprep.subr.mxu0 0.0
    %559 = vmatpush1.msra.mxu0 %v501
    %560 = vmatprep.subr.mxu0 0.0
    %561 = vmatpush1.msra.mxu0 %v499
    %562 = vmatprep.subr.mxu0 0.0
    %563 = vmatpush1.msra.mxu0 %v497
    %564 = vmatprep.subr.mxu0 0.0
    %565 = vmatpush1.msra.mxu0 %v495
    %566 = vmatprep.subr.mxu0 0.0
    %567 = vmatpush2.msra.mxu0 0.0
    %568 = vmatprep.subr.mxu0 0.0
    %569 = vmatpush2.msra.mxu0 0.0
    %570 = vmatprep.subr.mxu0 0.0
    %571 = vmatpush2.msra.mxu0 0.0
    %572 = vmatprep.subr.mxu0 0.0
    %573 = vmatpush2.msra.mxu0 0.0
    %574 = vmatprep.subr.mxu0 0.0
    %575 = vmatpush2.msra.mxu0 0.0
    %576 = vmatprep.subr.mxu0 0.0
    %577 = vmatpush2.msra.mxu0 0.0
    %578 = vmatprep.subr.mxu0 0.0
    %579 = vmatpush2.msra.mxu0 0.0
    %580 = vmatprep.subr.mxu0 0.0
    %581 = vmatpush2.msra.mxu0 0.0
    %582 = vmatprep.subr.mxu0 0.0
    %583 = vmatpush2.msra.mxu0 0.0
    %584 = vmatprep.subr.mxu0 0.0
    %585 = vmatpush2.msra.mxu0 0.0
    %586 = vmatprep.subr.mxu0 0.0
    %587 = vmatpush2.msra.mxu0 0.0
    %588 = vmatprep.subr.mxu0 0.0
    %589 = vmatpush2.msra.mxu0 0.0
    %590 = vmatprep.subr.mxu0 0.0
    %591 = vmatpush2.msra.mxu0 0.0
    %592 = vmatprep.subr.mxu0 0.0
    %593 = vmatpush2.msra.mxu0 0.0
    %594 = vmatprep.subr.mxu0 0.0
    %595 = vmatpush2.msra.mxu0 0.0
    %596 = vmatprep.subr.mxu0 0.0
    %597 = vmatpush2.msra.mxu0 0.0
    %598 = vmatprep.mubr.f32.mxu0 0.0
    %599 = vmatmul.mubr.f32.gmra.mxu0 %v532
    %v600 = vpop.f32.mrf.mxu0
    %v601 = vadd.f32 0.0, %v600
    %v602 = vpop.f32.mrf.mxu0
    %603 = vdwg.mxu0
    %v604 = vrcp.pop %v530
    %v605 = vmul.f32 %v601, %v604
    %606 = vst.msk [vmem:[#allocation3] sm:$0xff] %vm22, %v605
    %607 = vxpose.xlu0.b32.start [1/16] %v270, 128
    %608 = vxpose.xlu0.b32.cont [2/16] 0.0, 128
    %609 = vxpose.xlu0.b32.cont [3/16] 0.0, 128
    %610 = vxpose.xlu0.b32.cont [4/16] 0.0, 128
    %611 = vxpose.xlu0.b32.cont [5/16] 0.0, 128
    %612 = vxpose.xlu0.b32.cont [6/16] 0.0, 128
    %613 = vxpose.xlu0.b32.cont [7/16] 0.0, 128
    %614 = vxpose.xlu0.b32.cont [8/16] 0.0, 128
    %615 = vxpose.xlu0.b32.cont [9/16] 0.0, 128
    %616 = vxpose.xlu0.b32.cont [10/16] 0.0, 128
    %617 = vxpose.xlu0.b32.cont [11/16] 0.0, 128
    %618 = vxpose.xlu0.b32.cont [12/16] 0.0, 128
    %619 = vxpose.xlu0.b32.cont [13/16] 0.0, 128
    %620 = vxpose.xlu0.b32.cont [14/16] 0.0, 128
    %621 = vxpose.xlu0.b32.cont [15/16] 0.0, 128
    %622 = vxpose.xlu0.b32.end [16/16] 0.0, 128
    %v623 = vpop.trf.xlu0
    %v624 = vpop.trf.xlu0
    %v625 = vpop.trf.xlu0
    %v626 = vpop.trf.xlu0
    %v627 = vpop.trf.xlu0
    %v628 = vpop.trf.xlu0
    %v629 = vpop.trf.xlu0
    %v630 = vpop.trf.xlu0
    %v631 = vpop.trf.xlu0
    %v632 = vpop.trf.xlu0
    %v633 = vpop.trf.xlu0
    %v634 = vpop.trf.xlu0
    %v635 = vpop.trf.xlu0
    %v636 = vpop.trf.xlu0
    %v637 = vpop.trf.xlu0
    %v638 = vpop.trf.xlu0
    %v640 = vsel %vm335, %v623, 0
    %v643 = vsel %vm335, %v624, 0
    %v646 = vsel %vm335, %v625, 0
    %v649 = vsel %vm335, %v626, 0
    %v652 = vsel %vm335, %v627, 0
    %v655 = vsel %vm335, %v628, 0
    %v658 = vsel %vm335, %v629, 0
    %v661 = vsel %vm335, %v630, 0
    %663 = vmatprep.subr.mxu0 0.0
    %664 = vmatpush1.msra.mxu0 0.0
    %665 = vmatprep.subr.mxu0 0.0
    %666 = vmatpush1.msra.mxu0 0.0
    %667 = vmatprep.subr.mxu0 0.0
    %668 = vmatpush1.msra.mxu0 0.0
    %669 = vmatprep.subr.mxu0 0.0
    %670 = vmatpush1.msra.mxu0 0.0
    %671 = vmatprep.subr.mxu0 0.0
    %672 = vmatpush1.msra.mxu0 0.0
    %673 = vmatprep.subr.mxu0 0.0
    %674 = vmatpush1.msra.mxu0 0.0
    %675 = vmatprep.subr.mxu0 0.0
    %676 = vmatpush1.msra.mxu0 0.0
    %677 = vmatprep.subr.mxu0 0.0
    %678 = vmatpush1.msra.mxu0 0.0
    %679 = vmatprep.subr.mxu0 0.0
    %680 = vmatpush1.msra.mxu0 0.0
    %681 = vmatprep.subr.mxu0 0.0
    %682 = vmatpush1.msra.mxu0 0.0
    %683 = vmatprep.subr.mxu0 0.0
    %684 = vmatpush1.msra.mxu0 0.0
    %685 = vmatprep.subr.mxu0 0.0
    %686 = vmatpush1.msra.mxu0 0.0
    %687 = vmatprep.subr.mxu0 0.0
    %688 = vmatpush1.msra.mxu0 0.0
    %689 = vmatprep.subr.mxu0 0.0
    %690 = vmatpush1.msra.mxu0 0.0
    %691 = vmatprep.subr.mxu0 0.0
    %692 = vmatpush1.msra.mxu0 0.0
    %693 = vmatprep.subr.mxu0 0.0
    %694 = vmatpush1.msra.mxu0 %v250
    %695 = vmatprep.subr.mxu0 0.0
    %696 = vmatpush2.msra.mxu0 0.0
    %697 = vmatprep.subr.mxu0 0.0
    %698 = vmatpush2.msra.mxu0 0.0
    %699 = vmatprep.subr.mxu0 0.0
    %700 = vmatpush2.msra.mxu0 0.0
    %701 = vmatprep.subr.mxu0 0.0
    %702 = vmatpush2.msra.mxu0 0.0
    %703 = vmatprep.subr.mxu0 0.0
    %704 = vmatpush2.msra.mxu0 0.0
    %705 = vmatprep.subr.mxu0 0.0
    %706 = vmatpush2.msra.mxu0 0.0
    %707 = vmatprep.subr.mxu0 0.0
    %708 = vmatpush2.msra.mxu0 0.0
    %709 = vmatprep.subr.mxu0 0.0
    %710 = vmatpush2.msra.mxu0 0.0
    %711 = vmatprep.subr.mxu0 0.0
    %712 = vmatpush2.msra.mxu0 0.0
    %713 = vmatprep.subr.mxu0 0.0
    %714 = vmatpush2.msra.mxu0 0.0
    %715 = vmatprep.subr.mxu0 0.0
    %716 = vmatpush2.msra.mxu0 0.0
    %717 = vmatprep.subr.mxu0 0.0
    %718 = vmatpush2.msra.mxu0 0.0
    %719 = vmatprep.subr.mxu0 0.0
    %720 = vmatpush2.msra.mxu0 0.0
    %721 = vmatprep.subr.mxu0 0.0
    %722 = vmatpush2.msra.mxu0 0.0
    %723 = vmatprep.subr.mxu0 0.0
    %724 = vmatpush2.msra.mxu0 0.0
    %725 = vmatprep.subr.mxu0 0.0
    %726 = vmatpush2.msra.mxu0 0.0
    %727 = vmatprep.mubr.f32.mxu0 0.0
    %728 = vmatmul.mubr.f32.gmra.mxu0 %v640
    %v729 = vpop.f32.mrf.mxu0
    %v730 = vadd.f32 0.0, %v729
    %v731 = vpop.f32.mrf.mxu0
    %732 = vmatprep.mubr.f32.mxu0 0.0
    %733 = vmatmul.mubr.f32.gmra.mxu0 %v643
    %v734 = vpop.f32.mrf.mxu0
    %v735 = vadd.f32 0.0, %v734
    %v736 = vpop.f32.mrf.mxu0
    %737 = vmatprep.mubr.f32.mxu0 0.0
    %738 = vmatmul.mubr.f32.gmra.mxu0 %v646
    %v739 = vpop.f32.mrf.mxu0
    %v740 = vadd.f32 0.0, %v739
    %v741 = vpop.f32.mrf.mxu0
    %742 = vmatprep.mubr.f32.mxu0 0.0
    %743 = vmatmul.mubr.f32.gmra.mxu0 %v649
    %v744 = vpop.f32.mrf.mxu0
    %v745 = vadd.f32 0.0, %v744
    %v746 = vpop.f32.mrf.mxu0
    %747 = vmatprep.mubr.f32.mxu0 0.0
    %748 = vmatmul.mubr.f32.gmra.mxu0 %v652
    %v749 = vpop.f32.mrf.mxu0
    %v750 = vadd.f32 0.0, %v749
    %v751 = vpop.f32.mrf.mxu0
    %752 = vmatprep.mubr.f32.mxu0 0.0
    %753 = vmatmul.mubr.f32.gmra.mxu0 %v655
    %v754 = vpop.f32.mrf.mxu0
    %v755 = vadd.f32 0.0, %v754
    %v756 = vpop.f32.mrf.mxu0
    %757 = vmatprep.mubr.f32.mxu0 0.0
    %758 = vmatmul.mubr.f32.gmra.mxu0 %v658
    %v759 = vpop.f32.mrf.mxu0
    %v760 = vadd.f32 0.0, %v759
    %v761 = vpop.f32.mrf.mxu0
    %762 = vmatprep.mubr.f32.mxu0 0.0
    %763 = vmatmul.mubr.f32.gmra.mxu0 %v661
    %v764 = vpop.f32.mrf.mxu0
    %v765 = vadd.f32 0.0, %v764
    %v766 = vpop.f32.mrf.mxu0
    %767 = vdwg.mxu0
    %v768 = vsel %vm22, %v730, -inf
    %v769 = vsel %vm22, %v735, -inf
    %v770 = vsel %vm22, %v740, -inf
    %v771 = vsel %vm22, %v745, -inf
    %v772 = vsel %vm22, %v750, -inf
    %v773 = vmax.f32 %v768, %v772
    %v774 = vsel %vm22, %v755, -inf
    %v775 = vmax.f32 %v769, %v774
    %v776 = vsel %vm22, %v760, -inf
    %v777 = vmax.f32 %v770, %v776
    %v778 = vsel %vm22, %v765, -inf
    %v779 = vmax.f32 %v771, %v778
    %v780 = vmax.f32 %v773, %v775
    %v781 = vmax.f32 %v777, %v779
    %v782 = vmax.f32 %v780, %v781
    %v783 = vrot.slane %v782, 4
    %v784 = vmax.f32 %v782, %v783
    %v785 = vrot.slane %v784, 2
    %v786 = vmax.f32 %v784, %v785
    %v787 = vrot.slane %v786, 1
    %v788 = vmax.f32 %v786, %v787
    %v789 = vsub.f32 %v730, %v788
    %v790 = vsub.f32 %v735, %v788
    %v791 = vsub.f32 %v740, %v788
    %v792 = vsub.f32 %v745, %v788
    %v793 = vsub.f32 %v750, %v788
    %v794 = vsub.f32 %v755, %v788
    %v795 = vsub.f32 %v760, %v788
    %v796 = vsub.f32 %v765, %v788
    %v797 = vmul.f32 %v789, 1.442695
    %v798 = vpow.pop %v797
    %v799 = vmul.f32 %v790, 1.442695
    %v800 = vpow.pop %v799
    %v801 = vmul.f32 %v791, 1.442695
    %v802 = vpow.pop %v801
    %v803 = vmul.f32 %v792, 1.442695
    %v804 = vpow.pop %v803
    %v805 = vmul.f32 %v793, 1.442695
    %v806 = vpow.pop %v805
    %v807 = vmul.f32 %v794, 1.442695
    %v808 = vpow.pop %v807
    %v809 = vmul.f32 %v795, 1.442695
    %v810 = vpow.pop %v809
    %v811 = vmul.f32 %v796, 1.442695
    %v812 = vpow.pop %v811
    %v813 = vsel %vm22, %v798, 0.0
    %v814 = vsel %vm22, %v800, 0.0
    %v815 = vadd.f32 %v813, %v814
    %v816 = vsel %vm22, %v802, 0.0
    %v817 = vadd.f32 %v815, %v816
    %v818 = vsel %vm22, %v804, 0.0
    %v819 = vadd.f32 %v817, %v818
    %v820 = vsel %vm22, %v806, 0.0
    %v821 = vadd.f32 %v819, %v820
    %v822 = vsel %vm22, %v808, 0.0
    %v823 = vadd.f32 %v821, %v822
    %v824 = vsel %vm22, %v810, 0.0
    %v825 = vadd.f32 %v823, %v824
    %v826 = vsel %vm22, %v812, 0.0
    %v827 = vadd.f32 %v825, %v826
    %v828 = vrot.slane %v827, 4
    %v829 = vadd.f32 %v827, %v828
    %v830 = vrot.slane %v829, 2
    %v831 = vadd.f32 %v829, %v830
    %v832 = vrot.slane %v831, 1
    %v833 = vadd.f32 %v831, %v832
    %v835 = vsel %vm22, %v290, 0
    %837 = vmatprep.subr.mxu0 0.0
    %838 = vmatpush1.msra.mxu0 0.0
    %839 = vmatprep.subr.mxu0 0.0
    %840 = vmatpush1.msra.mxu0 0.0
    %841 = vmatprep.subr.mxu0 0.0
    %842 = vmatpush1.msra.mxu0 0.0
    %843 = vmatprep.subr.mxu0 0.0
    %844 = vmatpush1.msra.mxu0 0.0
    %845 = vmatprep.subr.mxu0 0.0
    %846 = vmatpush1.msra.mxu0 0.0
    %847 = vmatprep.subr.mxu0 0.0
    %848 = vmatpush1.msra.mxu0 0.0
    %849 = vmatprep.subr.mxu0 0.0
    %850 = vmatpush1.msra.mxu0 0.0
    %851 = vmatprep.subr.mxu0 0.0
    %852 = vmatpush1.msra.mxu0 0.0
    %853 = vmatprep.subr.mxu0 0.0
    %854 = vmatpush1.msra.mxu0 %v812
    %855 = vmatprep.subr.mxu0 0.0
    %856 = vmatpush1.msra.mxu0 %v810
    %857 = vmatprep.subr.mxu0 0.0
    %858 = vmatpush1.msra.mxu0 %v808
    %859 = vmatprep.subr.mxu0 0.0
    %860 = vmatpush1.msra.mxu0 %v806
    %861 = vmatprep.subr.mxu0 0.0
    %862 = vmatpush1.msra.mxu0 %v804
    %863 = vmatprep.subr.mxu0 0.0
    %864 = vmatpush1.msra.mxu0 %v802
    %865 = vmatprep.subr.mxu0 0.0
    %866 = vmatpush1.msra.mxu0 %v800
    %867 = vmatprep.subr.mxu0 0.0
    %868 = vmatpush1.msra.mxu0 %v798
    %869 = vmatprep.subr.mxu0 0.0
    %870 = vmatpush2.msra.mxu0 0.0
    %871 = vmatprep.subr.mxu0 0.0
    %872 = vmatpush2.msra.mxu0 0.0
    %873 = vmatprep.subr.mxu0 0.0
    %874 = vmatpush2.msra.mxu0 0.0
    %875 = vmatprep.subr.mxu0 0.0
    %876 = vmatpush2.msra.mxu0 0.0
    %877 = vmatprep.subr.mxu0 0.0
    %878 = vmatpush2.msra.mxu0 0.0
    %879 = vmatprep.subr.mxu0 0.0
    %880 = vmatpush2.msra.mxu0 0.0
    %881 = vmatprep.subr.mxu0 0.0
    %882 = vmatpush2.msra.mxu0 0.0
    %883 = vmatprep.subr.mxu0 0.0
    %884 = vmatpush2.msra.mxu0 0.0
    %885 = vmatprep.subr.mxu0 0.0
    %886 = vmatpush2.msra.mxu0 0.0
    %887 = vmatprep.subr.mxu0 0.0
    %888 = vmatpush2.msra.mxu0 0.0
    %889 = vmatprep.subr.mxu0 0.0
    %890 = vmatpush2.msra.mxu0 0.0
    %891 = vmatprep.subr.mxu0 0.0
    %892 = vmatpush2.msra.mxu0 0.0
    %893 = vmatprep.subr.mxu0 0.0
    %894 = vmatpush2.msra.mxu0 0.0
    %895 = vmatprep.subr.mxu0 0.0
    %896 = vmatpush2.msra.mxu0 0.0
    %897 = vmatprep.subr.mxu0 0.0
    %898 = vmatpush2.msra.mxu0 0.0
    %899 = vmatprep.subr.mxu0 0.0
    %900 = vmatpush2.msra.mxu0 0.0
    %901 = vmatprep.mubr.f32.mxu0 0.0
    %902 = vmatmul.mubr.f32.gmra.mxu0 %v835
    %v903 = vpop.f32.mrf.mxu0
    %v904 = vadd.f32 0.0, %v903
    %v905 = vpop.f32.mrf.mxu0
    %906 = vdwg.mxu0
    %v907 = vrcp.pop %v833
    %v908 = vmul.f32 %v904, %v907
    %909 = vst.msk [vmem:[#allocation3 + $0x8] sm:$0xff] %vm22, %v908
    %910 = vxpose.xlu0.b32.start [1/16] %v275, 128
    %911 = vxpose.xlu0.b32.cont [2/16] 0.0, 128
    %912 = vxpose.xlu0.b32.cont [3/16] 0.0, 128
    %913 = vxpose.xlu0.b32.cont [4/16] 0.0, 128
    %914 = vxpose.xlu0.b32.cont [5/16] 0.0, 128
    %915 = vxpose.xlu0.b32.cont [6/16] 0.0, 128
    %916 = vxpose.xlu0.b32.cont [7/16] 0.0, 128
    %917 = vxpose.xlu0.b32.cont [8/16] 0.0, 128
    %918 = vxpose.xlu0.b32.cont [9/16] 0.0, 128
    %919 = vxpose.xlu0.b32.cont [10/16] 0.0, 128
    %920 = vxpose.xlu0.b32.cont [11/16] 0.0, 128
    %921 = vxpose.xlu0.b32.cont [12/16] 0.0, 128
    %922 = vxpose.xlu0.b32.cont [13/16] 0.0, 128
    %923 = vxpose.xlu0.b32.cont [14/16] 0.0, 128
    %924 = vxpose.xlu0.b32.cont [15/16] 0.0, 128
    %925 = vxpose.xlu0.b32.end [16/16] 0.0, 128
    %v926 = vpop.trf.xlu0
    %v927 = vpop.trf.xlu0
    %v928 = vpop.trf.xlu0
    %v929 = vpop.trf.xlu0
    %v930 = vpop.trf.xlu0
    %v931 = vpop.trf.xlu0
    %v932 = vpop.trf.xlu0
    %v933 = vpop.trf.xlu0
    %v934 = vpop.trf.xlu0
    %v935 = vpop.trf.xlu0
    %v936 = vpop.trf.xlu0
    %v937 = vpop.trf.xlu0
    %v938 = vpop.trf.xlu0
    %v939 = vpop.trf.xlu0
    %v940 = vpop.trf.xlu0
    %v941 = vpop.trf.xlu0
    %v943 = vsel %vm335, %v926, 0
    %v946 = vsel %vm335, %v927, 0
    %v949 = vsel %vm335, %v928, 0
    %v952 = vsel %vm335, %v929, 0
    %v955 = vsel %vm335, %v930, 0
    %v958 = vsel %vm335, %v931, 0
    %v961 = vsel %vm335, %v932, 0
    %v964 = vsel %vm335, %v933, 0
    %966 = vmatprep.subr.mxu0 0.0
    %967 = vmatpush1.msra.mxu0 0.0
    %968 = vmatprep.subr.mxu0 0.0
    %969 = vmatpush1.msra.mxu0 0.0
    %970 = vmatprep.subr.mxu0 0.0
    %971 = vmatpush1.msra.mxu0 0.0
    %972 = vmatprep.subr.mxu0 0.0
    %973 = vmatpush1.msra.mxu0 0.0
    %974 = vmatprep.subr.mxu0 0.0
    %975 = vmatpush1.msra.mxu0 0.0
    %976 = vmatprep.subr.mxu0 0.0
    %977 = vmatpush1.msra.mxu0 0.0
    %978 = vmatprep.subr.mxu0 0.0
    %979 = vmatpush1.msra.mxu0 0.0
    %980 = vmatprep.subr.mxu0 0.0
    %981 = vmatpush1.msra.mxu0 0.0
    %982 = vmatprep.subr.mxu0 0.0
    %983 = vmatpush1.msra.mxu0 0.0
    %984 = vmatprep.subr.mxu0 0.0
    %985 = vmatpush1.msra.mxu0 0.0
    %986 = vmatprep.subr.mxu0 0.0
    %987 = vmatpush1.msra.mxu0 0.0
    %988 = vmatprep.subr.mxu0 0.0
    %989 = vmatpush1.msra.mxu0 0.0
    %990 = vmatprep.subr.mxu0 0.0
    %991 = vmatpush1.msra.mxu0 0.0
    %992 = vmatprep.subr.mxu0 0.0
    %993 = vmatpush1.msra.mxu0 0.0
    %994 = vmatprep.subr.mxu0 0.0
    %995 = vmatpush1.msra.mxu0 0.0
    %996 = vmatprep.subr.mxu0 0.0
    %997 = vmatpush1.msra.mxu0 %v255
    %998 = vmatprep.subr.mxu0 0.0
    %999 = vmatpush2.msra.mxu0 0.0
    %1000 = vmatprep.subr.mxu0 0.0
    %1001 = vmatpush2.msra.mxu0 0.0
    %1002 = vmatprep.subr.mxu0 0.0
    %1003 = vmatpush2.msra.mxu0 0.0
    %1004 = vmatprep.subr.mxu0 0.0
    %1005 = vmatpush2.msra.mxu0 0.0
    %1006 = vmatprep.subr.mxu0 0.0
    %1007 = vmatpush2.msra.mxu0 0.0
    %1008 = vmatprep.subr.mxu0 0.0
    %1009 = vmatpush2.msra.mxu0 0.0
    %1010 = vmatprep.subr.mxu0 0.0
    %1011 = vmatpush2.msra.mxu0 0.0
    %1012 = vmatprep.subr.mxu0 0.0
    %1013 = vmatpush2.msra.mxu0 0.0
    %1014 = vmatprep.subr.mxu0 0.0
    %1015 = vmatpush2.msra.mxu0 0.0
    %1016 = vmatprep.subr.mxu0 0.0
    %1017 = vmatpush2.msra.mxu0 0.0
    %1018 = vmatprep.subr.mxu0 0.0
    %1019 = vmatpush2.msra.mxu0 0.0
    %1020 = vmatprep.subr.mxu0 0.0
    %1021 = vmatpush2.msra.mxu0 0.0
    %1022 = vmatprep.subr.mxu0 0.0
    %1023 = vmatpush2.msra.mxu0 0.0
    %1024 = vmatprep.subr.mxu0 0.0
    %1025 = vmatpush2.msra.mxu0 0.0
    %1026 = vmatprep.subr.mxu0 0.0
    %1027 = vmatpush2.msra.mxu0 0.0
    %1028 = vmatprep.subr.mxu0 0.0
    %1029 = vmatpush2.msra.mxu0 0.0
    %1030 = vmatprep.mubr.f32.mxu0 0.0
    %1031 = vmatmul.mubr.f32.gmra.mxu0 %v943
    %v1032 = vpop.f32.mrf.mxu0
    %v1033 = vadd.f32 0.0, %v1032
    %v1034 = vpop.f32.mrf.mxu0
    %1035 = vmatprep.mubr.f32.mxu0 0.0
    %1036 = vmatmul.mubr.f32.gmra.mxu0 %v946
    %v1037 = vpop.f32.mrf.mxu0
    %v1038 = vadd.f32 0.0, %v1037
    %v1039 = vpop.f32.mrf.mxu0
    %1040 = vmatprep.mubr.f32.mxu0 0.0
    %1041 = vmatmul.mubr.f32.gmra.mxu0 %v949
    %v1042 = vpop.f32.mrf.mxu0
    %v1043 = vadd.f32 0.0, %v1042
    %v1044 = vpop.f32.mrf.mxu0
    %1045 = vmatprep.mubr.f32.mxu0 0.0
    %1046 = vmatmul.mubr.f32.gmra.mxu0 %v952
    %v1047 = vpop.f32.mrf.mxu0
    %v1048 = vadd.f32 0.0, %v1047
    %v1049 = vpop.f32.mrf.mxu0
    %1050 = vmatprep.mubr.f32.mxu0 0.0
    %1051 = vmatmul.mubr.f32.gmra.mxu0 %v955
    %v1052 = vpop.f32.mrf.mxu0
    %v1053 = vadd.f32 0.0, %v1052
    %v1054 = vpop.f32.mrf.mxu0
    %1055 = vmatprep.mubr.f32.mxu0 0.0
    %1056 = vmatmul.mubr.f32.gmra.mxu0 %v958
    %v1057 = vpop.f32.mrf.mxu0
    %v1058 = vadd.f32 0.0, %v1057
    %v1059 = vpop.f32.mrf.mxu0
    %1060 = vmatprep.mubr.f32.mxu0 0.0
    %1061 = vmatmul.mubr.f32.gmra.mxu0 %v961
    %v1062 = vpop.f32.mrf.mxu0
    %v1063 = vadd.f32 0.0, %v1062
    %v1064 = vpop.f32.mrf.mxu0
    %1065 = vmatprep.mubr.f32.mxu0 0.0
    %1066 = vmatmul.mubr.f32.gmra.mxu0 %v964
    %v1067 = vpop.f32.mrf.mxu0
    %v1068 = vadd.f32 0.0, %v1067
    %v1069 = vpop.f32.mrf.mxu0
    %1070 = vdwg.mxu0
    %v1071 = vsel %vm22, %v1033, -inf
    %v1072 = vsel %vm22, %v1038, -inf
    %v1073 = vsel %vm22, %v1043, -inf
    %v1074 = vsel %vm22, %v1048, -inf
    %v1075 = vsel %vm22, %v1053, -inf
    %v1076 = vmax.f32 %v1071, %v1075
    %v1077 = vsel %vm22, %v1058, -inf
    %v1078 = vmax.f32 %v1072, %v1077
    %v1079 = vsel %vm22, %v1063, -inf
    %v1080 = vmax.f32 %v1073, %v1079
    %v1081 = vsel %vm22, %v1068, -inf
    %v1082 = vmax.f32 %v1074, %v1081
    %v1083 = vmax.f32 %v1076, %v1078
    %v1084 = vmax.f32 %v1080, %v1082
    %v1085 = vmax.f32 %v1083, %v1084
    %v1086 = vrot.slane %v1085, 4
    %v1087 = vmax.f32 %v1085, %v1086
    %v1088 = vrot.slane %v1087, 2
    %v1089 = vmax.f32 %v1087, %v1088
    %v1090 = vrot.slane %v1089, 1
    %v1091 = vmax.f32 %v1089, %v1090
    %v1092 = vsub.f32 %v1033, %v1091
    %v1093 = vsub.f32 %v1038, %v1091
    %v1094 = vsub.f32 %v1043, %v1091
    %v1095 = vsub.f32 %v1048, %v1091
    %v1096 = vsub.f32 %v1053, %v1091
    %v1097 = vsub.f32 %v1058, %v1091
    %v1098 = vsub.f32 %v1063, %v1091
    %v1099 = vsub.f32 %v1068, %v1091
    %v1100 = vmul.f32 %v1092, 1.442695
    %v1101 = vpow.pop %v1100
    %v1102 = vmul.f32 %v1093, 1.442695
    %v1103 = vpow.pop %v1102
    %v1104 = vmul.f32 %v1094, 1.442695
    %v1105 = vpow.pop %v1104
    %v1106 = vmul.f32 %v1095, 1.442695
    %v1107 = vpow.pop %v1106
    %v1108 = vmul.f32 %v1096, 1.442695
    %v1109 = vpow.pop %v1108
    %v1110 = vmul.f32 %v1097, 1.442695
    %v1111 = vpow.pop %v1110
    %v1112 = vmul.f32 %v1098, 1.442695
    %v1113 = vpow.pop %v1112
    %v1114 = vmul.f32 %v1099, 1.442695
    %v1115 = vpow.pop %v1114
    %v1116 = vsel %vm22, %v1101, 0.0
    %v1117 = vsel %vm22, %v1103, 0.0
    %v1118 = vadd.f32 %v1116, %v1117
    %v1119 = vsel %vm22, %v1105, 0.0
    %v1120 = vadd.f32 %v1118, %v1119
    %v1121 = vsel %vm22, %v1107, 0.0
    %v1122 = vadd.f32 %v1120, %v1121
    %v1123 = vsel %vm22, %v1109, 0.0
    %v1124 = vadd.f32 %v1122, %v1123
    %v1125 = vsel %vm22, %v1111, 0.0
    %v1126 = vadd.f32 %v1124, %v1125
    %v1127 = vsel %vm22, %v1113, 0.0
    %v1128 = vadd.f32 %v1126, %v1127
    %v1129 = vsel %vm22, %v1115, 0.0
    %v1130 = vadd.f32 %v1128, %v1129
    %v1131 = vrot.slane %v1130, 4
    %v1132 = vadd.f32 %v1130, %v1131
    %v1133 = vrot.slane %v1132, 2
    %v1134 = vadd.f32 %v1132, %v1133
    %v1135 = vrot.slane %v1134, 1
    %v1136 = vadd.f32 %v1134, %v1135
    %v1138 = vsel %vm22, %v295, 0
    %1140 = vmatprep.subr.mxu0 0.0
    %1141 = vmatpush1.msra.mxu0 0.0
    %1142 = vmatprep.subr.mxu0 0.0
    %1143 = vmatpush1.msra.mxu0 0.0
    %1144 = vmatprep.subr.mxu0 0.0
    %1145 = vmatpush1.msra.mxu0 0.0
    %1146 = vmatprep.subr.mxu0 0.0
    %1147 = vmatpush1.msra.mxu0 0.0
    %1148 = vmatprep.subr.mxu0 0.0
    %1149 = vmatpush1.msra.mxu0 0.0
    %1150 = vmatprep.subr.mxu0 0.0
    %1151 = vmatpush1.msra.mxu0 0.0
    %1152 = vmatprep.subr.mxu0 0.0
    %1153 = vmatpush1.msra.mxu0 0.0
    %1154 = vmatprep.subr.mxu0 0.0
    %1155 = vmatpush1.msra.mxu0 0.0
    %1156 = vmatprep.subr.mxu0 0.0
    %1157 = vmatpush1.msra.mxu0 %v1115
    %1158 = vmatprep.subr.mxu0 0.0
    %1159 = vmatpush1.msra.mxu0 %v1113
    %1160 = vmatprep.subr.mxu0 0.0
    %1161 = vmatpush1.msra.mxu0 %v1111
    %1162 = vmatprep.subr.mxu0 0.0
    %1163 = vmatpush1.msra.mxu0 %v1109
    %1164 = vmatprep.subr.mxu0 0.0
    %1165 = vmatpush1.msra.mxu0 %v1107
    %1166 = vmatprep.subr.mxu0 0.0
    %1167 = vmatpush1.msra.mxu0 %v1105
    %1168 = vmatprep.subr.mxu0 0.0
    %1169 = vmatpush1.msra.mxu0 %v1103
    %1170 = vmatprep.subr.mxu0 0.0
    %1171 = vmatpush1.msra.mxu0 %v1101
    %1172 = vmatprep.subr.mxu0 0.0
    %1173 = vmatpush2.msra.mxu0 0.0
    %1174 = vmatprep.subr.mxu0 0.0
    %1175 = vmatpush2.msra.mxu0 0.0
    %1176 = vmatprep.subr.mxu0 0.0
    %1177 = vmatpush2.msra.mxu0 0.0
    %1178 = vmatprep.subr.mxu0 0.0
    %1179 = vmatpush2.msra.mxu0 0.0
    %1180 = vmatprep.subr.mxu0 0.0
    %1181 = vmatpush2.msra.mxu0 0.0
    %1182 = vmatprep.subr.mxu0 0.0
    %1183 = vmatpush2.msra.mxu0 0.0
    %1184 = vmatprep.subr.mxu0 0.0
    %1185 = vmatpush2.msra.mxu0 0.0
    %1186 = vmatprep.subr.mxu0 0.0
    %1187 = vmatpush2.msra.mxu0 0.0
    %1188 = vmatprep.subr.mxu0 0.0
    %1189 = vmatpush2.msra.mxu0 0.0
    %1190 = vmatprep.subr.mxu0 0.0
    %1191 = vmatpush2.msra.mxu0 0.0
    %1192 = vmatprep.subr.mxu0 0.0
    %1193 = vmatpush2.msra.mxu0 0.0
    %1194 = vmatprep.subr.mxu0 0.0
    %1195 = vmatpush2.msra.mxu0 0.0
    %1196 = vmatprep.subr.mxu0 0.0
    %1197 = vmatpush2.msra.mxu0 0.0
    %1198 = vmatprep.subr.mxu0 0.0
    %1199 = vmatpush2.msra.mxu0 0.0
    %1200 = vmatprep.subr.mxu0 0.0
    %1201 = vmatpush2.msra.mxu0 0.0
    %1202 = vmatprep.subr.mxu0 0.0
    %1203 = vmatpush2.msra.mxu0 0.0
    %1204 = vmatprep.mubr.f32.mxu0 0.0
    %1205 = vmatmul.mubr.f32.gmra.mxu0 %v1138
    %v1206 = vpop.f32.mrf.mxu0
    %v1207 = vadd.f32 0.0, %v1206
    %v1208 = vpop.f32.mrf.mxu0
    %1209 = vdwg.mxu0
    %v1210 = vrcp.pop %v1136
    %v1211 = vmul.f32 %v1207, %v1210
    %1212 = vst.msk [vmem:[#allocation3 + $0x10] sm:$0xff] %vm22, %v1211
    %1213 = vxpose.xlu0.b32.start [1/16] %v280, 128
    %1214 = vxpose.xlu0.b32.cont [2/16] 0.0, 128
    %1215 = vxpose.xlu0.b32.cont [3/16] 0.0, 128
    %1216 = vxpose.xlu0.b32.cont [4/16] 0.0, 128
    %1217 = vxpose.xlu0.b32.cont [5/16] 0.0, 128
    %1218 = vxpose.xlu0.b32.cont [6/16] 0.0, 128
    %1219 = vxpose.xlu0.b32.cont [7/16] 0.0, 128
    %1220 = vxpose.xlu0.b32.cont [8/16] 0.0, 128
    %1221 = vxpose.xlu0.b32.cont [9/16] 0.0, 128
    %1222 = vxpose.xlu0.b32.cont [10/16] 0.0, 128
    %1223 = vxpose.xlu0.b32.cont [11/16] 0.0, 128
    %1224 = vxpose.xlu0.b32.cont [12/16] 0.0, 128
    %1225 = vxpose.xlu0.b32.cont [13/16] 0.0, 128
    %1226 = vxpose.xlu0.b32.cont [14/16] 0.0, 128
    %1227 = vxpose.xlu0.b32.cont [15/16] 0.0, 128
    %1228 = vxpose.xlu0.b32.end [16/16] 0.0, 128
    %v1229 = vpop.trf.xlu0
    %v1230 = vpop.trf.xlu0
    %v1231 = vpop.trf.xlu0
    %v1232 = vpop.trf.xlu0
    %v1233 = vpop.trf.xlu0
    %v1234 = vpop.trf.xlu0
    %v1235 = vpop.trf.xlu0
    %v1236 = vpop.trf.xlu0
    %v1237 = vpop.trf.xlu0
    %v1238 = vpop.trf.xlu0
    %v1239 = vpop.trf.xlu0
    %v1240 = vpop.trf.xlu0
    %v1241 = vpop.trf.xlu0
    %v1242 = vpop.trf.xlu0
    %v1243 = vpop.trf.xlu0
    %v1244 = vpop.trf.xlu0
    %v1246 = vsel %vm335, %v1229, 0
    %v1249 = vsel %vm335, %v1230, 0
    %v1252 = vsel %vm335, %v1231, 0
    %v1255 = vsel %vm335, %v1232, 0
    %v1258 = vsel %vm335, %v1233, 0
    %v1261 = vsel %vm335, %v1234, 0
    %v1264 = vsel %vm335, %v1235, 0
    %v1267 = vsel %vm335, %v1236, 0
    %1269 = vmatprep.subr.mxu0 0.0
    %1270 = vmatpush1.msra.mxu0 0.0
    %1271 = vmatprep.subr.mxu0 0.0
    %1272 = vmatpush1.msra.mxu0 0.0
    %1273 = vmatprep.subr.mxu0 0.0
    %1274 = vmatpush1.msra.mxu0 0.0
    %1275 = vmatprep.subr.mxu0 0.0
    %1276 = vmatpush1.msra.mxu0 0.0
    %1277 = vmatprep.subr.mxu0 0.0
    %1278 = vmatpush1.msra.mxu0 0.0
    %1279 = vmatprep.subr.mxu0 0.0
    %1280 = vmatpush1.msra.mxu0 0.0
    %1281 = vmatprep.subr.mxu0 0.0
    %1282 = vmatpush1.msra.mxu0 0.0
    %1283 = vmatprep.subr.mxu0 0.0
    %1284 = vmatpush1.msra.mxu0 0.0
    %1285 = vmatprep.subr.mxu0 0.0
    %1286 = vmatpush1.msra.mxu0 0.0
    %1287 = vmatprep.subr.mxu0 0.0
    %1288 = vmatpush1.msra.mxu0 0.0
    %1289 = vmatprep.subr.mxu0 0.0
    %1290 = vmatpush1.msra.mxu0 0.0
    %1291 = vmatprep.subr.mxu0 0.0
    %1292 = vmatpush1.msra.mxu0 0.0
    %1293 = vmatprep.subr.mxu0 0.0
    %1294 = vmatpush1.msra.mxu0 0.0
    %1295 = vmatprep.subr.mxu0 0.0
    %1296 = vmatpush1.msra.mxu0 0.0
    %1297 = vmatprep.subr.mxu0 0.0
    %1298 = vmatpush1.msra.mxu0 0.0
    %1299 = vmatprep.subr.mxu0 0.0
    %1300 = vmatpush1.msra.mxu0 %v260
    %1301 = vmatprep.subr.mxu0 0.0
    %1302 = vmatpush2.msra.mxu0 0.0
    %1303 = vmatprep.subr.mxu0 0.0
    %1304 = vmatpush2.msra.mxu0 0.0
    %1305 = vmatprep.subr.mxu0 0.0
    %1306 = vmatpush2.msra.mxu0 0.0
    %1307 = vmatprep.subr.mxu0 0.0
    %1308 = vmatpush2.msra.mxu0 0.0
    %1309 = vmatprep.subr.mxu0 0.0
    %1310 = vmatpush2.msra.mxu0 0.0
    %1311 = vmatprep.subr.mxu0 0.0
    %1312 = vmatpush2.msra.mxu0 0.0
    %1313 = vmatprep.subr.mxu0 0.0
    %1314 = vmatpush2.msra.mxu0 0.0
    %1315 = vmatprep.subr.mxu0 0.0
    %1316 = vmatpush2.msra.mxu0 0.0
    %1317 = vmatprep.subr.mxu0 0.0
    %1318 = vmatpush2.msra.mxu0 0.0
    %1319 = vmatprep.subr.mxu0 0.0
    %1320 = vmatpush2.msra.mxu0 0.0
    %1321 = vmatprep.subr.mxu0 0.0
    %1322 = vmatpush2.msra.mxu0 0.0
    %1323 = vmatprep.subr.mxu0 0.0
    %1324 = vmatpush2.msra.mxu0 0.0
    %1325 = vmatprep.subr.mxu0 0.0
    %1326 = vmatpush2.msra.mxu0 0.0
    %1327 = vmatprep.subr.mxu0 0.0
    %1328 = vmatpush2.msra.mxu0 0.0
    %1329 = vmatprep.subr.mxu0 0.0
    %1330 = vmatpush2.msra.mxu0 0.0
    %1331 = vmatprep.subr.mxu0 0.0
    %1332 = vmatpush2.msra.mxu0 0.0
    %1333 = vmatprep.mubr.f32.mxu0 0.0
    %1334 = vmatmul.mubr.f32.gmra.mxu0 %v1246
    %v1335 = vpop.f32.mrf.mxu0
    %v1336 = vadd.f32 0.0, %v1335
    %v1337 = vpop.f32.mrf.mxu0
    %1338 = vmatprep.mubr.f32.mxu0 0.0
    %1339 = vmatmul.mubr.f32.gmra.mxu0 %v1249
    %v1340 = vpop.f32.mrf.mxu0
    %v1341 = vadd.f32 0.0, %v1340
    %v1342 = vpop.f32.mrf.mxu0
    %1343 = vmatprep.mubr.f32.mxu0 0.0
    %1344 = vmatmul.mubr.f32.gmra.mxu0 %v1252
    %v1345 = vpop.f32.mrf.mxu0
    %v1346 = vadd.f32 0.0, %v1345
    %v1347 = vpop.f32.mrf.mxu0
    %1348 = vmatprep.mubr.f32.mxu0 0.0
    %1349 = vmatmul.mubr.f32.gmra.mxu0 %v1255
    %v1350 = vpop.f32.mrf.mxu0
    %v1351 = vadd.f32 0.0, %v1350
    %v1352 = vpop.f32.mrf.mxu0
    %1353 = vmatprep.mubr.f32.mxu0 0.0
    %1354 = vmatmul.mubr.f32.gmra.mxu0 %v1258
    %v1355 = vpop.f32.mrf.mxu0
    %v1356 = vadd.f32 0.0, %v1355
    %v1357 = vpop.f32.mrf.mxu0
    %1358 = vmatprep.mubr.f32.mxu0 0.0
    %1359 = vmatmul.mubr.f32.gmra.mxu0 %v1261
    %v1360 = vpop.f32.mrf.mxu0
    %v1361 = vadd.f32 0.0, %v1360
    %v1362 = vpop.f32.mrf.mxu0
    %1363 = vmatprep.mubr.f32.mxu0 0.0
    %1364 = vmatmul.mubr.f32.gmra.mxu0 %v1264
    %v1365 = vpop.f32.mrf.mxu0
    %v1366 = vadd.f32 0.0, %v1365
    %v1367 = vpop.f32.mrf.mxu0
    %1368 = vmatprep.mubr.f32.mxu0 0.0
    %1369 = vmatmul.mubr.f32.gmra.mxu0 %v1267
    %v1370 = vpop.f32.mrf.mxu0
    %v1371 = vadd.f32 0.0, %v1370
    %v1372 = vpop.f32.mrf.mxu0
    %1373 = vdwg.mxu0
    %v1374 = vsel %vm22, %v1336, -inf
    %v1375 = vsel %vm22, %v1341, -inf
    %v1376 = vsel %vm22, %v1346, -inf
    %v1377 = vsel %vm22, %v1351, -inf
    %v1378 = vsel %vm22, %v1356, -inf
    %v1379 = vmax.f32 %v1374, %v1378
    %v1380 = vsel %vm22, %v1361, -inf
    %v1381 = vmax.f32 %v1375, %v1380
    %v1382 = vsel %vm22, %v1366, -inf
    %v1383 = vmax.f32 %v1376, %v1382
    %v1384 = vsel %vm22, %v1371, -inf
    %v1385 = vmax.f32 %v1377, %v1384
    %v1386 = vmax.f32 %v1379, %v1381
    %v1387 = vmax.f32 %v1383, %v1385
    %v1388 = vmax.f32 %v1386, %v1387
    %v1389 = vrot.slane %v1388, 4
    %v1390 = vmax.f32 %v1388, %v1389
    %v1391 = vrot.slane %v1390, 2
    %v1392 = vmax.f32 %v1390, %v1391
    %v1393 = vrot.slane %v1392, 1
    %v1394 = vmax.f32 %v1392, %v1393
    %v1395 = vsub.f32 %v1336, %v1394
    %v1396 = vsub.f32 %v1341, %v1394
    %v1397 = vsub.f32 %v1346, %v1394
    %v1398 = vsub.f32 %v1351, %v1394
    %v1399 = vsub.f32 %v1356, %v1394
    %v1400 = vsub.f32 %v1361, %v1394
    %v1401 = vsub.f32 %v1366, %v1394
    %v1402 = vsub.f32 %v1371, %v1394
    %v1403 = vmul.f32 %v1395, 1.442695
    %v1404 = vpow.pop %v1403
    %v1405 = vmul.f32 %v1396, 1.442695
    %v1406 = vpow.pop %v1405
    %v1407 = vmul.f32 %v1397, 1.442695
    %v1408 = vpow.pop %v1407
    %v1409 = vmul.f32 %v1398, 1.442695
    %v1410 = vpow.pop %v1409
    %v1411 = vmul.f32 %v1399, 1.442695
    %v1412 = vpow.pop %v1411
    %v1413 = vmul.f32 %v1400, 1.442695
    %v1414 = vpow.pop %v1413
    %v1415 = vmul.f32 %v1401, 1.442695
    %v1416 = vpow.pop %v1415
    %v1417 = vmul.f32 %v1402, 1.442695
    %v1418 = vpow.pop %v1417
    %v1419 = vsel %vm22, %v1404, 0.0
    %v1420 = vsel %vm22, %v1406, 0.0
    %v1421 = vadd.f32 %v1419, %v1420
    %v1422 = vsel %vm22, %v1408, 0.0
    %v1423 = vadd.f32 %v1421, %v1422
    %v1424 = vsel %vm22, %v1410, 0.0
    %v1425 = vadd.f32 %v1423, %v1424
    %v1426 = vsel %vm22, %v1412, 0.0
    %v1427 = vadd.f32 %v1425, %v1426
    %v1428 = vsel %vm22, %v1414, 0.0
    %v1429 = vadd.f32 %v1427, %v1428
    %v1430 = vsel %vm22, %v1416, 0.0
    %v1431 = vadd.f32 %v1429, %v1430
    %v1432 = vsel %vm22, %v1418, 0.0
    %v1433 = vadd.f32 %v1431, %v1432
    %v1434 = vrot.slane %v1433, 4
    %v1435 = vadd.f32 %v1433, %v1434
    %v1436 = vrot.slane %v1435, 2
    %v1437 = vadd.f32 %v1435, %v1436
    %v1438 = vrot.slane %v1437, 1
    %v1439 = vadd.f32 %v1437, %v1438
    %v1441 = vsel %vm22, %v300, 0
    %1443 = vmatprep.subr.mxu0 0.0
    %1444 = vmatpush1.msra.mxu0 0.0
    %1445 = vmatprep.subr.mxu0 0.0
    %1446 = vmatpush1.msra.mxu0 0.0
    %1447 = vmatprep.subr.mxu0 0.0
    %1448 = vmatpush1.msra.mxu0 0.0
    %1449 = vmatprep.subr.mxu0 0.0
    %1450 = vmatpush1.msra.mxu0 0.0
    %1451 = vmatprep.subr.mxu0 0.0
    %1452 = vmatpush1.msra.mxu0 0.0
    %1453 = vmatprep.subr.mxu0 0.0
    %1454 = vmatpush1.msra.mxu0 0.0
    %1455 = vmatprep.subr.mxu0 0.0
    %1456 = vmatpush1.msra.mxu0 0.0
    %1457 = vmatprep.subr.mxu0 0.0
    %1458 = vmatpush1.msra.mxu0 0.0
    %1459 = vmatprep.subr.mxu0 0.0
    %1460 = vmatpush1.msra.mxu0 %v1418
    %1461 = vmatprep.subr.mxu0 0.0
    %1462 = vmatpush1.msra.mxu0 %v1416
    %1463 = vmatprep.subr.mxu0 0.0
    %1464 = vmatpush1.msra.mxu0 %v1414
    %1465 = vmatprep.subr.mxu0 0.0
    %1466 = vmatpush1.msra.mxu0 %v1412
    %1467 = vmatprep.subr.mxu0 0.0
    %1468 = vmatpush1.msra.mxu0 %v1410
    %1469 = vmatprep.subr.mxu0 0.0
    %1470 = vmatpush1.msra.mxu0 %v1408
    %1471 = vmatprep.subr.mxu0 0.0
    %1472 = vmatpush1.msra.mxu0 %v1406
    %1473 = vmatprep.subr.mxu0 0.0
    %1474 = vmatpush1.msra.mxu0 %v1404
    %1475 = vmatprep.subr.mxu0 0.0
    %1476 = vmatpush2.msra.mxu0 0.0
    %1477 = vmatprep.subr.mxu0 0.0
    %1478 = vmatpush2.msra.mxu0 0.0
    %1479 = vmatprep.subr.mxu0 0.0
    %1480 = vmatpush2.msra.mxu0 0.0
    %1481 = vmatprep.subr.mxu0 0.0
    %1482 = vmatpush2.msra.mxu0 0.0
    %1483 = vmatprep.subr.mxu0 0.0
    %1484 = vmatpush2.msra.mxu0 0.0
    %1485 = vmatprep.subr.mxu0 0.0
    %1486 = vmatpush2.msra.mxu0 0.0
    %1487 = vmatprep.subr.mxu0 0.0
    %1488 = vmatpush2.msra.mxu0 0.0
    %1489 = vmatprep.subr.mxu0 0.0
    %1490 = vmatpush2.msra.mxu0 0.0
    %1491 = vmatprep.subr.mxu0 0.0
    %1492 = vmatpush2.msra.mxu0 0.0
    %1493 = vmatprep.subr.mxu0 0.0
    %1494 = vmatpush2.msra.mxu0 0.0
    %1495 = vmatprep.subr.mxu0 0.0
    %1496 = vmatpush2.msra.mxu0 0.0
    %1497 = vmatprep.subr.mxu0 0.0
    %1498 = vmatpush2.msra.mxu0 0.0
    %1499 = vmatprep.subr.mxu0 0.0
    %1500 = vmatpush2.msra.mxu0 0.0
    %1501 = vmatprep.subr.mxu0 0.0
    %1502 = vmatpush2.msra.mxu0 0.0
    %1503 = vmatprep.subr.mxu0 0.0
    %1504 = vmatpush2.msra.mxu0 0.0
    %1505 = vmatprep.subr.mxu0 0.0
    %1506 = vmatpush2.msra.mxu0 0.0
    %1507 = vmatprep.mubr.f32.mxu0 0.0
    %1508 = vmatmul.mubr.f32.gmra.mxu0 %v1441
    %v1509 = vpop.f32.mrf.mxu0
    %v1510 = vadd.f32 0.0, %v1509
    %v1511 = vpop.f32.mrf.mxu0
    %1512 = vdwg.mxu0
    %v1513 = vrcp.pop %v1439
    %v1514 = vmul.f32 %v1510, %v1513
    %1515 = vst.msk [vmem:[#allocation3 + $0x18] sm:$0xff] %vm22, %v1514
    %1517 = vrot.lane.b32.xlu0 %v265, 64
    %v1518 = vpop.permute.xlu0 %1517
    %1520 = vxpose.xlu0.b32.start [1/16] %v1518, 128
    %1521 = vxpose.xlu0.b32.cont [2/16] 0.0, 128
    %1522 = vxpose.xlu0.b32.cont [3/16] 0.0, 128
    %1523 = vxpose.xlu0.b32.cont [4/16] 0.0, 128
    %1524 = vxpose.xlu0.b32.cont [5/16] 0.0, 128
    %1525 = vxpose.xlu0.b32.cont [6/16] 0.0, 128
    %1526 = vxpose.xlu0.b32.cont [7/16] 0.0, 128
    %1527 = vxpose.xlu0.b32.cont [8/16] 0.0, 128
    %1528 = vxpose.xlu0.b32.cont [9/16] 0.0, 128
    %1529 = vxpose.xlu0.b32.cont [10/16] 0.0, 128
    %1530 = vxpose.xlu0.b32.cont [11/16] 0.0, 128
    %1531 = vxpose.xlu0.b32.cont [12/16] 0.0, 128
    %1532 = vxpose.xlu0.b32.cont [13/16] 0.0, 128
    %1533 = vxpose.xlu0.b32.cont [14/16] 0.0, 128
    %1534 = vxpose.xlu0.b32.cont [15/16] 0.0, 128
    %1535 = vxpose.xlu0.b32.end [16/16] 0.0, 128
    %v1536 = vpop.trf.xlu0
    %v1537 = vpop.trf.xlu0
    %v1538 = vpop.trf.xlu0
    %v1539 = vpop.trf.xlu0
    %v1540 = vpop.trf.xlu0
    %v1541 = vpop.trf.xlu0
    %v1542 = vpop.trf.xlu0
    %v1543 = vpop.trf.xlu0
    %v1544 = vpop.trf.xlu0
    %v1545 = vpop.trf.xlu0
    %v1546 = vpop.trf.xlu0
    %v1547 = vpop.trf.xlu0
    %v1548 = vpop.trf.xlu0
    %v1549 = vpop.trf.xlu0
    %v1550 = vpop.trf.xlu0
    %v1551 = vpop.trf.xlu0
    %1553 = vrot.lane.b32.xlu0 %v245, 64
    %v1554 = vpop.permute.xlu0 %1553
    %v1557 = vsel %vm335, %v1536, 0
    %v1560 = vsel %vm335, %v1537, 0
    %v1563 = vsel %vm335, %v1538, 0
    %v1566 = vsel %vm335, %v1539, 0
    %v1569 = vsel %vm335, %v1540, 0
    %v1572 = vsel %vm335, %v1541, 0
    %v1575 = vsel %vm335, %v1542, 0
    %v1578 = vsel %vm335, %v1543, 0
    %1580 = vmatprep.subr.mxu0 0.0
    %1581 = vmatpush1.msra.mxu0 0.0
    %1582 = vmatprep.subr.mxu0 0.0
    %1583 = vmatpush1.msra.mxu0 0.0
    %1584 = vmatprep.subr.mxu0 0.0
    %1585 = vmatpush1.msra.mxu0 0.0
    %1586 = vmatprep.subr.mxu0 0.0
    %1587 = vmatpush1.msra.mxu0 0.0
    %1588 = vmatprep.subr.mxu0 0.0
    %1589 = vmatpush1.msra.mxu0 0.0
    %1590 = vmatprep.subr.mxu0 0.0
    %1591 = vmatpush1.msra.mxu0 0.0
    %1592 = vmatprep.subr.mxu0 0.0
    %1593 = vmatpush1.msra.mxu0 0.0
    %1594 = vmatprep.subr.mxu0 0.0
    %1595 = vmatpush1.msra.mxu0 0.0
    %1596 = vmatprep.subr.mxu0 0.0
    %1597 = vmatpush1.msra.mxu0 0.0
    %1598 = vmatprep.subr.mxu0 0.0
    %1599 = vmatpush1.msra.mxu0 0.0
    %1600 = vmatprep.subr.mxu0 0.0
    %1601 = vmatpush1.msra.mxu0 0.0
    %1602 = vmatprep.subr.mxu0 0.0
    %1603 = vmatpush1.msra.mxu0 0.0
    %1604 = vmatprep.subr.mxu0 0.0
    %1605 = vmatpush1.msra.mxu0 0.0
    %1606 = vmatprep.subr.mxu0 0.0
    %1607 = vmatpush1.msra.mxu0 0.0
    %1608 = vmatprep.subr.mxu0 0.0
    %1609 = vmatpush1.msra.mxu0 0.0
    %1610 = vmatprep.subr.mxu0 0.0
    %1611 = vmatpush1.msra.mxu0 %v1554
    %1612 = vmatprep.subr.mxu0 0.0
    %1613 = vmatpush2.msra.mxu0 0.0
    %1614 = vmatprep.subr.mxu0 0.0
    %1615 = vmatpush2.msra.mxu0 0.0
    %1616 = vmatprep.subr.mxu0 0.0
    %1617 = vmatpush2.msra.mxu0 0.0
    %1618 = vmatprep.subr.mxu0 0.0
    %1619 = vmatpush2.msra.mxu0 0.0
    %1620 = vmatprep.subr.mxu0 0.0
    %1621 = vmatpush2.msra.mxu0 0.0
    %1622 = vmatprep.subr.mxu0 0.0
    %1623 = vmatpush2.msra.mxu0 0.0
    %1624 = vmatprep.subr.mxu0 0.0
    %1625 = vmatpush2.msra.mxu0 0.0
    %1626 = vmatprep.subr.mxu0 0.0
    %1627 = vmatpush2.msra.mxu0 0.0
    %1628 = vmatprep.subr.mxu0 0.0
    %1629 = vmatpush2.msra.mxu0 0.0
    %1630 = vmatprep.subr.mxu0 0.0
    %1631 = vmatpush2.msra.mxu0 0.0
    %1632 = vmatprep.subr.mxu0 0.0
    %1633 = vmatpush2.msra.mxu0 0.0
    %1634 = vmatprep.subr.mxu0 0.0
    %1635 = vmatpush2.msra.mxu0 0.0
    %1636 = vmatprep.subr.mxu0 0.0
    %1637 = vmatpush2.msra.mxu0 0.0
    %1638 = vmatprep.subr.mxu0 0.0
    %1639 = vmatpush2.msra.mxu0 0.0
    %1640 = vmatprep.subr.mxu0 0.0
    %1641 = vmatpush2.msra.mxu0 0.0
    %1642 = vmatprep.subr.mxu0 0.0
    %1643 = vmatpush2.msra.mxu0 0.0
    %1644 = vmatprep.mubr.f32.mxu0 0.0
    %1645 = vmatmul.mubr.f32.gmra.mxu0 %v1557
    %v1646 = vpop.f32.mrf.mxu0
    %v1647 = vadd.f32 0.0, %v1646
    %v1648 = vpop.f32.mrf.mxu0
    %1649 = vmatprep.mubr.f32.mxu0 0.0
    %1650 = vmatmul.mubr.f32.gmra.mxu0 %v1560
    %v1651 = vpop.f32.mrf.mxu0
    %v1652 = vadd.f32 0.0, %v1651
    %v1653 = vpop.f32.mrf.mxu0
    %1654 = vmatprep.mubr.f32.mxu0 0.0
    %1655 = vmatmul.mubr.f32.gmra.mxu0 %v1563
    %v1656 = vpop.f32.mrf.mxu0
    %v1657 = vadd.f32 0.0, %v1656
    %v1658 = vpop.f32.mrf.mxu0
    %1659 = vmatprep.mubr.f32.mxu0 0.0
    %1660 = vmatmul.mubr.f32.gmra.mxu0 %v1566
    %v1661 = vpop.f32.mrf.mxu0
    %v1662 = vadd.f32 0.0, %v1661
    %v1663 = vpop.f32.mrf.mxu0
    %1664 = vmatprep.mubr.f32.mxu0 0.0
    %1665 = vmatmul.mubr.f32.gmra.mxu0 %v1569
    %v1666 = vpop.f32.mrf.mxu0
    %v1667 = vadd.f32 0.0, %v1666
    %v1668 = vpop.f32.mrf.mxu0
    %1669 = vmatprep.mubr.f32.mxu0 0.0
    %1670 = vmatmul.mubr.f32.gmra.mxu0 %v1572
    %v1671 = vpop.f32.mrf.mxu0
    %v1672 = vadd.f32 0.0, %v1671
    %v1673 = vpop.f32.mrf.mxu0
    %1674 = vmatprep.mubr.f32.mxu0 0.0
    %1675 = vmatmul.mubr.f32.gmra.mxu0 %v1575
    %v1676 = vpop.f32.mrf.mxu0
    %v1677 = vadd.f32 0.0, %v1676
    %v1678 = vpop.f32.mrf.mxu0
    %1679 = vmatprep.mubr.f32.mxu0 0.0
    %1680 = vmatmul.mubr.f32.gmra.mxu0 %v1578
    %v1681 = vpop.f32.mrf.mxu0
    %v1682 = vadd.f32 0.0, %v1681
    %v1683 = vpop.f32.mrf.mxu0
    %1684 = vdwg.mxu0
    %v1685 = vsel %vm22, %v1647, -inf
    %v1686 = vsel %vm22, %v1652, -inf
    %v1687 = vsel %vm22, %v1657, -inf
    %v1688 = vsel %vm22, %v1662, -inf
    %v1689 = vsel %vm22, %v1667, -inf
    %v1690 = vmax.f32 %v1685, %v1689
    %v1691 = vsel %vm22, %v1672, -inf
    %v1692 = vmax.f32 %v1686, %v1691
    %v1693 = vsel %vm22, %v1677, -inf
    %v1694 = vmax.f32 %v1687, %v1693
    %v1695 = vsel %vm22, %v1682, -inf
    %v1696 = vmax.f32 %v1688, %v1695
    %v1697 = vmax.f32 %v1690, %v1692
    %v1698 = vmax.f32 %v1694, %v1696
    %v1699 = vmax.f32 %v1697, %v1698
    %v1700 = vrot.slane %v1699, 4
    %v1701 = vmax.f32 %v1699, %v1700
    %v1702 = vrot.slane %v1701, 2
    %v1703 = vmax.f32 %v1701, %v1702
    %v1704 = vrot.slane %v1703, 1
    %v1705 = vmax.f32 %v1703, %v1704
    %v1706 = vsub.f32 %v1647, %v1705
    %v1707 = vsub.f32 %v1652, %v1705
    %v1708 = vsub.f32 %v1657, %v1705
    %v1709 = vsub.f32 %v1662, %v1705
    %v1710 = vsub.f32 %v1667, %v1705
    %v1711 = vsub.f32 %v1672, %v1705
    %v1712 = vsub.f32 %v1677, %v1705
    %v1713 = vsub.f32 %v1682, %v1705
    %v1714 = vmul.f32 %v1706, 1.442695
    %v1715 = vpow.pop %v1714
    %v1716 = vmul.f32 %v1707, 1.442695
    %v1717 = vpow.pop %v1716
    %v1718 = vmul.f32 %v1708, 1.442695
    %v1719 = vpow.pop %v1718
    %v1720 = vmul.f32 %v1709, 1.442695
    %v1721 = vpow.pop %v1720
    %v1722 = vmul.f32 %v1710, 1.442695
    %v1723 = vpow.pop %v1722
    %v1724 = vmul.f32 %v1711, 1.442695
    %v1725 = vpow.pop %v1724
    %v1726 = vmul.f32 %v1712, 1.442695
    %v1727 = vpow.pop %v1726
    %v1728 = vmul.f32 %v1713, 1.442695
    %v1729 = vpow.pop %v1728
    %v1730 = vsel %vm22, %v1715, 0.0
    %v1731 = vsel %vm22, %v1717, 0.0
    %v1732 = vadd.f32 %v1730, %v1731
    %v1733 = vsel %vm22, %v1719, 0.0
    %v1734 = vadd.f32 %v1732, %v1733
    %v1735 = vsel %vm22, %v1721, 0.0
    %v1736 = vadd.f32 %v1734, %v1735
    %v1737 = vsel %vm22, %v1723, 0.0
    %v1738 = vadd.f32 %v1736, %v1737
    %v1739 = vsel %vm22, %v1725, 0.0
    %v1740 = vadd.f32 %v1738, %v1739
    %v1741 = vsel %vm22, %v1727, 0.0
    %v1742 = vadd.f32 %v1740, %v1741
    %v1743 = vsel %vm22, %v1729, 0.0
    %v1744 = vadd.f32 %v1742, %v1743
    %v1745 = vrot.slane %v1744, 4
    %v1746 = vadd.f32 %v1744, %v1745
    %v1747 = vrot.slane %v1746, 2
    %v1748 = vadd.f32 %v1746, %v1747
    %v1749 = vrot.slane %v1748, 1
    %v1750 = vadd.f32 %v1748, %v1749
    %1751 = vrot.lane.b32.xlu0 %v285, 64
    %v1752 = vpop.permute.xlu0 %1751
    %v1753 = vsel %vm22, %v1752, 0
    %1755 = vmatprep.subr.mxu0 0.0
    %1756 = vmatpush1.msra.mxu0 0.0
    %1757 = vmatprep.subr.mxu0 0.0
    %1758 = vmatpush1.msra.mxu0 0.0
    %1759 = vmatprep.subr.mxu0 0.0
    %1760 = vmatpush1.msra.mxu0 0.0
    %1761 = vmatprep.subr.mxu0 0.0
    %1762 = vmatpush1.msra.mxu0 0.0
    %1763 = vmatprep.subr.mxu0 0.0
    %1764 = vmatpush1.msra.mxu0 0.0
    %1765 = vmatprep.subr.mxu0 0.0
    %1766 = vmatpush1.msra.mxu0 0.0
    %1767 = vmatprep.subr.mxu0 0.0
    %1768 = vmatpush1.msra.mxu0 0.0
    %1769 = vmatprep.subr.mxu0 0.0
    %1770 = vmatpush1.msra.mxu0 0.0
    %1771 = vmatprep.subr.mxu0 0.0
    %1772 = vmatpush1.msra.mxu0 %v1729
    %1773 = vmatprep.subr.mxu0 0.0
    %1774 = vmatpush1.msra.mxu0 %v1727
    %1775 = vmatprep.subr.mxu0 0.0
    %1776 = vmatpush1.msra.mxu0 %v1725
    %1777 = vmatprep.subr.mxu0 0.0
    %1778 = vmatpush1.msra.mxu0 %v1723
    %1779 = vmatprep.subr.mxu0 0.0
    %1780 = vmatpush1.msra.mxu0 %v1721
    %1781 = vmatprep.subr.mxu0 0.0
    %1782 = vmatpush1.msra.mxu0 %v1719
    %1783 = vmatprep.subr.mxu0 0.0
    %1784 = vmatpush1.msra.mxu0 %v1717
    %1785 = vmatprep.subr.mxu0 0.0
    %1786 = vmatpush1.msra.mxu0 %v1715
    %1787 = vmatprep.subr.mxu0 0.0
    %1788 = vmatpush2.msra.mxu0 0.0
    %1789 = vmatprep.subr.mxu0 0.0
    %1790 = vmatpush2.msra.mxu0 0.0
    %1791 = vmatprep.subr.mxu0 0.0
    %1792 = vmatpush2.msra.mxu0 0.0
    %1793 = vmatprep.subr.mxu0 0.0
    %1794 = vmatpush2.msra.mxu0 0.0
    %1795 = vmatprep.subr.mxu0 0.0
    %1796 = vmatpush2.msra.mxu0 0.0
    %1797 = vmatprep.subr.mxu0 0.0
    %1798 = vmatpush2.msra.mxu0 0.0
    %1799 = vmatprep.subr.mxu0 0.0
    %1800 = vmatpush2.msra.mxu0 0.0
    %1801 = vmatprep.subr.mxu0 0.0
    %1802 = vmatpush2.msra.mxu0 0.0
    %1803 = vmatprep.subr.mxu0 0.0
    %1804 = vmatpush2.msra.mxu0 0.0
    %1805 = vmatprep.subr.mxu0 0.0
    %1806 = vmatpush2.msra.mxu0 0.0
    %1807 = vmatprep.subr.mxu0 0.0
    %1808 = vmatpush2.msra.mxu0 0.0
    %1809 = vmatprep.subr.mxu0 0.0
    %1810 = vmatpush2.msra.mxu0 0.0
    %1811 = vmatprep.subr.mxu0 0.0
    %1812 = vmatpush2.msra.mxu0 0.0
    %1813 = vmatprep.subr.mxu0 0.0
    %1814 = vmatpush2.msra.mxu0 0.0
    %1815 = vmatprep.subr.mxu0 0.0
    %1816 = vmatpush2.msra.mxu0 0.0
    %1817 = vmatprep.subr.mxu0 0.0
    %1818 = vmatpush2.msra.mxu0 0.0
    %1819 = vmatprep.mubr.f32.mxu0 0.0
    %1820 = vmatmul.mubr.f32.gmra.mxu0 %v1753
    %v1821 = vpop.f32.mrf.mxu0
    %v1822 = vadd.f32 0.0, %v1821
    %v1823 = vpop.f32.mrf.mxu0
    %1824 = vdwg.mxu0
    %v1825 = vrcp.pop %v1750
    %v1826 = vmul.f32 %v1822, %v1825
    %1828 = vrot.lane.b32.xlu0 %v1826, 64
    %v1829 = vpop.permute.xlu0 %1828
    %1831 = vst.msk [vmem:[#allocation3] sm:$0xff] %vm48, %v1829
    %1833 = vrot.lane.b32.xlu0 %v270, 64
    %v1834 = vpop.permute.xlu0 %1833
    %1836 = vxpose.xlu0.b32.start [1/16] %v1834, 128
    %1837 = vxpose.xlu0.b32.cont [2/16] 0.0, 128
    %1838 = vxpose.xlu0.b32.cont [3/16] 0.0, 128
    %1839 = vxpose.xlu0.b32.cont [4/16] 0.0, 128
    %1840 = vxpose.xlu0.b32.cont [5/16] 0.0, 128
    %1841 = vxpose.xlu0.b32.cont [6/16] 0.0, 128
    %1842 = vxpose.xlu0.b32.cont [7/16] 0.0, 128
    %1843 = vxpose.xlu0.b32.cont [8/16] 0.0, 128
    %1844 = vxpose.xlu0.b32.cont [9/16] 0.0, 128
    %1845 = vxpose.xlu0.b32.cont [10/16] 0.0, 128
    %1846 = vxpose.xlu0.b32.cont [11/16] 0.0, 128
    %1847 = vxpose.xlu0.b32.cont [12/16] 0.0, 128
    %1848 = vxpose.xlu0.b32.cont [13/16] 0.0, 128
    %1849 = vxpose.xlu0.b32.cont [14/16] 0.0, 128
    %1850 = vxpose.xlu0.b32.cont [15/16] 0.0, 128
    %1851 = vxpose.xlu0.b32.end [16/16] 0.0, 128
    %v1852 = vpop.trf.xlu0
    %v1853 = vpop.trf.xlu0
    %v1854 = vpop.trf.xlu0
    %v1855 = vpop.trf.xlu0
    %v1856 = vpop.trf.xlu0
    %v1857 = vpop.trf.xlu0
    %v1858 = vpop.trf.xlu0
    %v1859 = vpop.trf.xlu0
    %v1860 = vpop.trf.xlu0
    %v1861 = vpop.trf.xlu0
    %v1862 = vpop.trf.xlu0
    %v1863 = vpop.trf.xlu0
    %v1864 = vpop.trf.xlu0
    %v1865 = vpop.trf.xlu0
    %v1866 = vpop.trf.xlu0
    %v1867 = vpop.trf.xlu0
    %1869 = vrot.lane.b32.xlu0 %v250, 64
    %v1870 = vpop.permute.xlu0 %1869
    %v1873 = vsel %vm335, %v1852, 0
    %v1876 = vsel %vm335, %v1853, 0
    %v1879 = vsel %vm335, %v1854, 0
    %v1882 = vsel %vm335, %v1855, 0
    %v1885 = vsel %vm335, %v1856, 0
    %v1888 = vsel %vm335, %v1857, 0
    %v1891 = vsel %vm335, %v1858, 0
    %v1894 = vsel %vm335, %v1859, 0
    %1896 = vmatprep.subr.mxu0 0.0
    %1897 = vmatpush1.msra.mxu0 0.0
    %1898 = vmatprep.subr.mxu0 0.0
    %1899 = vmatpush1.msra.mxu0 0.0
    %1900 = vmatprep.subr.mxu0 0.0
    %1901 = vmatpush1.msra.mxu0 0.0
    %1902 = vmatprep.subr.mxu0 0.0
    %1903 = vmatpush1.msra.mxu0 0.0
    %1904 = vmatprep.subr.mxu0 0.0
    %1905 = vmatpush1.msra.mxu0 0.0
    %1906 = vmatprep.subr.mxu0 0.0
    %1907 = vmatpush1.msra.mxu0 0.0
    %1908 = vmatprep.subr.mxu0 0.0
    %1909 = vmatpush1.msra.mxu0 0.0
    %1910 = vmatprep.subr.mxu0 0.0
    %1911 = vmatpush1.msra.mxu0 0.0
    %1912 = vmatprep.subr.mxu0 0.0
    %1913 = vmatpush1.msra.mxu0 0.0
    %1914 = vmatprep.subr.mxu0 0.0
    %1915 = vmatpush1.msra.mxu0 0.0
    %1916 = vmatprep.subr.mxu0 0.0
    %1917 = vmatpush1.msra.mxu0 0.0
    %1918 = vmatprep.subr.mxu0 0.0
    %1919 = vmatpush1.msra.mxu0 0.0
    %1920 = vmatprep.subr.mxu0 0.0
    %1921 = vmatpush1.msra.mxu0 0.0
    %1922 = vmatprep.subr.mxu0 0.0
    %1923 = vmatpush1.msra.mxu0 0.0
    %1924 = vmatprep.subr.mxu0 0.0
    %1925 = vmatpush1.msra.mxu0 0.0
    %1926 = vmatprep.subr.mxu0 0.0
    %1927 = vmatpush1.msra.mxu0 %v1870
    %1928 = vmatprep.subr.mxu0 0.0
    %1929 = vmatpush2.msra.mxu0 0.0
    %1930 = vmatprep.subr.mxu0 0.0
    %1931 = vmatpush2.msra.mxu0 0.0
    %1932 = vmatprep.subr.mxu0 0.0
    %1933 = vmatpush2.msra.mxu0 0.0
    %1934 = vmatprep.subr.mxu0 0.0
    %1935 = vmatpush2.msra.mxu0 0.0
    %1936 = vmatprep.subr.mxu0 0.0
    %1937 = vmatpush2.msra.mxu0 0.0
    %1938 = vmatprep.subr.mxu0 0.0
    %1939 = vmatpush2.msra.mxu0 0.0
    %1940 = vmatprep.subr.mxu0 0.0
    %1941 = vmatpush2.msra.mxu0 0.0
    %1942 = vmatprep.subr.mxu0 0.0
    %1943 = vmatpush2.msra.mxu0 0.0
    %1944 = vmatprep.subr.mxu0 0.0
    %1945 = vmatpush2.msra.mxu0 0.0
    %1946 = vmatprep.subr.mxu0 0.0
    %1947 = vmatpush2.msra.mxu0 0.0
    %1948 = vmatprep.subr.mxu0 0.0
    %1949 = vmatpush2.msra.mxu0 0.0
    %1950 = vmatprep.subr.mxu0 0.0
    %1951 = vmatpush2.msra.mxu0 0.0
    %1952 = vmatprep.subr.mxu0 0.0
    %1953 = vmatpush2.msra.mxu0 0.0
    %1954 = vmatprep.subr.mxu0 0.0
    %1955 = vmatpush2.msra.mxu0 0.0
    %1956 = vmatprep.subr.mxu0 0.0
    %1957 = vmatpush2.msra.mxu0 0.0
    %1958 = vmatprep.subr.mxu0 0.0
    %1959 = vmatpush2.msra.mxu0 0.0
    %1960 = vmatprep.mubr.f32.mxu0 0.0
    %1961 = vmatmul.mubr.f32.gmra.mxu0 %v1873
    %v1962 = vpop.f32.mrf.mxu0
    %v1963 = vadd.f32 0.0, %v1962
    %v1964 = vpop.f32.mrf.mxu0
    %1965 = vmatprep.mubr.f32.mxu0 0.0
    %1966 = vmatmul.mubr.f32.gmra.mxu0 %v1876
    %v1967 = vpop.f32.mrf.mxu0
    %v1968 = vadd.f32 0.0, %v1967
    %v1969 = vpop.f32.mrf.mxu0
    %1970 = vmatprep.mubr.f32.mxu0 0.0
    %1971 = vmatmul.mubr.f32.gmra.mxu0 %v1879
    %v1972 = vpop.f32.mrf.mxu0
    %v1973 = vadd.f32 0.0, %v1972
    %v1974 = vpop.f32.mrf.mxu0
    %1975 = vmatprep.mubr.f32.mxu0 0.0
    %1976 = vmatmul.mubr.f32.gmra.mxu0 %v1882
    %v1977 = vpop.f32.mrf.mxu0
    %v1978 = vadd.f32 0.0, %v1977
    %v1979 = vpop.f32.mrf.mxu0
    %1980 = vmatprep.mubr.f32.mxu0 0.0
    %1981 = vmatmul.mubr.f32.gmra.mxu0 %v1885
    %v1982 = vpop.f32.mrf.mxu0
    %v1983 = vadd.f32 0.0, %v1982
    %v1984 = vpop.f32.mrf.mxu0
    %1985 = vmatprep.mubr.f32.mxu0 0.0
    %1986 = vmatmul.mubr.f32.gmra.mxu0 %v1888
    %v1987 = vpop.f32.mrf.mxu0
    %v1988 = vadd.f32 0.0, %v1987
    %v1989 = vpop.f32.mrf.mxu0
    %1990 = vmatprep.mubr.f32.mxu0 0.0
    %1991 = vmatmul.mubr.f32.gmra.mxu0 %v1891
    %v1992 = vpop.f32.mrf.mxu0
    %v1993 = vadd.f32 0.0, %v1992
    %v1994 = vpop.f32.mrf.mxu0
    %1995 = vmatprep.mubr.f32.mxu0 0.0
    %1996 = vmatmul.mubr.f32.gmra.mxu0 %v1894
    %v1997 = vpop.f32.mrf.mxu0
    %v1998 = vadd.f32 0.0, %v1997
    %v1999 = vpop.f32.mrf.mxu0
    %2000 = vdwg.mxu0
    %v2001 = vsel %vm22, %v1963, -inf
    %v2002 = vsel %vm22, %v1968, -inf
    %v2003 = vsel %vm22, %v1973, -inf
    %v2004 = vsel %vm22, %v1978, -inf
    %v2005 = vsel %vm22, %v1983, -inf
    %v2006 = vmax.f32 %v2001, %v2005
    %v2007 = vsel %vm22, %v1988, -inf
    %v2008 = vmax.f32 %v2002, %v2007
    %v2009 = vsel %vm22, %v1993, -inf
    %v2010 = vmax.f32 %v2003, %v2009
    %v2011 = vsel %vm22, %v1998, -inf
    %v2012 = vmax.f32 %v2004, %v2011
    %v2013 = vmax.f32 %v2006, %v2008
    %v2014 = vmax.f32 %v2010, %v2012
    %v2015 = vmax.f32 %v2013, %v2014
    %v2016 = vrot.slane %v2015, 4
    %v2017 = vmax.f32 %v2015, %v2016
    %v2018 = vrot.slane %v2017, 2
    %v2019 = vmax.f32 %v2017, %v2018
    %v2020 = vrot.slane %v2019, 1
    %v2021 = vmax.f32 %v2019, %v2020
    %v2022 = vsub.f32 %v1963, %v2021
    %v2023 = vsub.f32 %v1968, %v2021
    %v2024 = vsub.f32 %v1973, %v2021
    %v2025 = vsub.f32 %v1978, %v2021
    %v2026 = vsub.f32 %v1983, %v2021
    %v2027 = vsub.f32 %v1988, %v2021
    %v2028 = vsub.f32 %v1993, %v2021
    %v2029 = vsub.f32 %v1998, %v2021
    %v2030 = vmul.f32 %v2022, 1.442695
    %v2031 = vpow.pop %v2030
    %v2032 = vmul.f32 %v2023, 1.442695
    %v2033 = vpow.pop %v2032
    %v2034 = vmul.f32 %v2024, 1.442695
    %v2035 = vpow.pop %v2034
    %v2036 = vmul.f32 %v2025, 1.442695
    %v2037 = vpow.pop %v2036
    %v2038 = vmul.f32 %v2026, 1.442695
    %v2039 = vpow.pop %v2038
    %v2040 = vmul.f32 %v2027, 1.442695
    %v2041 = vpow.pop %v2040
    %v2042 = vmul.f32 %v2028, 1.442695
    %v2043 = vpow.pop %v2042
    %v2044 = vmul.f32 %v2029, 1.442695
    %v2045 = vpow.pop %v2044
    %v2046 = vsel %vm22, %v2031, 0.0
    %v2047 = vsel %vm22, %v2033, 0.0
    %v2048 = vadd.f32 %v2046, %v2047
    %v2049 = vsel %vm22, %v2035, 0.0
    %v2050 = vadd.f32 %v2048, %v2049
    %v2051 = vsel %vm22, %v2037, 0.0
    %v2052 = vadd.f32 %v2050, %v2051
    %v2053 = vsel %vm22, %v2039, 0.0
    %v2054 = vadd.f32 %v2052, %v2053
    %v2055 = vsel %vm22, %v2041, 0.0
    %v2056 = vadd.f32 %v2054, %v2055
    %v2057 = vsel %vm22, %v2043, 0.0
    %v2058 = vadd.f32 %v2056, %v2057
    %v2059 = vsel %vm22, %v2045, 0.0
    %v2060 = vadd.f32 %v2058, %v2059
    %v2061 = vrot.slane %v2060, 4
    %v2062 = vadd.f32 %v2060, %v2061
    %v2063 = vrot.slane %v2062, 2
    %v2064 = vadd.f32 %v2062, %v2063
    %v2065 = vrot.slane %v2064, 1
    %v2066 = vadd.f32 %v2064, %v2065
    %2067 = vrot.lane.b32.xlu0 %v290, 64
    %v2068 = vpop.permute.xlu0 %2067
    %v2069 = vsel %vm22, %v2068, 0
    %2071 = vmatprep.subr.mxu0 0.0
    %2072 = vmatpush1.msra.mxu0 0.0
    %2073 = vmatprep.subr.mxu0 0.0
    %2074 = vmatpush1.msra.mxu0 0.0
    %2075 = vmatprep.subr.mxu0 0.0
    %2076 = vmatpush1.msra.mxu0 0.0
    %2077 = vmatprep.subr.mxu0 0.0
    %2078 = vmatpush1.msra.mxu0 0.0
    %2079 = vmatprep.subr.mxu0 0.0
    %2080 = vmatpush1.msra.mxu0 0.0
    %2081 = vmatprep.subr.mxu0 0.0
    %2082 = vmatpush1.msra.mxu0 0.0
    %2083 = vmatprep.subr.mxu0 0.0
    %2084 = vmatpush1.msra.mxu0 0.0
    %2085 = vmatprep.subr.mxu0 0.0
    %2086 = vmatpush1.msra.mxu0 0.0
    %2087 = vmatprep.subr.mxu0 0.0
    %2088 = vmatpush1.msra.mxu0 %v2045
    %2089 = vmatprep.subr.mxu0 0.0
    %2090 = vmatpush1.msra.mxu0 %v2043
    %2091 = vmatprep.subr.mxu0 0.0
    %2092 = vmatpush1.msra.mxu0 %v2041
    %2093 = vmatprep.subr.mxu0 0.0
    %2094 = vmatpush1.msra.mxu0 %v2039
    %2095 = vmatprep.subr.mxu0 0.0
    %2096 = vmatpush1.msra.mxu0 %v2037
    %2097 = vmatprep.subr.mxu0 0.0
    %2098 = vmatpush1.msra.mxu0 %v2035
    %2099 = vmatprep.subr.mxu0 0.0
    %2100 = vmatpush1.msra.mxu0 %v2033
    %2101 = vmatprep.subr.mxu0 0.0
    %2102 = vmatpush1.msra.mxu0 %v2031
    %2103 = vmatprep.subr.mxu0 0.0
    %2104 = vmatpush2.msra.mxu0 0.0
    %2105 = vmatprep.subr.mxu0 0.0
    %2106 = vmatpush2.msra.mxu0 0.0
    %2107 = vmatprep.subr.mxu0 0.0
    %2108 = vmatpush2.msra.mxu0 0.0
    %2109 = vmatprep.subr.mxu0 0.0
    %2110 = vmatpush2.msra.mxu0 0.0
    %2111 = vmatprep.subr.mxu0 0.0
    %2112 = vmatpush2.msra.mxu0 0.0
    %2113 = vmatprep.subr.mxu0 0.0
    %2114 = vmatpush2.msra.mxu0 0.0
    %2115 = vmatprep.subr.mxu0 0.0
    %2116 = vmatpush2.msra.mxu0 0.0
    %2117 = vmatprep.subr.mxu0 0.0
    %2118 = vmatpush2.msra.mxu0 0.0
    %2119 = vmatprep.subr.mxu0 0.0
    %2120 = vmatpush2.msra.mxu0 0.0
    %2121 = vmatprep.subr.mxu0 0.0
    %2122 = vmatpush2.msra.mxu0 0.0
    %2123 = vmatprep.subr.mxu0 0.0
    %2124 = vmatpush2.msra.mxu0 0.0
    %2125 = vmatprep.subr.mxu0 0.0
    %2126 = vmatpush2.msra.mxu0 0.0
    %2127 = vmatprep.subr.mxu0 0.0
    %2128 = vmatpush2.msra.mxu0 0.0
    %2129 = vmatprep.subr.mxu0 0.0
    %2130 = vmatpush2.msra.mxu0 0.0
    %2131 = vmatprep.subr.mxu0 0.0
    %2132 = vmatpush2.msra.mxu0 0.0
    %2133 = vmatprep.subr.mxu0 0.0
    %2134 = vmatpush2.msra.mxu0 0.0
    %2135 = vmatprep.mubr.f32.mxu0 0.0
    %2136 = vmatmul.mubr.f32.gmra.mxu0 %v2069
    %v2137 = vpop.f32.mrf.mxu0
    %v2138 = vadd.f32 0.0, %v2137
    %v2139 = vpop.f32.mrf.mxu0
    %2140 = vdwg.mxu0
    %v2141 = vrcp.pop %v2066
    %v2142 = vmul.f32 %v2138, %v2141
    %2144 = vrot.lane.b32.xlu0 %v2142, 64
    %v2145 = vpop.permute.xlu0 %2144
    %2147 = vst.msk [vmem:[#allocation3 + $0x8] sm:$0xff] %vm48, %v2145
    %2149 = vrot.lane.b32.xlu0 %v275, 64
    %v2150 = vpop.permute.xlu0 %2149
    %2152 = vxpose.xlu0.b32.start [1/16] %v2150, 128
    %2153 = vxpose.xlu0.b32.cont [2/16] 0.0, 128
    %2154 = vxpose.xlu0.b32.cont [3/16] 0.0, 128
    %2155 = vxpose.xlu0.b32.cont [4/16] 0.0, 128
    %2156 = vxpose.xlu0.b32.cont [5/16] 0.0, 128
    %2157 = vxpose.xlu0.b32.cont [6/16] 0.0, 128
    %2158 = vxpose.xlu0.b32.cont [7/16] 0.0, 128
    %2159 = vxpose.xlu0.b32.cont [8/16] 0.0, 128
    %2160 = vxpose.xlu0.b32.cont [9/16] 0.0, 128
    %2161 = vxpose.xlu0.b32.cont [10/16] 0.0, 128
    %2162 = vxpose.xlu0.b32.cont [11/16] 0.0, 128
    %2163 = vxpose.xlu0.b32.cont [12/16] 0.0, 128
    %2164 = vxpose.xlu0.b32.cont [13/16] 0.0, 128
    %2165 = vxpose.xlu0.b32.cont [14/16] 0.0, 128
    %2166 = vxpose.xlu0.b32.cont [15/16] 0.0, 128
    %2167 = vxpose.xlu0.b32.end [16/16] 0.0, 128
    %v2168 = vpop.trf.xlu0
    %v2169 = vpop.trf.xlu0
    %v2170 = vpop.trf.xlu0
    %v2171 = vpop.trf.xlu0
    %v2172 = vpop.trf.xlu0
    %v2173 = vpop.trf.xlu0
    %v2174 = vpop.trf.xlu0
    %v2175 = vpop.trf.xlu0
    %v2176 = vpop.trf.xlu0
    %v2177 = vpop.trf.xlu0
    %v2178 = vpop.trf.xlu0
    %v2179 = vpop.trf.xlu0
    %v2180 = vpop.trf.xlu0
    %v2181 = vpop.trf.xlu0
    %v2182 = vpop.trf.xlu0
    %v2183 = vpop.trf.xlu0
    %2185 = vrot.lane.b32.xlu0 %v255, 64
    %v2186 = vpop.permute.xlu0 %2185
    %v2189 = vsel %vm335, %v2168, 0
    %v2192 = vsel %vm335, %v2169, 0
    %v2195 = vsel %vm335, %v2170, 0
    %v2198 = vsel %vm335, %v2171, 0
    %v2201 = vsel %vm335, %v2172, 0
    %v2204 = vsel %vm335, %v2173, 0
    %v2207 = vsel %vm335, %v2174, 0
    %v2210 = vsel %vm335, %v2175, 0
    %2212 = vmatprep.subr.mxu0 0.0
    %2213 = vmatpush1.msra.mxu0 0.0
    %2214 = vmatprep.subr.mxu0 0.0
    %2215 = vmatpush1.msra.mxu0 0.0
    %2216 = vmatprep.subr.mxu0 0.0
    %2217 = vmatpush1.msra.mxu0 0.0
    %2218 = vmatprep.subr.mxu0 0.0
    %2219 = vmatpush1.msra.mxu0 0.0
    %2220 = vmatprep.subr.mxu0 0.0
    %2221 = vmatpush1.msra.mxu0 0.0
    %2222 = vmatprep.subr.mxu0 0.0
    %2223 = vmatpush1.msra.mxu0 0.0
    %2224 = vmatprep.subr.mxu0 0.0
    %2225 = vmatpush1.msra.mxu0 0.0
    %2226 = vmatprep.subr.mxu0 0.0
    %2227 = vmatpush1.msra.mxu0 0.0
    %2228 = vmatprep.subr.mxu0 0.0
    %2229 = vmatpush1.msra.mxu0 0.0
    %2230 = vmatprep.subr.mxu0 0.0
    %2231 = vmatpush1.msra.mxu0 0.0
    %2232 = vmatprep.subr.mxu0 0.0
    %2233 = vmatpush1.msra.mxu0 0.0
    %2234 = vmatprep.subr.mxu0 0.0
    %2235 = vmatpush1.msra.mxu0 0.0
    %2236 = vmatprep.subr.mxu0 0.0
    %2237 = vmatpush1.msra.mxu0 0.0
    %2238 = vmatprep.subr.mxu0 0.0
    %2239 = vmatpush1.msra.mxu0 0.0
    %2240 = vmatprep.subr.mxu0 0.0
    %2241 = vmatpush1.msra.mxu0 0.0
    %2242 = vmatprep.subr.mxu0 0.0
    %2243 = vmatpush1.msra.mxu0 %v2186
    %2244 = vmatprep.subr.mxu0 0.0
    %2245 = vmatpush2.msra.mxu0 0.0
    %2246 = vmatprep.subr.mxu0 0.0
    %2247 = vmatpush2.msra.mxu0 0.0
    %2248 = vmatprep.subr.mxu0 0.0
    %2249 = vmatpush2.msra.mxu0 0.0
    %2250 = vmatprep.subr.mxu0 0.0
    %2251 = vmatpush2.msra.mxu0 0.0
    %2252 = vmatprep.subr.mxu0 0.0
    %2253 = vmatpush2.msra.mxu0 0.0
    %2254 = vmatprep.subr.mxu0 0.0
    %2255 = vmatpush2.msra.mxu0 0.0
    %2256 = vmatprep.subr.mxu0 0.0
    %2257 = vmatpush2.msra.mxu0 0.0
    %2258 = vmatprep.subr.mxu0 0.0
    %2259 = vmatpush2.msra.mxu0 0.0
    %2260 = vmatprep.subr.mxu0 0.0
    %2261 = vmatpush2.msra.mxu0 0.0
    %2262 = vmatprep.subr.mxu0 0.0
    %2263 = vmatpush2.msra.mxu0 0.0
    %2264 = vmatprep.subr.mxu0 0.0
    %2265 = vmatpush2.msra.mxu0 0.0
    %2266 = vmatprep.subr.mxu0 0.0
    %2267 = vmatpush2.msra.mxu0 0.0
    %2268 = vmatprep.subr.mxu0 0.0
    %2269 = vmatpush2.msra.mxu0 0.0
    %2270 = vmatprep.subr.mxu0 0.0
    %2271 = vmatpush2.msra.mxu0 0.0
    %2272 = vmatprep.subr.mxu0 0.0
    %2273 = vmatpush2.msra.mxu0 0.0
    %2274 = vmatprep.subr.mxu0 0.0
    %2275 = vmatpush2.msra.mxu0 0.0
    %2276 = vmatprep.mubr.f32.mxu0 0.0
    %2277 = vmatmul.mubr.f32.gmra.mxu0 %v2189
    %v2278 = vpop.f32.mrf.mxu0
    %v2279 = vadd.f32 0.0, %v2278
    %v2280 = vpop.f32.mrf.mxu0
    %2281 = vmatprep.mubr.f32.mxu0 0.0
    %2282 = vmatmul.mubr.f32.gmra.mxu0 %v2192
    %v2283 = vpop.f32.mrf.mxu0
    %v2284 = vadd.f32 0.0, %v2283
    %v2285 = vpop.f32.mrf.mxu0
    %2286 = vmatprep.mubr.f32.mxu0 0.0
    %2287 = vmatmul.mubr.f32.gmra.mxu0 %v2195
    %v2288 = vpop.f32.mrf.mxu0
    %v2289 = vadd.f32 0.0, %v2288
    %v2290 = vpop.f32.mrf.mxu0
    %2291 = vmatprep.mubr.f32.mxu0 0.0
    %2292 = vmatmul.mubr.f32.gmra.mxu0 %v2198
    %v2293 = vpop.f32.mrf.mxu0
    %v2294 = vadd.f32 0.0, %v2293
    %v2295 = vpop.f32.mrf.mxu0
    %2296 = vmatprep.mubr.f32.mxu0 0.0
    %2297 = vmatmul.mubr.f32.gmra.mxu0 %v2201
    %v2298 = vpop.f32.mrf.mxu0
    %v2299 = vadd.f32 0.0, %v2298
    %v2300 = vpop.f32.mrf.mxu0
    %2301 = vmatprep.mubr.f32.mxu0 0.0
    %2302 = vmatmul.mubr.f32.gmra.mxu0 %v2204
    %v2303 = vpop.f32.mrf.mxu0
    %v2304 = vadd.f32 0.0, %v2303
    %v2305 = vpop.f32.mrf.mxu0
    %2306 = vmatprep.mubr.f32.mxu0 0.0
    %2307 = vmatmul.mubr.f32.gmra.mxu0 %v2207
    %v2308 = vpop.f32.mrf.mxu0
    %v2309 = vadd.f32 0.0, %v2308
    %v2310 = vpop.f32.mrf.mxu0
    %2311 = vmatprep.mubr.f32.mxu0 0.0
    %2312 = vmatmul.mubr.f32.gmra.mxu0 %v2210
    %v2313 = vpop.f32.mrf.mxu0
    %v2314 = vadd.f32 0.0, %v2313
    %v2315 = vpop.f32.mrf.mxu0
    %2316 = vdwg.mxu0
    %v2317 = vsel %vm22, %v2279, -inf
    %v2318 = vsel %vm22, %v2284, -inf
    %v2319 = vsel %vm22, %v2289, -inf
    %v2320 = vsel %vm22, %v2294, -inf
    %v2321 = vsel %vm22, %v2299, -inf
    %v2322 = vmax.f32 %v2317, %v2321
    %v2323 = vsel %vm22, %v2304, -inf
    %v2324 = vmax.f32 %v2318, %v2323
    %v2325 = vsel %vm22, %v2309, -inf
    %v2326 = vmax.f32 %v2319, %v2325
    %v2327 = vsel %vm22, %v2314, -inf
    %v2328 = vmax.f32 %v2320, %v2327
    %v2329 = vmax.f32 %v2322, %v2324
    %v2330 = vmax.f32 %v2326, %v2328
    %v2331 = vmax.f32 %v2329, %v2330
    %v2332 = vrot.slane %v2331, 4
    %v2333 = vmax.f32 %v2331, %v2332
    %v2334 = vrot.slane %v2333, 2
    %v2335 = vmax.f32 %v2333, %v2334
    %v2336 = vrot.slane %v2335, 1
    %v2337 = vmax.f32 %v2335, %v2336
    %v2338 = vsub.f32 %v2279, %v2337
    %v2339 = vsub.f32 %v2284, %v2337
    %v2340 = vsub.f32 %v2289, %v2337
    %v2341 = vsub.f32 %v2294, %v2337
    %v2342 = vsub.f32 %v2299, %v2337
    %v2343 = vsub.f32 %v2304, %v2337
    %v2344 = vsub.f32 %v2309, %v2337
    %v2345 = vsub.f32 %v2314, %v2337
    %v2346 = vmul.f32 %v2338, 1.442695
    %v2347 = vpow.pop %v2346
    %v2348 = vmul.f32 %v2339, 1.442695
    %v2349 = vpow.pop %v2348
    %v2350 = vmul.f32 %v2340, 1.442695
    %v2351 = vpow.pop %v2350
    %v2352 = vmul.f32 %v2341, 1.442695
    %v2353 = vpow.pop %v2352
    %v2354 = vmul.f32 %v2342, 1.442695
    %v2355 = vpow.pop %v2354
    %v2356 = vmul.f32 %v2343, 1.442695
    %v2357 = vpow.pop %v2356
    %v2358 = vmul.f32 %v2344, 1.442695
    %v2359 = vpow.pop %v2358
    %v2360 = vmul.f32 %v2345, 1.442695
    %v2361 = vpow.pop %v2360
    %v2362 = vsel %vm22, %v2347, 0.0
    %v2363 = vsel %vm22, %v2349, 0.0
    %v2364 = vadd.f32 %v2362, %v2363
    %v2365 = vsel %vm22, %v2351, 0.0
    %v2366 = vadd.f32 %v2364, %v2365
    %v2367 = vsel %vm22, %v2353, 0.0
    %v2368 = vadd.f32 %v2366, %v2367
    %v2369 = vsel %vm22, %v2355, 0.0
    %v2370 = vadd.f32 %v2368, %v2369
    %v2371 = vsel %vm22, %v2357, 0.0
    %v2372 = vadd.f32 %v2370, %v2371
    %v2373 = vsel %vm22, %v2359, 0.0
    %v2374 = vadd.f32 %v2372, %v2373
    %v2375 = vsel %vm22, %v2361, 0.0
    %v2376 = vadd.f32 %v2374, %v2375
    %v2377 = vrot.slane %v2376, 4
    %v2378 = vadd.f32 %v2376, %v2377
    %v2379 = vrot.slane %v2378, 2
    %v2380 = vadd.f32 %v2378, %v2379
    %v2381 = vrot.slane %v2380, 1
    %v2382 = vadd.f32 %v2380, %v2381
    %2383 = vrot.lane.b32.xlu0 %v295, 64
    %v2384 = vpop.permute.xlu0 %2383
    %v2385 = vsel %vm22, %v2384, 0
    %2387 = vmatprep.subr.mxu0 0.0
    %2388 = vmatpush1.msra.mxu0 0.0
    %2389 = vmatprep.subr.mxu0 0.0
    %2390 = vmatpush1.msra.mxu0 0.0
    %2391 = vmatprep.subr.mxu0 0.0
    %2392 = vmatpush1.msra.mxu0 0.0
    %2393 = vmatprep.subr.mxu0 0.0
    %2394 = vmatpush1.msra.mxu0 0.0
    %2395 = vmatprep.subr.mxu0 0.0
    %2396 = vmatpush1.msra.mxu0 0.0
    %2397 = vmatprep.subr.mxu0 0.0
    %2398 = vmatpush1.msra.mxu0 0.0
    %2399 = vmatprep.subr.mxu0 0.0
    %2400 = vmatpush1.msra.mxu0 0.0
    %2401 = vmatprep.subr.mxu0 0.0
    %2402 = vmatpush1.msra.mxu0 0.0
    %2403 = vmatprep.subr.mxu0 0.0
    %2404 = vmatpush1.msra.mxu0 %v2361
    %2405 = vmatprep.subr.mxu0 0.0
    %2406 = vmatpush1.msra.mxu0 %v2359
    %2407 = vmatprep.subr.mxu0 0.0
    %2408 = vmatpush1.msra.mxu0 %v2357
    %2409 = vmatprep.subr.mxu0 0.0
    %2410 = vmatpush1.msra.mxu0 %v2355
    %2411 = vmatprep.subr.mxu0 0.0
    %2412 = vmatpush1.msra.mxu0 %v2353
    %2413 = vmatprep.subr.mxu0 0.0
    %2414 = vmatpush1.msra.mxu0 %v2351
    %2415 = vmatprep.subr.mxu0 0.0
    %2416 = vmatpush1.msra.mxu0 %v2349
    %2417 = vmatprep.subr.mxu0 0.0
    %2418 = vmatpush1.msra.mxu0 %v2347
    %2419 = vmatprep.subr.mxu0 0.0
    %2420 = vmatpush2.msra.mxu0 0.0
    %2421 = vmatprep.subr.mxu0 0.0
    %2422 = vmatpush2.msra.mxu0 0.0
    %2423 = vmatprep.subr.mxu0 0.0
    %2424 = vmatpush2.msra.mxu0 0.0
    %2425 = vmatprep.subr.mxu0 0.0
    %2426 = vmatpush2.msra.mxu0 0.0
    %2427 = vmatprep.subr.mxu0 0.0
    %2428 = vmatpush2.msra.mxu0 0.0
    %2429 = vmatprep.subr.mxu0 0.0
    %2430 = vmatpush2.msra.mxu0 0.0
    %2431 = vmatprep.subr.mxu0 0.0
    %2432 = vmatpush2.msra.mxu0 0.0
    %2433 = vmatprep.subr.mxu0 0.0
    %2434 = vmatpush2.msra.mxu0 0.0
    %2435 = vmatprep.subr.mxu0 0.0
    %2436 = vmatpush2.msra.mxu0 0.0
    %2437 = vmatprep.subr.mxu0 0.0
    %2438 = vmatpush2.msra.mxu0 0.0
    %2439 = vmatprep.subr.mxu0 0.0
    %2440 = vmatpush2.msra.mxu0 0.0
    %2441 = vmatprep.subr.mxu0 0.0
    %2442 = vmatpush2.msra.mxu0 0.0
    %2443 = vmatprep.subr.mxu0 0.0
    %2444 = vmatpush2.msra.mxu0 0.0
    %2445 = vmatprep.subr.mxu0 0.0
    %2446 = vmatpush2.msra.mxu0 0.0
    %2447 = vmatprep.subr.mxu0 0.0
    %2448 = vmatpush2.msra.mxu0 0.0
    %2449 = vmatprep.subr.mxu0 0.0
    %2450 = vmatpush2.msra.mxu0 0.0
    %2451 = vmatprep.mubr.f32.mxu0 0.0
    %2452 = vmatmul.mubr.f32.gmra.mxu0 %v2385
    %v2453 = vpop.f32.mrf.mxu0
    %v2454 = vadd.f32 0.0, %v2453
    %v2455 = vpop.f32.mrf.mxu0
    %2456 = vdwg.mxu0
    %v2457 = vrcp.pop %v2382
    %v2458 = vmul.f32 %v2454, %v2457
    %2460 = vrot.lane.b32.xlu0 %v2458, 64
    %v2461 = vpop.permute.xlu0 %2460
    %2463 = vst.msk [vmem:[#allocation3 + $0x10] sm:$0xff] %vm48, %v2461
    %2465 = vrot.lane.b32.xlu0 %v280, 64
    %v2466 = vpop.permute.xlu0 %2465
    %2468 = vxpose.xlu0.b32.start [1/16] %v2466, 128
    %2469 = vxpose.xlu0.b32.cont [2/16] 0.0, 128
    %2470 = vxpose.xlu0.b32.cont [3/16] 0.0, 128
    %2471 = vxpose.xlu0.b32.cont [4/16] 0.0, 128
    %2472 = vxpose.xlu0.b32.cont [5/16] 0.0, 128
    %2473 = vxpose.xlu0.b32.cont [6/16] 0.0, 128
    %2474 = vxpose.xlu0.b32.cont [7/16] 0.0, 128
    %2475 = vxpose.xlu0.b32.cont [8/16] 0.0, 128
    %2476 = vxpose.xlu0.b32.cont [9/16] 0.0, 128
    %2477 = vxpose.xlu0.b32.cont [10/16] 0.0, 128
    %2478 = vxpose.xlu0.b32.cont [11/16] 0.0, 128
    %2479 = vxpose.xlu0.b32.cont [12/16] 0.0, 128
    %2480 = vxpose.xlu0.b32.cont [13/16] 0.0, 128
    %2481 = vxpose.xlu0.b32.cont [14/16] 0.0, 128
    %2482 = vxpose.xlu0.b32.cont [15/16] 0.0, 128
    %2483 = vxpose.xlu0.b32.end [16/16] 0.0, 128
    %v2484 = vpop.trf.xlu0
    %v2485 = vpop.trf.xlu0
    %v2486 = vpop.trf.xlu0
    %v2487 = vpop.trf.xlu0
    %v2488 = vpop.trf.xlu0
    %v2489 = vpop.trf.xlu0
    %v2490 = vpop.trf.xlu0
    %v2491 = vpop.trf.xlu0
    %v2492 = vpop.trf.xlu0
    %v2493 = vpop.trf.xlu0
    %v2494 = vpop.trf.xlu0
    %v2495 = vpop.trf.xlu0
    %v2496 = vpop.trf.xlu0
    %v2497 = vpop.trf.xlu0
    %v2498 = vpop.trf.xlu0
    %v2499 = vpop.trf.xlu0
    %2501 = vrot.lane.b32.xlu0 %v260, 64
    %v2502 = vpop.permute.xlu0 %2501
    %v2505 = vsel %vm335, %v2484, 0
    %v2508 = vsel %vm335, %v2485, 0
    %v2511 = vsel %vm335, %v2486, 0
    %v2514 = vsel %vm335, %v2487, 0
    %v2517 = vsel %vm335, %v2488, 0
    %v2520 = vsel %vm335, %v2489, 0
    %v2523 = vsel %vm335, %v2490, 0
    %v2526 = vsel %vm335, %v2491, 0
    %2528 = vmatprep.subr.mxu0 0.0
    %2529 = vmatpush1.msra.mxu0 0.0
    %2530 = vmatprep.subr.mxu0 0.0
    %2531 = vmatpush1.msra.mxu0 0.0
    %2532 = vmatprep.subr.mxu0 0.0
    %2533 = vmatpush1.msra.mxu0 0.0
    %2534 = vmatprep.subr.mxu0 0.0
    %2535 = vmatpush1.msra.mxu0 0.0
    %2536 = vmatprep.subr.mxu0 0.0
    %2537 = vmatpush1.msra.mxu0 0.0
    %2538 = vmatprep.subr.mxu0 0.0
    %2539 = vmatpush1.msra.mxu0 0.0
    %2540 = vmatprep.subr.mxu0 0.0
    %2541 = vmatpush1.msra.mxu0 0.0
    %2542 = vmatprep.subr.mxu0 0.0
    %2543 = vmatpush1.msra.mxu0 0.0
    %2544 = vmatprep.subr.mxu0 0.0
    %2545 = vmatpush1.msra.mxu0 0.0
    %2546 = vmatprep.subr.mxu0 0.0
    %2547 = vmatpush1.msra.mxu0 0.0
    %2548 = vmatprep.subr.mxu0 0.0
    %2549 = vmatpush1.msra.mxu0 0.0
    %2550 = vmatprep.subr.mxu0 0.0
    %2551 = vmatpush1.msra.mxu0 0.0
    %2552 = vmatprep.subr.mxu0 0.0
    %2553 = vmatpush1.msra.mxu0 0.0
    %2554 = vmatprep.subr.mxu0 0.0
    %2555 = vmatpush1.msra.mxu0 0.0
    %2556 = vmatprep.subr.mxu0 0.0
    %2557 = vmatpush1.msra.mxu0 0.0
    %2558 = vmatprep.subr.mxu0 0.0
    %2559 = vmatpush1.msra.mxu0 %v2502
    %2560 = vmatprep.subr.mxu0 0.0
    %2561 = vmatpush2.msra.mxu0 0.0
    %2562 = vmatprep.subr.mxu0 0.0
    %2563 = vmatpush2.msra.mxu0 0.0
    %2564 = vmatprep.subr.mxu0 0.0
    %2565 = vmatpush2.msra.mxu0 0.0
    %2566 = vmatprep.subr.mxu0 0.0
    %2567 = vmatpush2.msra.mxu0 0.0
    %2568 = vmatprep.subr.mxu0 0.0
    %2569 = vmatpush2.msra.mxu0 0.0
    %2570 = vmatprep.subr.mxu0 0.0
    %2571 = vmatpush2.msra.mxu0 0.0
    %2572 = vmatprep.subr.mxu0 0.0
    %2573 = vmatpush2.msra.mxu0 0.0
    %2574 = vmatprep.subr.mxu0 0.0
    %2575 = vmatpush2.msra.mxu0 0.0
    %2576 = vmatprep.subr.mxu0 0.0
    %2577 = vmatpush2.msra.mxu0 0.0
    %2578 = vmatprep.subr.mxu0 0.0
    %2579 = vmatpush2.msra.mxu0 0.0
    %2580 = vmatprep.subr.mxu0 0.0
    %2581 = vmatpush2.msra.mxu0 0.0
    %2582 = vmatprep.subr.mxu0 0.0
    %2583 = vmatpush2.msra.mxu0 0.0
    %2584 = vmatprep.subr.mxu0 0.0
    %2585 = vmatpush2.msra.mxu0 0.0
    %2586 = vmatprep.subr.mxu0 0.0
    %2587 = vmatpush2.msra.mxu0 0.0
    %2588 = vmatprep.subr.mxu0 0.0
    %2589 = vmatpush2.msra.mxu0 0.0
    %2590 = vmatprep.subr.mxu0 0.0
    %2591 = vmatpush2.msra.mxu0 0.0
    %2592 = vmatprep.mubr.f32.mxu0 0.0
    %2593 = vmatmul.mubr.f32.gmra.mxu0 %v2505
    %v2594 = vpop.f32.mrf.mxu0
    %v2595 = vadd.f32 0.0, %v2594
    %v2596 = vpop.f32.mrf.mxu0
    %2597 = vmatprep.mubr.f32.mxu0 0.0
    %2598 = vmatmul.mubr.f32.gmra.mxu0 %v2508
    %v2599 = vpop.f32.mrf.mxu0
    %v2600 = vadd.f32 0.0, %v2599
    %v2601 = vpop.f32.mrf.mxu0
    %2602 = vmatprep.mubr.f32.mxu0 0.0
    %2603 = vmatmul.mubr.f32.gmra.mxu0 %v2511
    %v2604 = vpop.f32.mrf.mxu0
    %v2605 = vadd.f32 0.0, %v2604
    %v2606 = vpop.f32.mrf.mxu0
    %2607 = vmatprep.mubr.f32.mxu0 0.0
    %2608 = vmatmul.mubr.f32.gmra.mxu0 %v2514
    %v2609 = vpop.f32.mrf.mxu0
    %v2610 = vadd.f32 0.0, %v2609
    %v2611 = vpop.f32.mrf.mxu0
    %2612 = vmatprep.mubr.f32.mxu0 0.0
    %2613 = vmatmul.mubr.f32.gmra.mxu0 %v2517
    %v2614 = vpop.f32.mrf.mxu0
    %v2615 = vadd.f32 0.0, %v2614
    %v2616 = vpop.f32.mrf.mxu0
    %2617 = vmatprep.mubr.f32.mxu0 0.0
    %2618 = vmatmul.mubr.f32.gmra.mxu0 %v2520
    %v2619 = vpop.f32.mrf.mxu0
    %v2620 = vadd.f32 0.0, %v2619
    %v2621 = vpop.f32.mrf.mxu0
    %2622 = vmatprep.mubr.f32.mxu0 0.0
    %2623 = vmatmul.mubr.f32.gmra.mxu0 %v2523
    %v2624 = vpop.f32.mrf.mxu0
    %v2625 = vadd.f32 0.0, %v2624
    %v2626 = vpop.f32.mrf.mxu0
    %2627 = vmatprep.mubr.f32.mxu0 0.0
    %2628 = vmatmul.mubr.f32.gmra.mxu0 %v2526
    %v2629 = vpop.f32.mrf.mxu0
    %v2630 = vadd.f32 0.0, %v2629
    %v2631 = vpop.f32.mrf.mxu0
    %2632 = vdwg.mxu0
    %v2633 = vsel %vm22, %v2595, -inf
    %v2634 = vsel %vm22, %v2600, -inf
    %v2635 = vsel %vm22, %v2605, -inf
    %v2636 = vsel %vm22, %v2610, -inf
    %v2637 = vsel %vm22, %v2615, -inf
    %v2638 = vmax.f32 %v2633, %v2637
    %v2639 = vsel %vm22, %v2620, -inf
    %v2640 = vmax.f32 %v2634, %v2639
    %v2641 = vsel %vm22, %v2625, -inf
    %v2642 = vmax.f32 %v2635, %v2641
    %v2643 = vsel %vm22, %v2630, -inf
    %v2644 = vmax.f32 %v2636, %v2643
    %v2645 = vmax.f32 %v2638, %v2640
    %v2646 = vmax.f32 %v2642, %v2644
    %v2647 = vmax.f32 %v2645, %v2646
    %v2648 = vrot.slane %v2647, 4
    %v2649 = vmax.f32 %v2647, %v2648
    %v2650 = vrot.slane %v2649, 2
    %v2651 = vmax.f32 %v2649, %v2650
    %v2652 = vrot.slane %v2651, 1
    %v2653 = vmax.f32 %v2651, %v2652
    %v2654 = vsub.f32 %v2595, %v2653
    %v2655 = vsub.f32 %v2600, %v2653
    %v2656 = vsub.f32 %v2605, %v2653
    %v2657 = vsub.f32 %v2610, %v2653
    %v2658 = vsub.f32 %v2615, %v2653
    %v2659 = vsub.f32 %v2620, %v2653
    %v2660 = vsub.f32 %v2625, %v2653
    %v2661 = vsub.f32 %v2630, %v2653
    %v2662 = vmul.f32 %v2654, 1.442695
    %v2663 = vpow.pop %v2662
    %v2664 = vmul.f32 %v2655, 1.442695
    %v2665 = vpow.pop %v2664
    %v2666 = vmul.f32 %v2656, 1.442695
    %v2667 = vpow.pop %v2666
    %v2668 = vmul.f32 %v2657, 1.442695
    %v2669 = vpow.pop %v2668
    %v2670 = vmul.f32 %v2658, 1.442695
    %v2671 = vpow.pop %v2670
    %v2672 = vmul.f32 %v2659, 1.442695
    %v2673 = vpow.pop %v2672
    %v2674 = vmul.f32 %v2660, 1.442695
    %v2675 = vpow.pop %v2674
    %v2676 = vmul.f32 %v2661, 1.442695
    %v2677 = vpow.pop %v2676
    %v2678 = vsel %vm22, %v2663, 0.0
    %v2679 = vsel %vm22, %v2665, 0.0
    %v2680 = vadd.f32 %v2678, %v2679
    %v2681 = vsel %vm22, %v2667, 0.0
    %v2682 = vadd.f32 %v2680, %v2681
    %v2683 = vsel %vm22, %v2669, 0.0
    %v2684 = vadd.f32 %v2682, %v2683
    %v2685 = vsel %vm22, %v2671, 0.0
    %v2686 = vadd.f32 %v2684, %v2685
    %v2687 = vsel %vm22, %v2673, 0.0
    %v2688 = vadd.f32 %v2686, %v2687
    %v2689 = vsel %vm22, %v2675, 0.0
    %v2690 = vadd.f32 %v2688, %v2689
    %v2691 = vsel %vm22, %v2677, 0.0
    %v2692 = vadd.f32 %v2690, %v2691
    %v2693 = vrot.slane %v2692, 4
    %v2694 = vadd.f32 %v2692, %v2693
    %v2695 = vrot.slane %v2694, 2
    %v2696 = vadd.f32 %v2694, %v2695
    %v2697 = vrot.slane %v2696, 1
    %v2698 = vadd.f32 %v2696, %v2697
    %2699 = vrot.lane.b32.xlu0 %v300, 64
    %v2700 = vpop.permute.xlu0 %2699
    %v2701 = vsel %vm22, %v2700, 0
    %2703 = vmatprep.subr.mxu0 0.0
    %2704 = vmatpush1.msra.mxu0 0.0
    %2705 = vmatprep.subr.mxu0 0.0
    %2706 = vmatpush1.msra.mxu0 0.0
    %2707 = vmatprep.subr.mxu0 0.0
    %2708 = vmatpush1.msra.mxu0 0.0
    %2709 = vmatprep.subr.mxu0 0.0
    %2710 = vmatpush1.msra.mxu0 0.0
    %2711 = vmatprep.subr.mxu0 0.0
    %2712 = vmatpush1.msra.mxu0 0.0
    %2713 = vmatprep.subr.mxu0 0.0
    %2714 = vmatpush1.msra.mxu0 0.0
    %2715 = vmatprep.subr.mxu0 0.0
    %2716 = vmatpush1.msra.mxu0 0.0
    %2717 = vmatprep.subr.mxu0 0.0
    %2718 = vmatpush1.msra.mxu0 0.0
    %2719 = vmatprep.subr.mxu0 0.0
    %2720 = vmatpush1.msra.mxu0 %v2677
    %2721 = vmatprep.subr.mxu0 0.0
    %2722 = vmatpush1.msra.mxu0 %v2675
    %2723 = vmatprep.subr.mxu0 0.0
    %2724 = vmatpush1.msra.mxu0 %v2673
    %2725 = vmatprep.subr.mxu0 0.0
    %2726 = vmatpush1.msra.mxu0 %v2671
    %2727 = vmatprep.subr.mxu0 0.0
    %2728 = vmatpush1.msra.mxu0 %v2669
    %2729 = vmatprep.subr.mxu0 0.0
    %2730 = vmatpush1.msra.mxu0 %v2667
    %2731 = vmatprep.subr.mxu0 0.0
    %2732 = vmatpush1.msra.mxu0 %v2665
    %2733 = vmatprep.subr.mxu0 0.0
    %2734 = vmatpush1.msra.mxu0 %v2663
    %2735 = vmatprep.subr.mxu0 0.0
    %2736 = vmatpush2.msra.mxu0 0.0
    %2737 = vmatprep.subr.mxu0 0.0
    %2738 = vmatpush2.msra.mxu0 0.0
    %2739 = vmatprep.subr.mxu0 0.0
    %2740 = vmatpush2.msra.mxu0 0.0
    %2741 = vmatprep.subr.mxu0 0.0
    %2742 = vmatpush2.msra.mxu0 0.0
    %2743 = vmatprep.subr.mxu0 0.0
    %2744 = vmatpush2.msra.mxu0 0.0
    %2745 = vmatprep.subr.mxu0 0.0
    %2746 = vmatpush2.msra.mxu0 0.0
    %2747 = vmatprep.subr.mxu0 0.0
    %2748 = vmatpush2.msra.mxu0 0.0
    %2749 = vmatprep.subr.mxu0 0.0
    %2750 = vmatpush2.msra.mxu0 0.0
    %2751 = vmatprep.subr.mxu0 0.0
    %2752 = vmatpush2.msra.mxu0 0.0
    %2753 = vmatprep.subr.mxu0 0.0
    %2754 = vmatpush2.msra.mxu0 0.0
    %2755 = vmatprep.subr.mxu0 0.0
    %2756 = vmatpush2.msra.mxu0 0.0
    %2757 = vmatprep.subr.mxu0 0.0
    %2758 = vmatpush2.msra.mxu0 0.0
    %2759 = vmatprep.subr.mxu0 0.0
    %2760 = vmatpush2.msra.mxu0 0.0
    %2761 = vmatprep.subr.mxu0 0.0
    %2762 = vmatpush2.msra.mxu0 0.0
    %2763 = vmatprep.subr.mxu0 0.0
    %2764 = vmatpush2.msra.mxu0 0.0
    %2765 = vmatprep.subr.mxu0 0.0
    %2766 = vmatpush2.msra.mxu0 0.0
    %2767 = vmatprep.mubr.f32.mxu0 0.0
    %2768 = vmatmul.mubr.f32.gmra.mxu0 %v2701
    %v2769 = vpop.f32.mrf.mxu0
    %v2770 = vadd.f32 0.0, %v2769
    %v2771 = vpop.f32.mrf.mxu0
    %2772 = vdwg.mxu0
    %v2773 = vrcp.pop %v2698
    %v2774 = vmul.f32 %v2770, %v2773
    %2776 = vrot.lane.b32.xlu0 %v2774, 64
    %v2777 = vpop.permute.xlu0 %2776
    %2779 = vst.msk [vmem:[#allocation3 + $0x18] sm:$0xff] %vm48, %v2777
    %v2780 = vld [vmem:[%s3] sm:$0xff]
    %v2781 = vld [vmem:[%s3 + $0x8] sm:$0xff]
    %v2782 = vld [vmem:[%s3 + $0x10] sm:$0xff]
    %v2783 = vld [vmem:[%s3 + $0x18] sm:$0xff]
    %v2784 = vld [vmem:[#allocation3] sm:$0xff]
    %v2785 = vld [vmem:[#allocation3 + $0x8] sm:$0xff]
    %v2786 = vld [vmem:[#allocation3 + $0x10] sm:$0xff]
    %v2787 = vld [vmem:[#allocation3 + $0x18] sm:$0xff]
    %v2789 = vsel %vm141, %v2780, 0
    %v2792 = vsel %vm141, %v2781, 0
    %v2795 = vsel %vm141, %v2782, 0
    %v2798 = vsel %vm141, %v2783, 0
    %2800 = vmatprep.subr.mxu0 0.0
    %2801 = vmatpush1.msra.mxu0 0.0
    %2802 = vmatprep.subr.mxu0 0.0
    %2803 = vmatpush1.msra.mxu0 0.0
    %2804 = vmatprep.subr.mxu0 0.0
    %2805 = vmatpush1.msra.mxu0 0.0
    %2806 = vmatprep.subr.mxu0 0.0
    %2807 = vmatpush1.msra.mxu0 0.0
    %2808 = vmatprep.subr.mxu0 0.0
    %2809 = vmatpush1.msra.mxu0 0.0
    %2810 = vmatprep.subr.mxu0 0.0
    %2811 = vmatpush1.msra.mxu0 0.0
    %2812 = vmatprep.subr.mxu0 0.0
    %2813 = vmatpush1.msra.mxu0 0.0
    %2814 = vmatprep.subr.mxu0 0.0
    %2815 = vmatpush1.msra.mxu0 0.0
    %2816 = vmatprep.subr.mxu0 0.0
    %2817 = vmatpush1.msra.mxu0 0.0
    %2818 = vmatprep.subr.mxu0 0.0
    %2819 = vmatpush1.msra.mxu0 0.0
    %2820 = vmatprep.subr.mxu0 0.0
    %2821 = vmatpush1.msra.mxu0 0.0
    %2822 = vmatprep.subr.mxu0 0.0
    %2823 = vmatpush1.msra.mxu0 0.0
    %2824 = vmatprep.subr.mxu0 0.0
    %2825 = vmatpush1.msra.mxu0 %v2787
    %2826 = vmatprep.subr.mxu0 0.0
    %2827 = vmatpush1.msra.mxu0 %v2786
    %2828 = vmatprep.subr.mxu0 0.0
    %2829 = vmatpush1.msra.mxu0 %v2785
    %2830 = vmatprep.subr.mxu0 0.0
    %2831 = vmatpush1.msra.mxu0 %v2784
    %2832 = vmatprep.subr.mxu0 0.0
    %2833 = vmatpush2.msra.mxu0 0.0
    %2834 = vmatprep.subr.mxu0 0.0
    %2835 = vmatpush2.msra.mxu0 0.0
    %2836 = vmatprep.subr.mxu0 0.0
    %2837 = vmatpush2.msra.mxu0 0.0
    %2838 = vmatprep.subr.mxu0 0.0
    %2839 = vmatpush2.msra.mxu0 0.0
    %2840 = vmatprep.subr.mxu0 0.0
    %2841 = vmatpush2.msra.mxu0 0.0
    %2842 = vmatprep.subr.mxu0 0.0
    %2843 = vmatpush2.msra.mxu0 0.0
    %2844 = vmatprep.subr.mxu0 0.0
    %2845 = vmatpush2.msra.mxu0 0.0
    %2846 = vmatprep.subr.mxu0 0.0
    %2847 = vmatpush2.msra.mxu0 0.0
    %2848 = vmatprep.subr.mxu0 0.0
    %2849 = vmatpush2.msra.mxu0 0.0
    %2850 = vmatprep.subr.mxu0 0.0
    %2851 = vmatpush2.msra.mxu0 0.0
    %2852 = vmatprep.subr.mxu0 0.0
    %2853 = vmatpush2.msra.mxu0 0.0
    %2854 = vmatprep.subr.mxu0 0.0
    %2855 = vmatpush2.msra.mxu0 0.0
    %2856 = vmatprep.subr.mxu0 0.0
    %2857 = vmatpush2.msra.mxu0 0.0
    %2858 = vmatprep.subr.mxu0 0.0
    %2859 = vmatpush2.msra.mxu0 0.0
    %2860 = vmatprep.subr.mxu0 0.0
    %2861 = vmatpush2.msra.mxu0 0.0
    %2862 = vmatprep.subr.mxu0 0.0
    %2863 = vmatpush2.msra.mxu0 0.0
    %2864 = vmatprep.mubr.f32.mxu0 0.0
    %2865 = vmatmul.mubr.f32.gmra.mxu0 %v2789
    %v2866 = vpop.f32.mrf.mxu0
    %v2867 = vadd.f32 0.0, %v2866
    %v2868 = vpop.f32.mrf.mxu0
    %2869 = vmatprep.mubr.f32.mxu0 0.0
    %2870 = vmatmul.mubr.f32.gmra.mxu0 %v2792
    %v2871 = vpop.f32.mrf.mxu0
    %v2872 = vadd.f32 0.0, %v2871
    %v2873 = vpop.f32.mrf.mxu0
    %2874 = vmatprep.mubr.f32.mxu0 0.0
    %2875 = vmatmul.mubr.f32.gmra.mxu0 %v2795
    %v2876 = vpop.f32.mrf.mxu0
    %v2877 = vadd.f32 0.0, %v2876
    %v2878 = vpop.f32.mrf.mxu0
    %2879 = vmatprep.mubr.f32.mxu0 0.0
    %2880 = vmatmul.mubr.f32.gmra.mxu0 %v2798
    %v2881 = vpop.f32.mrf.mxu0
    %v2882 = vadd.f32 0.0, %v2881
    %v2883 = vpop.f32.mrf.mxu0
    %2884 = vdwg.mxu0
    %v2885 = vld [vmem:[%s0] sm:$0xff]
    %v2886 = vld [vmem:[%s0 + $0x8] sm:$0xff]
    %v2887 = vld [vmem:[%s0 + $0x10] sm:$0xff]
    %v2888 = vld [vmem:[%s0 + $0x18] sm:$0xff]
    %v2889 = vadd.f32 %v2867, %v2885
    %v2890 = vadd.f32 %v2872, %v2886
    %v2891 = vadd.f32 %v2877, %v2887
    %v2892 = vadd.f32 %v2882, %v2888
    %2893 = vst.msk [vmem:[#allocation4] sm:$0xff] %vm22, %v2889
    %2894 = vst.msk [vmem:[#allocation4 + $0x8] sm:$0xff] %vm22, %v2890
    %2895 = vst.msk [vmem:[#allocation4 + $0x10] sm:$0xff] %vm22, %v2891
    %2896 = vst.msk [vmem:[#allocation4 + $0x18] sm:$0xff] %vm22, %v2892
    %v2897 = vld [vmem:[%s27] sm:$0xff]
    %v2898 = vld [vmem:[%s27 + $0x8] sm:$0xff]
    %v2899 = vld [vmem:[%s27 + $0x10] sm:$0xff]
    %v2900 = vld [vmem:[%s27 + $0x18] sm:$0xff]
    %2905 = vrot.lane.b32.xlu0 %v2897, 64
    %v2906 = vpop.permute.xlu0 %2905
    %2907 = vrot.lane.b32.xlu0 %v2898, 64
    %v2908 = vpop.permute.xlu0 %2907
    %2909 = vrot.lane.b32.xlu0 %v2899, 64
    %v2910 = vpop.permute.xlu0 %2909
    %2911 = vrot.lane.b32.xlu0 %v2900, 64
    %v2912 = vpop.permute.xlu0 %2911
    %v2917 = vadd.f32 %v2867, %v2906
    %v2918 = vadd.f32 %v2872, %v2908
    %v2919 = vadd.f32 %v2877, %v2910
    %v2920 = vadd.f32 %v2882, %v2912
    %2925 = vrot.lane.b32.xlu0 %v2917, 64
    %v2926 = vpop.permute.xlu0 %2925
    %2927 = vrot.lane.b32.xlu0 %v2918, 64
    %v2928 = vpop.permute.xlu0 %2927
    %2929 = vrot.lane.b32.xlu0 %v2919, 64
    %v2930 = vpop.permute.xlu0 %2929
    %2931 = vrot.lane.b32.xlu0 %v2920, 64
    %v2932 = vpop.permute.xlu0 %2931
    %s2937 = scalar_lea.vmem [#allocation4], 32
    %2938 = vst.msk [vmem:[%s2937] sm:$0xff] %vm22, %v2926
    %2939 = vst.msk [vmem:[%s2937 + $0x8] sm:$0xff] %vm22, %v2928
    %2940 = vst.msk [vmem:[%s2937 + $0x10] sm:$0xff] %vm22, %v2930
    %2941 = vst.msk [vmem:[%s2937 + $0x18] sm:$0xff] %vm22, %v2932
    // Predicated region
    $region18: #{tpu_custom_call.1} parent=1 // pred_check
      _
    $region19: #{tpu_custom_call.1} parent=1 // pred_check_branch
      %2943 = sbr.rel (0) target = $region21
    $region20: #{tpu_custom_call.1} parent=1 // pred_region
      %s2945 = ssub.s32 1024, 1024
      %2946 = vsyncadd [#allocation5], %s2945
      %s2947 = sshll.u32 [#allocation4], 4
      %s2948 = int_to_ptr.vmem [resolvable:$true] %s2947
      %2953 = dma.vmem_to_hbm [thread:$0]  %s2948, 1024, %s4, [#allocation5], 128, 128, 8
    $region21: #{tpu_custom_call.1} parent=1 // pred_fallthru
      _
    // Predicated region
    $region22: #{tpu_custom_call.1} parent=1 // pred_check
      _
    $region23: #{tpu_custom_call.1} parent=1 // pred_check_branch
      %2955 = sbr.rel (0) target = $region25
    $region24: #{tpu_custom_call.1} parent=1 // pred_region
      %2956 = dma.done [#allocation5], 1024
    $region25: #{tpu_custom_call.1} parent=1 // pred_fallthru
      _
    %2957 = vsyncpa [#allocation5], 1

</llo_original>
